<compile_context>
chip_gen: v5e
topology: v5e:2x2
jax: 0.10.0
libtpu: 0.0.40
codegen_flags: <defaults>
</compile_context>

<pallas_src>
import functools

import jax
import jax.numpy as jnp
import numpy as np
from jax.experimental import pallas as pl
from jax.experimental.pallas import tpu as pltpu


def sinkhorn_kernel(alpha_ref, beta_ref, c_ref, f_ref, g_ref, *, eps, n_layers):
    inv_eps = 1.0 / eps

    alpha = alpha_ref[...]                         # (B, n_alpha)
    beta = beta_ref[...]                           # (B, n_beta)

    # -C / eps, computed once (single multiply; no divides inside the loop).
    neg = c_ref[...] * (-inv_eps)                  # (n_alpha, n_beta)
    neg_t = neg.T                                  # (n_beta, n_alpha), one-time transpose

    # Static stabilizers of the cost term.
    rmax = jnp.max(neg_t, axis=0, keepdims=True)   # (1, n_alpha) = max_j(-C[i,j]/eps)
    cmax = jnp.max(neg, axis=0, keepdims=True)     # (1, n_beta)  = max_i(-C[i,j]/eps)

    # Stabilized Gibbs kernels, computed once outside the loop.
    k_t = jnp.exp(neg_t - rmax)                    # (n_beta, n_alpha)
    k = jnp.exp(neg - cmax)                        # (n_alpha, n_beta)

    log_alpha = jnp.log(alpha)                     # (B, n_alpha)
    log_beta = jnp.log(beta)                       # (B, n_beta)

    hi = jax.lax.Precision.HIGHEST                 # keep the f32-accurate MXU path

    def body(_, carry):
        ft, gt = carry                             # potentials carried as f/eps, g/eps
        # f-update: f/eps = log(alpha) - logsumexp_j(-C/eps + g/eps)
        gmax = jnp.max(gt, axis=-1, keepdims=True)                     # (B, 1)
        u = jnp.exp(gt - gmax)                                         # (B, n_beta)
        m1 = jnp.dot(u, k_t, preferred_element_type=jnp.float32,
                     precision=hi)                                     # (B, n_alpha)
        ft = log_alpha - (jnp.log(m1) + rmax + gmax)
        # g-update: g/eps = log(beta) - logsumexp_i(-C.T/eps + f/eps)
        fmax = jnp.max(ft, axis=-1, keepdims=True)                     # (B, 1)
        v = jnp.exp(ft - fmax)                                         # (B, n_alpha)
        m2 = jnp.dot(v, k, preferred_element_type=jnp.float32,
                     precision=hi)                                     # (B, n_beta)
        gt = log_beta - (jnp.log(m2) + cmax + fmax)
        return ft, gt

    ft0 = jnp.zeros_like(alpha)
    gt0 = jnp.zeros_like(beta)                     # matches torch.zeros_like(beta) init
    ft, gt = jax.lax.fori_loop(0, n_layers, body, (ft0, gt0), unroll=True)

    # Un-scale by eps only at the stores.
    f_ref[...] = eps * ft
    g_ref[...] = eps * gt
    # TODO(synk): the optional tol-based early stopping (torch.norm check every
    # 10 iters) and the python-side logging callbacks are host control flow and
    # are not reproduced inside the kernel (tol=None path implemented).


def sinkhorn_forward(alpha, beta, C, eps, n_layers):
    B, n_alpha = alpha.shape
    _, n_beta = beta.shape
    kernel = functools.partial(sinkhorn_kernel, eps=float(eps),
                               n_layers=int(n_layers))
    vmem = pl.BlockSpec(memory_space=pltpu.MemorySpace.VMEM)
    # Whole problem fits comfortably in VMEM at these sizes -> single grid
    # point with full-array blocks.  (For large n, tile the reduction axis
    # with an "arbitrary" grid dim; for large B on v7x, add a "parallel"
    # batch grid axis to use the second TensorCore.)
    f, g = pl.pallas_call(
        kernel,
        out_shape=(jax.ShapeDtypeStruct((B, n_alpha), jnp.float32),
                   jax.ShapeDtypeStruct((B, n_beta), jnp.float32)),
        in_specs=[vmem, vmem, vmem],
        out_specs=(vmem, vmem),
    )(alpha, beta, C)
    return f, g


def sinkhorn_reference(alpha, beta, C, eps, n_layers):
    """Pure-JAX reference matching the PyTorch log-domain forward."""
    g = jnp.zeros_like(beta)
    log_alpha, log_beta = jnp.log(alpha), jnp.log(beta)
    f = jnp.zeros_like(alpha)
    for _ in range(n_layers):
        s1 = (-C[None, :, :] + g[:, None, :]) / eps
        f = eps * (log_alpha - jax.nn.logsumexp(s1, axis=-1))
        s2 = (-C.T[None, :, :] + f[:, None, :]) / eps
        g = eps * (log_beta - jax.nn.logsumexp(s2, axis=-1))
    return f, g


if __name__ == "__main__":
    key = jax.random.PRNGKey(0)
    k1, k2, k3 = jax.random.split(key, 3)

    B, n_alpha, n_beta = 4, 16, 16
    eps = 0.1
    n_layers = 10

    # Positive distributions (rows sum to 1) and a non-negative cost matrix.
    alpha = jax.random.uniform(k1, (B, n_alpha), jnp.float32, 0.1, 1.0)
    alpha = alpha / jnp.sum(alpha, axis=-1, keepdims=True)
    beta = jax.random.uniform(k2, (B, n_beta), jnp.float32, 0.1, 1.0)
    beta = beta / jnp.sum(beta, axis=-1, keepdims=True)
    C = jax.random.uniform(k3, (n_alpha, n_beta), jnp.float32, 0.0, 1.0)

    f, g = sinkhorn_forward(alpha, beta, C, eps, n_layers)
    jax.block_until_ready((f, g))

    f_ref, g_ref = sinkhorn_reference(alpha, beta, C, eps, n_layers)
    np.testing.assert_allclose(np.asarray(f), np.asarray(f_ref),
                               rtol=1e-4, atol=1e-4)
    np.testing.assert_allclose(np.asarray(g), np.asarray(g_ref),
                               rtol=1e-4, atol=1e-4)

    print("KERNEL_OK")
</pallas_src>

<mosaic_0001>
module attributes {stable_mosaic.version = 11 : i64} {
  func.func @sinkhorn_kernel(%arg0: memref<4x16xf32, #tpu.memory_space<vmem>>, %arg1: memref<4x16xf32, #tpu.memory_space<vmem>>, %arg2: memref<16x16xf32, #tpu.memory_space<vmem>>, %arg3: memref<4x16xf32, #tpu.memory_space<vmem>>, %arg4: memref<4x16xf32, #tpu.memory_space<vmem>>) attributes {dimension_semantics = [], scalar_prefetch = 0 : i64, scratch_operands = 0 : i64, tpu.core_type = #tpu.core_type<tc>} {
    %c0 = arith.constant 0 : index
    %c0_0 = arith.constant 0 : index
    %0 = vector.load %arg0[%c0, %c0_0] : memref<4x16xf32, #tpu.memory_space<vmem>>, vector<4x16xf32>
    %c0_1 = arith.constant 0 : index
    %c0_2 = arith.constant 0 : index
    %1 = vector.load %arg1[%c0_1, %c0_2] : memref<4x16xf32, #tpu.memory_space<vmem>>, vector<4x16xf32>
    %c0_3 = arith.constant 0 : index
    %c0_4 = arith.constant 0 : index
    %2 = vector.load %arg2[%c0_3, %c0_4] : memref<16x16xf32, #tpu.memory_space<vmem>>, vector<16x16xf32>
    %cst = arith.constant -1.000000e+01 : f32
    %3 = vector.broadcast %cst : f32 to vector<16x16xf32>
    %4 = arith.mulf %2, %3 : vector<16x16xf32>
    %5 = tpu.transpose %4, [1, 0] : vector<16x16xf32> -> vector<16x16xf32>
    %cst_5 = arith.constant dense<0xFF800000> : vector<16xf32>
    %6 = vector.multi_reduction <maximumf>, %5, %cst_5 [0] : vector<16x16xf32> to vector<16xf32>
    %7 = vector.shape_cast %6 : vector<16xf32> to vector<1x16xf32>
    %cst_6 = arith.constant dense<0xFF800000> : vector<16xf32>
    %8 = vector.multi_reduction <maximumf>, %4, %cst_6 [0] : vector<16x16xf32> to vector<16xf32>
    %9 = vector.shape_cast %8 : vector<16xf32> to vector<1x16xf32>
    %10 = vector.broadcast %7 : vector<1x16xf32> to vector<16x16xf32>
    %11 = arith.subf %5, %10 : vector<16x16xf32>
    %12 = math.exp %11 : vector<16x16xf32>
    %13 = vector.broadcast %9 : vector<1x16xf32> to vector<16x16xf32>
    %14 = arith.subf %4, %13 : vector<16x16xf32>
    %15 = math.exp %14 : vector<16x16xf32>
    %16 = math.log %0 : vector<4x16xf32>
    %17 = math.log %1 : vector<4x16xf32>
    %cst_7 = arith.constant 0.000000e+00 : f32
    %18 = vector.broadcast %cst_7 : f32 to vector<4x16xf32>
    %cst_8 = arith.constant 0.000000e+00 : f32
    %19 = vector.broadcast %cst_8 : f32 to vector<4x16xf32>
    %c0_i32 = arith.constant 0 : i32
    %cst_9 = arith.constant dense<0xFF800000> : vector<4xf32>
    %20 = vector.multi_reduction <maximumf>, %19, %cst_9 [1] : vector<4x16xf32> to vector<4xf32>
    %21 = vector.shape_cast %20 : vector<4xf32> to vector<4x1xf32>
    %22 = vector.broadcast %21 : vector<4x1xf32> to vector<4x16xf32>
    %23 = arith.subf %19, %22 : vector<4x16xf32>
    %24 = math.exp %23 : vector<4x16xf32>
    %cst_10 = arith.constant dense<0.000000e+00> : vector<4x16xf32>
    %25 = tpu.matmul %24, %12, %cst_10 {dimension_numbers = #tpu.dot_dimension_numbers<[1], [0], [0], [1], [0, 0, 1, 1], [], []>, precision = #tpu.contract_precision<fp32>} : vector<4x16xf32>, vector<16x16xf32>, vector<4x16xf32> -> vector<4x16xf32>
    %26 = math.log %25 : vector<4x16xf32>
    %27 = vector.broadcast %7 : vector<1x16xf32> to vector<4x16xf32>
    %28 = arith.addf %26, %27 : vector<4x16xf32>
    %29 = vector.broadcast %21 : vector<4x1xf32> to vector<4x16xf32>
    %30 = arith.addf %28, %29 : vector<4x16xf32>
    %31 = arith.subf %16, %30 : vector<4x16xf32>
    %cst_11 = arith.constant dense<0xFF800000> : vector<4xf32>
    %32 = vector.multi_reduction <maximumf>, %31, %cst_11 [1] : vector<4x16xf32> to vector<4xf32>
    %33 = vector.shape_cast %32 : vector<4xf32> to vector<4x1xf32>
    %34 = vector.broadcast %33 : vector<4x1xf32> to vector<4x16xf32>
    %35 = arith.subf %31, %34 : vector<4x16xf32>
    %36 = math.exp %35 : vector<4x16xf32>
    %cst_12 = arith.constant dense<0.000000e+00> : vector<4x16xf32>
    %37 = tpu.matmul %36, %15, %cst_12 {dimension_numbers = #tpu.dot_dimension_numbers<[1], [0], [0], [1], [0, 0, 1, 1], [], []>, precision = #tpu.contract_precision<fp32>} : vector<4x16xf32>, vector<16x16xf32>, vector<4x16xf32> -> vector<4x16xf32>
    %38 = math.log %37 : vector<4x16xf32>
    %39 = vector.broadcast %9 : vector<1x16xf32> to vector<4x16xf32>
    %40 = arith.addf %38, %39 : vector<4x16xf32>
    %41 = vector.broadcast %33 : vector<4x1xf32> to vector<4x16xf32>
    %42 = arith.addf %40, %41 : vector<4x16xf32>
    %43 = arith.subf %17, %42 : vector<4x16xf32>
    %c1_i32 = arith.constant 1 : i32
    %cst_13 = arith.constant dense<0xFF800000> : vector<4xf32>
    %44 = vector.multi_reduction <maximumf>, %43, %cst_13 [1] : vector<4x16xf32> to vector<4xf32>
    %45 = vector.shape_cast %44 : vector<4xf32> to vector<4x1xf32>
    %46 = vector.broadcast %45 : vector<4x1xf32> to vector<4x16xf32>
    %47 = arith.subf %43, %46 : vector<4x16xf32>
    %48 = math.exp %47 : vector<4x16xf32>
    %cst_14 = arith.constant dense<0.000000e+00> : vector<4x16xf32>
    %49 = tpu.matmul %48, %12, %cst_14 {dimension_numbers = #tpu.dot_dimension_numbers<[1], [0], [0], [1], [0, 0, 1, 1], [], []>, precision = #tpu.contract_precision<fp32>} : vector<4x16xf32>, vector<16x16xf32>, vector<4x16xf32> -> vector<4x16xf32>
    %50 = math.log %49 : vector<4x16xf32>
    %51 = vector.broadcast %7 : vector<1x16xf32> to vector<4x16xf32>
    %52 = arith.addf %50, %51 : vector<4x16xf32>
    %53 = vector.broadcast %45 : vector<4x1xf32> to vector<4x16xf32>
    %54 = arith.addf %52, %53 : vector<4x16xf32>
    %55 = arith.subf %16, %54 : vector<4x16xf32>
    %cst_15 = arith.constant dense<0xFF800000> : vector<4xf32>
    %56 = vector.multi_reduction <maximumf>, %55, %cst_15 [1] : vector<4x16xf32> to vector<4xf32>
    %57 = vector.shape_cast %56 : vector<4xf32> to vector<4x1xf32>
    %58 = vector.broadcast %57 : vector<4x1xf32> to vector<4x16xf32>
    %59 = arith.subf %55, %58 : vector<4x16xf32>
    %60 = math.exp %59 : vector<4x16xf32>
    %cst_16 = arith.constant dense<0.000000e+00> : vector<4x16xf32>
    %61 = tpu.matmul %60, %15, %cst_16 {dimension_numbers = #tpu.dot_dimension_numbers<[1], [0], [0], [1], [0, 0, 1, 1], [], []>, precision = #tpu.contract_precision<fp32>} : vector<4x16xf32>, vector<16x16xf32>, vector<4x16xf32> -> vector<4x16xf32>
    %62 = math.log %61 : vector<4x16xf32>
    %63 = vector.broadcast %9 : vector<1x16xf32> to vector<4x16xf32>
    %64 = arith.addf %62, %63 : vector<4x16xf32>
    %65 = vector.broadcast %57 : vector<4x1xf32> to vector<4x16xf32>
    %66 = arith.addf %64, %65 : vector<4x16xf32>
    %67 = arith.subf %17, %66 : vector<4x16xf32>
    %c2_i32 = arith.constant 2 : i32
    %cst_17 = arith.constant dense<0xFF800000> : vector<4xf32>
    %68 = vector.multi_reduction <maximumf>, %67, %cst_17 [1] : vector<4x16xf32> to vector<4xf32>
    %69 = vector.shape_cast %68 : vector<4xf32> to vector<4x1xf32>
    %70 = vector.broadcast %69 : vector<4x1xf32> to vector<4x16xf32>
    %71 = arith.subf %67, %70 : vector<4x16xf32>
    %72 = math.exp %71 : vector<4x16xf32>
    %cst_18 = arith.constant dense<0.000000e+00> : vector<4x16xf32>
    %73 = tpu.matmul %72, %12, %cst_18 {dimension_numbers = #tpu.dot_dimension_numbers<[1], [0], [0], [1], [0, 0, 1, 1], [], []>, precision = #tpu.contract_precision<fp32>} : vector<4x16xf32>, vector<16x16xf32>, vector<4x16xf32> -> vector<4x16xf32>
    %74 = math.log %73 : vector<4x16xf32>
    %75 = vector.broadcast %7 : vector<1x16xf32> to vector<4x16xf32>
    %76 = arith.addf %74, %75 : vector<4x16xf32>
    %77 = vector.broadcast %69 : vector<4x1xf32> to vector<4x16xf32>
    %78 = arith.addf %76, %77 : vector<4x16xf32>
    %79 = arith.subf %16, %78 : vector<4x16xf32>
    %cst_19 = arith.constant dense<0xFF800000> : vector<4xf32>
    %80 = vector.multi_reduction <maximumf>, %79, %cst_19 [1] : vector<4x16xf32> to vector<4xf32>
    %81 = vector.shape_cast %80 : vector<4xf32> to vector<4x1xf32>
    %82 = vector.broadcast %81 : vector<4x1xf32> to vector<4x16xf32>
    %83 = arith.subf %79, %82 : vector<4x16xf32>
    %84 = math.exp %83 : vector<4x16xf32>
    %cst_20 = arith.constant dense<0.000000e+00> : vector<4x16xf32>
    %85 = tpu.matmul %84, %15, %cst_20 {dimension_numbers = #tpu.dot_dimension_numbers<[1], [0], [0], [1], [0, 0, 1, 1], [], []>, precision = #tpu.contract_precision<fp32>} : vector<4x16xf32>, vector<16x16xf32>, vector<4x16xf32> -> vector<4x16xf32>
    %86 = math.log %85 : vector<4x16xf32>
    %87 = vector.broadcast %9 : vector<1x16xf32> to vector<4x16xf32>
    %88 = arith.addf %86, %87 : vector<4x16xf32>
    %89 = vector.broadcast %81 : vector<4x1xf32> to vector<4x16xf32>
    %90 = arith.addf %88, %89 : vector<4x16xf32>
    %91 = arith.subf %17, %90 : vector<4x16xf32>
    %c3_i32 = arith.constant 3 : i32
    %cst_21 = arith.constant dense<0xFF800000> : vector<4xf32>
    %92 = vector.multi_reduction <maximumf>, %91, %cst_21 [1] : vector<4x16xf32> to vector<4xf32>
    %93 = vector.shape_cast %92 : vector<4xf32> to vector<4x1xf32>
    %94 = vector.broadcast %93 : vector<4x1xf32> to vector<4x16xf32>
    %95 = arith.subf %91, %94 : vector<4x16xf32>
    %96 = math.exp %95 : vector<4x16xf32>
    %cst_22 = arith.constant dense<0.000000e+00> : vector<4x16xf32>
    %97 = tpu.matmul %96, %12, %cst_22 {dimension_numbers = #tpu.dot_dimension_numbers<[1], [0], [0], [1], [0, 0, 1, 1], [], []>, precision = #tpu.contract_precision<fp32>} : vector<4x16xf32>, vector<16x16xf32>, vector<4x16xf32> -> vector<4x16xf32>
    %98 = math.log %97 : vector<4x16xf32>
    %99 = vector.broadcast %7 : vector<1x16xf32> to vector<4x16xf32>
    %100 = arith.addf %98, %99 : vector<4x16xf32>
    %101 = vector.broadcast %93 : vector<4x1xf32> to vector<4x16xf32>
    %102 = arith.addf %100, %101 : vector<4x16xf32>
    %103 = arith.subf %16, %102 : vector<4x16xf32>
    %cst_23 = arith.constant dense<0xFF800000> : vector<4xf32>
    %104 = vector.multi_reduction <maximumf>, %103, %cst_23 [1] : vector<4x16xf32> to vector<4xf32>
    %105 = vector.shape_cast %104 : vector<4xf32> to vector<4x1xf32>
    %106 = vector.broadcast %105 : vector<4x1xf32> to vector<4x16xf32>
    %107 = arith.subf %103, %106 : vector<4x16xf32>
    %108 = math.exp %107 : vector<4x16xf32>
    %cst_24 = arith.constant dense<0.000000e+00> : vector<4x16xf32>
    %109 = tpu.matmul %108, %15, %cst_24 {dimension_numbers = #tpu.dot_dimension_numbers<[1], [0], [0], [1], [0, 0, 1, 1], [], []>, precision = #tpu.contract_precision<fp32>} : vector<4x16xf32>, vector<16x16xf32>, vector<4x16xf32> -> vector<4x16xf32>
    %110 = math.log %109 : vector<4x16xf32>
    %111 = vector.broadcast %9 : vector<1x16xf32> to vector<4x16xf32>
    %112 = arith.addf %110, %111 : vector<4x16xf32>
    %113 = vector.broadcast %105 : vector<4x1xf32> to vector<4x16xf32>
    %114 = arith.addf %112, %113 : vector<4x16xf32>
    %115 = arith.subf %17, %114 : vector<4x16xf32>
    %c4_i32 = arith.constant 4 : i32
    %cst_25 = arith.constant dense<0xFF800000> : vector<4xf32>
    %116 = vector.multi_reduction <maximumf>, %115, %cst_25 [1] : vector<4x16xf32> to vector<4xf32>
    %117 = vector.shape_cast %116 : vector<4xf32> to vector<4x1xf32>
    %118 = vector.broadcast %117 : vector<4x1xf32> to vector<4x16xf32>
    %119 = arith.subf %115, %118 : vector<4x16xf32>
    %120 = math.exp %119 : vector<4x16xf32>
    %cst_26 = arith.constant dense<0.000000e+00> : vector<4x16xf32>
    %121 = tpu.matmul %120, %12, %cst_26 {dimension_numbers = #tpu.dot_dimension_numbers<[1], [0], [0], [1], [0, 0, 1, 1], [], []>, precision = #tpu.contract_precision<fp32>} : vector<4x16xf32>, vector<16x16xf32>, vector<4x16xf32> -> vector<4x16xf32>
    %122 = math.log %121 : vector<4x16xf32>
    %123 = vector.broadcast %7 : vector<1x16xf32> to vector<4x16xf32>
    %124 = arith.addf %122, %123 : vector<4x16xf32>
    %125 = vector.broadcast %117 : vector<4x1xf32> to vector<4x16xf32>
    %126 = arith.addf %124, %125 : vector<4x16xf32>
    %127 = arith.subf %16, %126 : vector<4x16xf32>
    %cst_27 = arith.constant dense<0xFF800000> : vector<4xf32>
    %128 = vector.multi_reduction <maximumf>, %127, %cst_27 [1] : vector<4x16xf32> to vector<4xf32>
    %129 = vector.shape_cast %128 : vector<4xf32> to vector<4x1xf32>
    %130 = vector.broadcast %129 : vector<4x1xf32> to vector<4x16xf32>
    %131 = arith.subf %127, %130 : vector<4x16xf32>
    %132 = math.exp %131 : vector<4x16xf32>
    %cst_28 = arith.constant dense<0.000000e+00> : vector<4x16xf32>
    %133 = tpu.matmul %132, %15, %cst_28 {dimension_numbers = #tpu.dot_dimension_numbers<[1], [0], [0], [1], [0, 0, 1, 1], [], []>, precision = #tpu.contract_precision<fp32>} : vector<4x16xf32>, vector<16x16xf32>, vector<4x16xf32> -> vector<4x16xf32>
    %134 = math.log %133 : vector<4x16xf32>
    %135 = vector.broadcast %9 : vector<1x16xf32> to vector<4x16xf32>
    %136 = arith.addf %134, %135 : vector<4x16xf32>
    %137 = vector.broadcast %129 : vector<4x1xf32> to vector<4x16xf32>
    %138 = arith.addf %136, %137 : vector<4x16xf32>
    %139 = arith.subf %17, %138 : vector<4x16xf32>
    %c5_i32 = arith.constant 5 : i32
    %cst_29 = arith.constant dense<0xFF800000> : vector<4xf32>
    %140 = vector.multi_reduction <maximumf>, %139, %cst_29 [1] : vector<4x16xf32> to vector<4xf32>
    %141 = vector.shape_cast %140 : vector<4xf32> to vector<4x1xf32>
    %142 = vector.broadcast %141 : vector<4x1xf32> to vector<4x16xf32>
    %143 = arith.subf %139, %142 : vector<4x16xf32>
    %144 = math.exp %143 : vector<4x16xf32>
    %cst_30 = arith.constant dense<0.000000e+00> : vector<4x16xf32>
    %145 = tpu.matmul %144, %12, %cst_30 {dimension_numbers = #tpu.dot_dimension_numbers<[1], [0], [0], [1], [0, 0, 1, 1], [], []>, precision = #tpu.contract_precision<fp32>} : vector<4x16xf32>, vector<16x16xf32>, vector<4x16xf32> -> vector<4x16xf32>
    %146 = math.log %145 : vector<4x16xf32>
    %147 = vector.broadcast %7 : vector<1x16xf32> to vector<4x16xf32>
    %148 = arith.addf %146, %147 : vector<4x16xf32>
    %149 = vector.broadcast %141 : vector<4x1xf32> to vector<4x16xf32>
    %150 = arith.addf %148, %149 : vector<4x16xf32>
    %151 = arith.subf %16, %150 : vector<4x16xf32>
    %cst_31 = arith.constant dense<0xFF800000> : vector<4xf32>
    %152 = vector.multi_reduction <maximumf>, %151, %cst_31 [1] : vector<4x16xf32> to vector<4xf32>
    %153 = vector.shape_cast %152 : vector<4xf32> to vector<4x1xf32>
    %154 = vector.broadcast %153 : vector<4x1xf32> to vector<4x16xf32>
    %155 = arith.subf %151, %154 : vector<4x16xf32>
    %156 = math.exp %155 : vector<4x16xf32>
    %cst_32 = arith.constant dense<0.000000e+00> : vector<4x16xf32>
    %157 = tpu.matmul %156, %15, %cst_32 {dimension_numbers = #tpu.dot_dimension_numbers<[1], [0], [0], [1], [0, 0, 1, 1], [], []>, precision = #tpu.contract_precision<fp32>} : vector<4x16xf32>, vector<16x16xf32>, vector<4x16xf32> -> vector<4x16xf32>
    %158 = math.log %157 : vector<4x16xf32>
    %159 = vector.broadcast %9 : vector<1x16xf32> to vector<4x16xf32>
    %160 = arith.addf %158, %159 : vector<4x16xf32>
    %161 = vector.broadcast %153 : vector<4x1xf32> to vector<4x16xf32>
    %162 = arith.addf %160, %161 : vector<4x16xf32>
    %163 = arith.subf %17, %162 : vector<4x16xf32>
    %c6_i32 = arith.constant 6 : i32
    %cst_33 = arith.constant dense<0xFF800000> : vector<4xf32>
    %164 = vector.multi_reduction <maximumf>, %163, %cst_33 [1] : vector<4x16xf32> to vector<4xf32>
    %165 = vector.shape_cast %164 : vector<4xf32> to vector<4x1xf32>
    %166 = vector.broadcast %165 : vector<4x1xf32> to vector<4x16xf32>
    %167 = arith.subf %163, %166 : vector<4x16xf32>
    %168 = math.exp %167 : vector<4x16xf32>
    %cst_34 = arith.constant dense<0.000000e+00> : vector<4x16xf32>
    %169 = tpu.matmul %168, %12, %cst_34 {dimension_numbers = #tpu.dot_dimension_numbers<[1], [0], [0], [1], [0, 0, 1, 1], [], []>, precision = #tpu.contract_precision<fp32>} : vector<4x16xf32>, vector<16x16xf32>, vector<4x16xf32> -> vector<4x16xf32>
    %170 = math.log %169 : vector<4x16xf32>
    %171 = vector.broadcast %7 : vector<1x16xf32> to vector<4x16xf32>
    %172 = arith.addf %170, %171 : vector<4x16xf32>
    %173 = vector.broadcast %165 : vector<4x1xf32> to vector<4x16xf32>
    %174 = arith.addf %172, %173 : vector<4x16xf32>
    %175 = arith.subf %16, %174 : vector<4x16xf32>
    %cst_35 = arith.constant dense<0xFF800000> : vector<4xf32>
    %176 = vector.multi_reduction <maximumf>, %175, %cst_35 [1] : vector<4x16xf32> to vector<4xf32>
    %177 = vector.shape_cast %176 : vector<4xf32> to vector<4x1xf32>
    %178 = vector.broadcast %177 : vector<4x1xf32> to vector<4x16xf32>
    %179 = arith.subf %175, %178 : vector<4x16xf32>
    %180 = math.exp %179 : vector<4x16xf32>
    %cst_36 = arith.constant dense<0.000000e+00> : vector<4x16xf32>
    %181 = tpu.matmul %180, %15, %cst_36 {dimension_numbers = #tpu.dot_dimension_numbers<[1], [0], [0], [1], [0, 0, 1, 1], [], []>, precision = #tpu.contract_precision<fp32>} : vector<4x16xf32>, vector<16x16xf32>, vector<4x16xf32> -> vector<4x16xf32>
    %182 = math.log %181 : vector<4x16xf32>
    %183 = vector.broadcast %9 : vector<1x16xf32> to vector<4x16xf32>
    %184 = arith.addf %182, %183 : vector<4x16xf32>
    %185 = vector.broadcast %177 : vector<4x1xf32> to vector<4x16xf32>
    %186 = arith.addf %184, %185 : vector<4x16xf32>
    %187 = arith.subf %17, %186 : vector<4x16xf32>
    %c7_i32 = arith.constant 7 : i32
    %cst_37 = arith.constant dense<0xFF800000> : vector<4xf32>
    %188 = vector.multi_reduction <maximumf>, %187, %cst_37 [1] : vector<4x16xf32> to vector<4xf32>
    %189 = vector.shape_cast %188 : vector<4xf32> to vector<4x1xf32>
    %190 = vector.broadcast %189 : vector<4x1xf32> to vector<4x16xf32>
    %191 = arith.subf %187, %190 : vector<4x16xf32>
    %192 = math.exp %191 : vector<4x16xf32>
    %cst_38 = arith.constant dense<0.000000e+00> : vector<4x16xf32>
    %193 = tpu.matmul %192, %12, %cst_38 {dimension_numbers = #tpu.dot_dimension_numbers<[1], [0], [0], [1], [0, 0, 1, 1], [], []>, precision = #tpu.contract_precision<fp32>} : vector<4x16xf32>, vector<16x16xf32>, vector<4x16xf32> -> vector<4x16xf32>
    %194 = math.log %193 : vector<4x16xf32>
    %195 = vector.broadcast %7 : vector<1x16xf32> to vector<4x16xf32>
    %196 = arith.addf %194, %195 : vector<4x16xf32>
    %197 = vector.broadcast %189 : vector<4x1xf32> to vector<4x16xf32>
    %198 = arith.addf %196, %197 : vector<4x16xf32>
    %199 = arith.subf %16, %198 : vector<4x16xf32>
    %cst_39 = arith.constant dense<0xFF800000> : vector<4xf32>
    %200 = vector.multi_reduction <maximumf>, %199, %cst_39 [1] : vector<4x16xf32> to vector<4xf32>
    %201 = vector.shape_cast %200 : vector<4xf32> to vector<4x1xf32>
    %202 = vector.broadcast %201 : vector<4x1xf32> to vector<4x16xf32>
    %203 = arith.subf %199, %202 : vector<4x16xf32>
    %204 = math.exp %203 : vector<4x16xf32>
    %cst_40 = arith.constant dense<0.000000e+00> : vector<4x16xf32>
    %205 = tpu.matmul %204, %15, %cst_40 {dimension_numbers = #tpu.dot_dimension_numbers<[1], [0], [0], [1], [0, 0, 1, 1], [], []>, precision = #tpu.contract_precision<fp32>} : vector<4x16xf32>, vector<16x16xf32>, vector<4x16xf32> -> vector<4x16xf32>
    %206 = math.log %205 : vector<4x16xf32>
    %207 = vector.broadcast %9 : vector<1x16xf32> to vector<4x16xf32>
    %208 = arith.addf %206, %207 : vector<4x16xf32>
    %209 = vector.broadcast %201 : vector<4x1xf32> to vector<4x16xf32>
    %210 = arith.addf %208, %209 : vector<4x16xf32>
    %211 = arith.subf %17, %210 : vector<4x16xf32>
    %c8_i32 = arith.constant 8 : i32
    %cst_41 = arith.constant dense<0xFF800000> : vector<4xf32>
    %212 = vector.multi_reduction <maximumf>, %211, %cst_41 [1] : vector<4x16xf32> to vector<4xf32>
    %213 = vector.shape_cast %212 : vector<4xf32> to vector<4x1xf32>
    %214 = vector.broadcast %213 : vector<4x1xf32> to vector<4x16xf32>
    %215 = arith.subf %211, %214 : vector<4x16xf32>
    %216 = math.exp %215 : vector<4x16xf32>
    %cst_42 = arith.constant dense<0.000000e+00> : vector<4x16xf32>
    %217 = tpu.matmul %216, %12, %cst_42 {dimension_numbers = #tpu.dot_dimension_numbers<[1], [0], [0], [1], [0, 0, 1, 1], [], []>, precision = #tpu.contract_precision<fp32>} : vector<4x16xf32>, vector<16x16xf32>, vector<4x16xf32> -> vector<4x16xf32>
    %218 = math.log %217 : vector<4x16xf32>
    %219 = vector.broadcast %7 : vector<1x16xf32> to vector<4x16xf32>
    %220 = arith.addf %218, %219 : vector<4x16xf32>
    %221 = vector.broadcast %213 : vector<4x1xf32> to vector<4x16xf32>
    %222 = arith.addf %220, %221 : vector<4x16xf32>
    %223 = arith.subf %16, %222 : vector<4x16xf32>
    %cst_43 = arith.constant dense<0xFF800000> : vector<4xf32>
    %224 = vector.multi_reduction <maximumf>, %223, %cst_43 [1] : vector<4x16xf32> to vector<4xf32>
    %225 = vector.shape_cast %224 : vector<4xf32> to vector<4x1xf32>
    %226 = vector.broadcast %225 : vector<4x1xf32> to vector<4x16xf32>
    %227 = arith.subf %223, %226 : vector<4x16xf32>
    %228 = math.exp %227 : vector<4x16xf32>
    %cst_44 = arith.constant dense<0.000000e+00> : vector<4x16xf32>
    %229 = tpu.matmul %228, %15, %cst_44 {dimension_numbers = #tpu.dot_dimension_numbers<[1], [0], [0], [1], [0, 0, 1, 1], [], []>, precision = #tpu.contract_precision<fp32>} : vector<4x16xf32>, vector<16x16xf32>, vector<4x16xf32> -> vector<4x16xf32>
    %230 = math.log %229 : vector<4x16xf32>
    %231 = vector.broadcast %9 : vector<1x16xf32> to vector<4x16xf32>
    %232 = arith.addf %230, %231 : vector<4x16xf32>
    %233 = vector.broadcast %225 : vector<4x1xf32> to vector<4x16xf32>
    %234 = arith.addf %232, %233 : vector<4x16xf32>
    %235 = arith.subf %17, %234 : vector<4x16xf32>
    %c9_i32 = arith.constant 9 : i32
    %cst_45 = arith.constant dense<0xFF800000> : vector<4xf32>
    %236 = vector.multi_reduction <maximumf>, %235, %cst_45 [1] : vector<4x16xf32> to vector<4xf32>
    %237 = vector.shape_cast %236 : vector<4xf32> to vector<4x1xf32>
    %238 = vector.broadcast %237 : vector<4x1xf32> to vector<4x16xf32>
    %239 = arith.subf %235, %238 : vector<4x16xf32>
    %240 = math.exp %239 : vector<4x16xf32>
    %cst_46 = arith.constant dense<0.000000e+00> : vector<4x16xf32>
    %241 = tpu.matmul %240, %12, %cst_46 {dimension_numbers = #tpu.dot_dimension_numbers<[1], [0], [0], [1], [0, 0, 1, 1], [], []>, precision = #tpu.contract_precision<fp32>} : vector<4x16xf32>, vector<16x16xf32>, vector<4x16xf32> -> vector<4x16xf32>
    %242 = math.log %241 : vector<4x16xf32>
    %243 = vector.broadcast %7 : vector<1x16xf32> to vector<4x16xf32>
    %244 = arith.addf %242, %243 : vector<4x16xf32>
    %245 = vector.broadcast %237 : vector<4x1xf32> to vector<4x16xf32>
    %246 = arith.addf %244, %245 : vector<4x16xf32>
    %247 = arith.subf %16, %246 : vector<4x16xf32>
    %cst_47 = arith.constant dense<0xFF800000> : vector<4xf32>
    %248 = vector.multi_reduction <maximumf>, %247, %cst_47 [1] : vector<4x16xf32> to vector<4xf32>
    %249 = vector.shape_cast %248 : vector<4xf32> to vector<4x1xf32>
    %250 = vector.broadcast %249 : vector<4x1xf32> to vector<4x16xf32>
    %251 = arith.subf %247, %250 : vector<4x16xf32>
    %252 = math.exp %251 : vector<4x16xf32>
    %cst_48 = arith.constant dense<0.000000e+00> : vector<4x16xf32>
    %253 = tpu.matmul %252, %15, %cst_48 {dimension_numbers = #tpu.dot_dimension_numbers<[1], [0], [0], [1], [0, 0, 1, 1], [], []>, precision = #tpu.contract_precision<fp32>} : vector<4x16xf32>, vector<16x16xf32>, vector<4x16xf32> -> vector<4x16xf32>
    %254 = math.log %253 : vector<4x16xf32>
    %255 = vector.broadcast %9 : vector<1x16xf32> to vector<4x16xf32>
    %256 = arith.addf %254, %255 : vector<4x16xf32>
    %257 = vector.broadcast %249 : vector<4x1xf32> to vector<4x16xf32>
    %258 = arith.addf %256, %257 : vector<4x16xf32>
    %259 = arith.subf %17, %258 : vector<4x16xf32>
    %cst_49 = arith.constant 1.000000e-01 : f32
    %260 = vector.broadcast %cst_49 : f32 to vector<4x16xf32>
    %261 = arith.mulf %260, %247 : vector<4x16xf32>
    %c0_50 = arith.constant 0 : index
    %c0_51 = arith.constant 0 : index
    %262 = vector.load %arg3[%c0_50, %c0_51] : memref<4x16xf32, #tpu.memory_space<vmem>>, vector<4x16xf32>
    tpu.vector_store %arg3[%c0_50, %c0_51], %261 {strides = array<i32>} : memref<4x16xf32, #tpu.memory_space<vmem>>, vector<4x16xf32>,
    %cst_52 = arith.constant 1.000000e-01 : f32
    %263 = vector.broadcast %cst_52 : f32 to vector<4x16xf32>
    %264 = arith.mulf %263, %259 : vector<4x16xf32>
    %c0_53 = arith.constant 0 : index
    %c0_54 = arith.constant 0 : index
    %265 = vector.load %arg4[%c0_53, %c0_54] : memref<4x16xf32, #tpu.memory_space<vmem>>, vector<4x16xf32>
    tpu.vector_store %arg4[%c0_53, %c0_54], %264 {strides = array<i32>} : memref<4x16xf32, #tpu.memory_space<vmem>>, vector<4x16xf32>,
    return
  }
}

</mosaic_0001>

<llo_original>
// kernel: tpu_custom_call.1
$region0: #{tpu_custom_call.1}
  #allocation0 [shape = 'u32[]', space=smem, size = 0x4, offset = 0x4, fixed_abs, tag = 'smem constant byte address 0x4 - core index']
  #allocation1 [shape = 'u32[72,128]{1,0:T(1,128)}', space=vmem, size = 0x9000, scoped, tag = 'internal scratch']
  %s0 = inlined_call_operand.hbm [shape: f32[4,16], index: 0, kind: input, shape index: {}]
  %s1 = inlined_call_operand.hbm [shape: f32[4,16], index: 1, kind: input, shape index: {}]
  %s2 = inlined_call_operand.hbm [shape: f32[16,16], index: 2, kind: input, shape index: {}]
  %s3 = inlined_call_operand.hbm [shape: f32[4,16], index: 3, kind: output, shape index: {0}]
  %s4 = inlined_call_operand.hbm [shape: f32[4,16], index: 4, kind: output, shape index: {1}]
  %5 = xla_tuple %s3, %s4
  %s6 = sld [smem:[#allocation0]]
  $region42: #{tpu_custom_call.1} parent=0
    _
  %s8 = ssub.s32 1, %s6
  %s9 = scalar_select 0, %s8, %s6
  $region1: #{tpu_custom_call.1} parent=0
    #allocation2 [shape = 'u8[2048]{0}', space=vmem, size = 0x800, scoped, tag = 'input window, operand 0, single buffered']
    #allocation3 [shape = 's32[1]{0}', space=sflag, size = 0x4, scoped, tag = 'scoped memory for tpu_custom_call.1']
    #allocation4 [shape = 's32[1]{0}', space=sflag, size = 0x4, scoped, tag = 'scoped memory for tpu_custom_call.1']
    #allocation5 [shape = 'u8[2048]{0}', space=vmem, size = 0x800, scoped, tag = 'input window, operand 1, single buffered']
    #allocation6 [shape = 's32[1]{0}', space=sflag, size = 0x4, scoped, tag = 'scoped memory for tpu_custom_call.1']
    #allocation7 [shape = 'u8[8192]{0}', space=vmem, size = 0x2000, scoped, tag = 'input window, operand 2, single buffered']
    #allocation8 [shape = 'u8[2048]{0}', space=vmem, size = 0x800, scoped, tag = 'output window, operand 0, single buffered']
    #allocation9 [shape = 'u8[2048]{0}', space=vmem, size = 0x800, scoped, tag = 'output window, operand 1, single buffered']
    #allocation10 [shape = 's32[1]{0}', space=sflag, size = 0x4, scoped, tag = 'scoped memory for tpu_custom_call.1']
    %10 = vsyncpa [#allocation3], 0
    %11 = vsyncpa [#allocation6], 0
    %12 = vsyncpa [#allocation4], 0
    %13 = vsyncpa [#allocation10], 0
    // Predicated region
    $region2: #{tpu_custom_call.1} parent=1 // pred_check
      _
    $region3: #{tpu_custom_call.1} parent=1 // pred_check_branch
      %15 = sbr.rel (0) target = $region5
    $region4: #{tpu_custom_call.1} parent=1 // pred_region
      %17 = vsyncadd [#allocation3], 0
      %s19 = sshll.u32 %s0, 4
      %s20 = int_to_ptr.hbm [resolvable:$true] %s19
      %s21 = sshll.u32 [#allocation2], 4
      %s22 = int_to_ptr.vmem [resolvable:$true] %s21
      %24 = dma.hbm_to_vmem [thread:$0]  %s20, 64, %s22, [#allocation3]
    $region5: #{tpu_custom_call.1} parent=1 // pred_fallthru
      _
    // Predicated region
    $region6: #{tpu_custom_call.1} parent=1 // pred_check
      _
    $region7: #{tpu_custom_call.1} parent=1 // pred_check_branch
      %26 = sbr.rel (0) target = $region9
    $region8: #{tpu_custom_call.1} parent=1 // pred_region
      %28 = vsyncadd [#allocation6], 0
      %s30 = sshll.u32 %s1, 4
      %s31 = int_to_ptr.hbm [resolvable:$true] %s30
      %s32 = sshll.u32 [#allocation5], 4
      %s33 = int_to_ptr.vmem [resolvable:$true] %s32
      %35 = dma.hbm_to_vmem [thread:$0]  %s31, 64, %s33, [#allocation6]
    $region9: #{tpu_custom_call.1} parent=1 // pred_fallthru
      _
    // Predicated region
    $region10: #{tpu_custom_call.1} parent=1 // pred_check
      _
    $region11: #{tpu_custom_call.1} parent=1 // pred_check_branch
      %37 = sbr.rel (0) target = $region13
    $region12: #{tpu_custom_call.1} parent=1 // pred_region
      %39 = vsyncadd [#allocation6], 0
      %s40 = sshll.u32 %s2, 4
      %s41 = int_to_ptr.hbm [resolvable:$true] %s40
      %s42 = sshll.u32 [#allocation7], 4
      %s43 = int_to_ptr.vmem [resolvable:$true] %s42
      %48 = dma.hbm_to_vmem [thread:$0]  %s41, 256, %s43, [#allocation6], 128, 128, 8
    $region13: #{tpu_custom_call.1} parent=1 // pred_fallthru
      _
    // Predicated region
    $region14: #{tpu_custom_call.1} parent=1 // pred_check
      _
    $region15: #{tpu_custom_call.1} parent=1 // pred_check_branch
      %50 = sbr.rel (0) target = $region17
    $region16: #{tpu_custom_call.1} parent=1 // pred_region
      %52 = dma.done [#allocation3], 64
    $region17: #{tpu_custom_call.1} parent=1 // pred_fallthru
      _
    // Predicated region
    $region18: #{tpu_custom_call.1} parent=1 // pred_check
      _
    $region19: #{tpu_custom_call.1} parent=1 // pred_check_branch
      %54 = sbr.rel (0) target = $region21
    $region20: #{tpu_custom_call.1} parent=1 // pred_region
      %56 = dma.done [#allocation6], 64
    $region21: #{tpu_custom_call.1} parent=1 // pred_fallthru
      _
    // Predicated region
    $region22: #{tpu_custom_call.1} parent=1 // pred_check
      _
    $region23: #{tpu_custom_call.1} parent=1 // pred_check_branch
      %58 = sbr.rel (0) target = $region25
    $region24: #{tpu_custom_call.1} parent=1 // pred_region
      %60 = dma.done [#allocation6], 256
    $region25: #{tpu_custom_call.1} parent=1 // pred_fallthru
      _
    %v61 = vld [vmem:[#allocation2] sm:$0xf]
    %v62 = vld [vmem:[#allocation5] sm:$0xf]
    %v63 = vld [vmem:[#allocation7] sm:$0xff]
    %v64 = vld [vmem:[#allocation7 + $0x8] sm:$0xff]
    %v65 = vmul.f32 %v63, -10.0
    %v66 = vmul.f32 %v64, -10.0
    %67 = vxpose.xlu0.b32.start [1/16] %v65, 128
    %68 = vxpose.xlu0.b32.cont [2/16] %v66, 128
    %69 = vxpose.xlu0.b32.cont [3/16] 0.0, 128
    %70 = vxpose.xlu0.b32.cont [4/16] 0.0, 128
    %71 = vxpose.xlu0.b32.cont [5/16] 0.0, 128
    %72 = vxpose.xlu0.b32.cont [6/16] 0.0, 128
    %73 = vxpose.xlu0.b32.cont [7/16] 0.0, 128
    %74 = vxpose.xlu0.b32.cont [8/16] 0.0, 128
    %75 = vxpose.xlu0.b32.cont [9/16] 0.0, 128
    %76 = vxpose.xlu0.b32.cont [10/16] 0.0, 128
    %77 = vxpose.xlu0.b32.cont [11/16] 0.0, 128
    %78 = vxpose.xlu0.b32.cont [12/16] 0.0, 128
    %79 = vxpose.xlu0.b32.cont [13/16] 0.0, 128
    %80 = vxpose.xlu0.b32.cont [14/16] 0.0, 128
    %81 = vxpose.xlu0.b32.cont [15/16] 0.0, 128
    %82 = vxpose.xlu0.b32.end [16/16] 0.0, 128
    %v83 = vpop.trf.xlu0
    %v84 = vpop.trf.xlu0
    %v85 = vpop.trf.xlu0
    %v86 = vpop.trf.xlu0
    %v87 = vpop.trf.xlu0
    %v88 = vpop.trf.xlu0
    %v89 = vpop.trf.xlu0
    %v90 = vpop.trf.xlu0
    %v91 = vpop.trf.xlu0
    %v92 = vpop.trf.xlu0
    %v93 = vpop.trf.xlu0
    %v94 = vpop.trf.xlu0
    %v95 = vpop.trf.xlu0
    %v96 = vpop.trf.xlu0
    %v97 = vpop.trf.xlu0
    %v98 = vpop.trf.xlu0
    %vm99 = vcmask 130048
    %v100 = vsel %vm99, %v83, -inf
    %v101 = vsel %vm99, %v84, -inf
    %v102 = vmax.f32 %v100, %v101
    %v103 = vrot.slane %v102, 4
    %v104 = vmax.f32 %v102, %v103
    %v105 = vrot.slane %v104, 2
    %v106 = vmax.f32 %v104, %v105
    %v107 = vrot.slane %v106, 1
    %v108 = vmax.f32 %v106, %v107
    %v109 = vsel %vm99, %v65, -inf
    %v110 = vsel %vm99, %v66, -inf
    %v111 = vmax.f32 %v109, %v110
    %v112 = vrot.slane %v111, 4
    %v113 = vmax.f32 %v111, %v112
    %v114 = vrot.slane %v113, 2
    %v115 = vmax.f32 %v113, %v114
    %v116 = vrot.slane %v115, 1
    %v117 = vmax.f32 %v115, %v116
    %v118 = vsub.f32 %v83, %v108
    %v119 = vsub.f32 %v84, %v108
    %v120 = vmul.f32 %v118, 1.442695
    %v121 = vpow.pop %v120
    %v122 = vmul.f32 %v119, 1.442695
    %v123 = vpow.pop %v122
    %v124 = vsub.f32 %v65, %v117
    %v125 = vsub.f32 %v66, %v117
    %v126 = vmul.f32 %v124, 1.442695
    %v127 = vpow.pop %v126
    %v128 = vmul.f32 %v125, 1.442695
    %v129 = vpow.pop %v128
    %v130 = vlog2.pop %v61
    %v131 = vmul.f32 %v130, 0.6931472
    %v132 = vlog2.pop %v62
    %v133 = vmul.f32 %v132, 0.6931472
    %v135 = vsel %vm99, 1.0, 0
    %137 = vmatpush.msra.mxu0 0.0
    %138 = vmatpush.msra.mxu0 0.0
    %139 = vmatpush.msra.mxu0 0.0
    %140 = vmatpush.msra.mxu0 0.0
    %141 = vmatpush.msra.mxu0 0.0
    %142 = vmatpush.msra.mxu0 0.0
    %143 = vmatpush.msra.mxu0 0.0
    %144 = vmatpush.msra.mxu0 0.0
    %145 = vmatpush.msra.mxu0 0.0
    %146 = vmatpush.msra.mxu0 0.0
    %147 = vmatpush.msra.mxu0 0.0
    %148 = vmatpush.msra.mxu0 0.0
    %149 = vmatpush.msra.mxu0 0.0
    %150 = vmatpush.msra.mxu0 0.0
    %v151 = vand.u32 %v123, 4294901760
    %152 = vmatpush.msra.mxu0 %v151
    %v153 = vand.u32 %v121, 4294901760
    %154 = vmatpush.msra.mxu0 %v153
    %v155 = vand.u32 %v135, 4294901760
    %v156 = vsub.f32 %v135, %v155
    %v157 = vand.u32 %v156, 4294901760
    %v158 = vsub.f32 %v156, %v157
    %v159 = vand.u32 %v158, 4294901760
    %160 = vmatmul.f32.gmra.mxu0 %v159
    %v161 = vpop.f32.mrf.mxu0
    %v162 = vadd.f32 0.0, %v161
    %163 = vdwg.mxu0
    %164 = vmatpush.msra.mxu0 0.0
    %165 = vmatpush.msra.mxu0 0.0
    %166 = vmatpush.msra.mxu0 0.0
    %167 = vmatpush.msra.mxu0 0.0
    %168 = vmatpush.msra.mxu0 0.0
    %169 = vmatpush.msra.mxu0 0.0
    %170 = vmatpush.msra.mxu0 0.0
    %171 = vmatpush.msra.mxu0 0.0
    %172 = vmatpush.msra.mxu0 0.0
    %173 = vmatpush.msra.mxu0 0.0
    %174 = vmatpush.msra.mxu0 0.0
    %175 = vmatpush.msra.mxu0 0.0
    %176 = vmatpush.msra.mxu0 0.0
    %177 = vmatpush.msra.mxu0 0.0
    %v178 = vand.u32 %v123, 4294901760
    %v179 = vsub.f32 %v123, %v178
    %v180 = vand.u32 %v179, 4294901760
    %v181 = vsub.f32 %v179, %v180
    %v182 = vand.u32 %v181, 4294901760
    %183 = vmatpush.msra.mxu0 %v182
    %v184 = vand.u32 %v121, 4294901760
    %v185 = vsub.f32 %v121, %v184
    %v186 = vand.u32 %v185, 4294901760
    %v187 = vsub.f32 %v185, %v186
    %v188 = vand.u32 %v187, 4294901760
    %189 = vmatpush.msra.mxu0 %v188
    %v190 = vand.u32 %v135, 4294901760
    %191 = vmatmul.f32.gmra.mxu0 %v190
    %v192 = vpop.f32.mrf.mxu0
    %v193 = vadd.f32 %v162, %v192
    %194 = vdwg.mxu0
    %195 = vmatpush.msra.mxu0 0.0
    %196 = vmatpush.msra.mxu0 0.0
    %197 = vmatpush.msra.mxu0 0.0
    %198 = vmatpush.msra.mxu0 0.0
    %199 = vmatpush.msra.mxu0 0.0
    %200 = vmatpush.msra.mxu0 0.0
    %201 = vmatpush.msra.mxu0 0.0
    %202 = vmatpush.msra.mxu0 0.0
    %203 = vmatpush.msra.mxu0 0.0
    %204 = vmatpush.msra.mxu0 0.0
    %205 = vmatpush.msra.mxu0 0.0
    %206 = vmatpush.msra.mxu0 0.0
    %207 = vmatpush.msra.mxu0 0.0
    %208 = vmatpush.msra.mxu0 0.0
    %v209 = vand.u32 %v123, 4294901760
    %v210 = vsub.f32 %v123, %v209
    %211 = vmatpush.msra.mxu0 %v210
    %v212 = vand.u32 %v121, 4294901760
    %v213 = vsub.f32 %v121, %v212
    %214 = vmatpush.msra.mxu0 %v213
    %v215 = vand.u32 %v135, 4294901760
    %v216 = vsub.f32 %v135, %v215
    %217 = vmatmul.f32.gmra.mxu0 %v216
    %v218 = vpop.f32.mrf.mxu0
    %v219 = vadd.f32 %v193, %v218
    %220 = vdwg.mxu0
    %221 = vmatpush.msra.mxu0 0.0
    %222 = vmatpush.msra.mxu0 0.0
    %223 = vmatpush.msra.mxu0 0.0
    %224 = vmatpush.msra.mxu0 0.0
    %225 = vmatpush.msra.mxu0 0.0
    %226 = vmatpush.msra.mxu0 0.0
    %227 = vmatpush.msra.mxu0 0.0
    %228 = vmatpush.msra.mxu0 0.0
    %229 = vmatpush.msra.mxu0 0.0
    %230 = vmatpush.msra.mxu0 0.0
    %231 = vmatpush.msra.mxu0 0.0
    %232 = vmatpush.msra.mxu0 0.0
    %233 = vmatpush.msra.mxu0 0.0
    %234 = vmatpush.msra.mxu0 0.0
    %v235 = vand.u32 %v123, 4294901760
    %236 = vmatpush.msra.mxu0 %v235
    %v237 = vand.u32 %v121, 4294901760
    %238 = vmatpush.msra.mxu0 %v237
    %v239 = vand.u32 %v135, 4294901760
    %v240 = vsub.f32 %v135, %v239
    %v241 = vand.u32 %v240, 4294901760
    %242 = vmatmul.f32.gmra.mxu0 %v241
    %v243 = vpop.f32.mrf.mxu0
    %v244 = vadd.f32 %v219, %v243
    %245 = vdwg.mxu0
    %246 = vmatpush.msra.mxu0 0.0
    %247 = vmatpush.msra.mxu0 0.0
    %248 = vmatpush.msra.mxu0 0.0
    %249 = vmatpush.msra.mxu0 0.0
    %250 = vmatpush.msra.mxu0 0.0
    %251 = vmatpush.msra.mxu0 0.0
    %252 = vmatpush.msra.mxu0 0.0
    %253 = vmatpush.msra.mxu0 0.0
    %254 = vmatpush.msra.mxu0 0.0
    %255 = vmatpush.msra.mxu0 0.0
    %256 = vmatpush.msra.mxu0 0.0
    %257 = vmatpush.msra.mxu0 0.0
    %258 = vmatpush.msra.mxu0 0.0
    %259 = vmatpush.msra.mxu0 0.0
    %v260 = vand.u32 %v123, 4294901760
    %v261 = vsub.f32 %v123, %v260
    %v262 = vand.u32 %v261, 4294901760
    %263 = vmatpush.msra.mxu0 %v262
    %v264 = vand.u32 %v121, 4294901760
    %v265 = vsub.f32 %v121, %v264
    %v266 = vand.u32 %v265, 4294901760
    %267 = vmatpush.msra.mxu0 %v266
    %v268 = vand.u32 %v135, 4294901760
    %269 = vmatmul.f32.gmra.mxu0 %v268
    %v270 = vpop.f32.mrf.mxu0
    %v271 = vadd.f32 %v244, %v270
    %272 = vdwg.mxu0
    %273 = vmatpush.msra.mxu0 0.0
    %274 = vmatpush.msra.mxu0 0.0
    %275 = vmatpush.msra.mxu0 0.0
    %276 = vmatpush.msra.mxu0 0.0
    %277 = vmatpush.msra.mxu0 0.0
    %278 = vmatpush.msra.mxu0 0.0
    %279 = vmatpush.msra.mxu0 0.0
    %280 = vmatpush.msra.mxu0 0.0
    %281 = vmatpush.msra.mxu0 0.0
    %282 = vmatpush.msra.mxu0 0.0
    %283 = vmatpush.msra.mxu0 0.0
    %284 = vmatpush.msra.mxu0 0.0
    %285 = vmatpush.msra.mxu0 0.0
    %286 = vmatpush.msra.mxu0 0.0
    %v287 = vand.u32 %v123, 4294901760
    %288 = vmatpush.msra.mxu0 %v287
    %v289 = vand.u32 %v121, 4294901760
    %290 = vmatpush.msra.mxu0 %v289
    %v291 = vand.u32 %v135, 4294901760
    %292 = vmatmul.f32.gmra.mxu0 %v291
    %v293 = vpop.f32.mrf.mxu0
    %v294 = vadd.f32 %v271, %v293
    %295 = vdwg.mxu0
    %v296 = vlog2.pop %v294
    %v297 = vmul.f32 %v296, 0.6931472
    %v298 = vadd.f32 %v297, %v108
    %v299 = vadd.f32 %v298, 0.0
    %v300 = vsub.f32 %v131, %v299
    %vm301 = vcmask 125952
    %v302 = vsel %vm301, %v300, -inf
    %303 = vmax.xlane.f32.xlu0 %v302
    %v304 = vpop.xlane.xlu0 %303
    %v305 = vsub.f32 %v300, %v304
    %v306 = vmul.f32 %v305, 1.442695
    %v307 = vpow.pop %v306
    %v309 = vsel %vm99, %v307, 0
    %311 = vmatpush.msra.mxu0 0.0
    %312 = vmatpush.msra.mxu0 0.0
    %313 = vmatpush.msra.mxu0 0.0
    %314 = vmatpush.msra.mxu0 0.0
    %315 = vmatpush.msra.mxu0 0.0
    %316 = vmatpush.msra.mxu0 0.0
    %317 = vmatpush.msra.mxu0 0.0
    %318 = vmatpush.msra.mxu0 0.0
    %319 = vmatpush.msra.mxu0 0.0
    %320 = vmatpush.msra.mxu0 0.0
    %321 = vmatpush.msra.mxu0 0.0
    %322 = vmatpush.msra.mxu0 0.0
    %323 = vmatpush.msra.mxu0 0.0
    %324 = vmatpush.msra.mxu0 0.0
    %v325 = vand.u32 %v129, 4294901760
    %326 = vmatpush.msra.mxu0 %v325
    %v327 = vand.u32 %v127, 4294901760
    %328 = vmatpush.msra.mxu0 %v327
    %v329 = vand.u32 %v309, 4294901760
    %v330 = vsub.f32 %v309, %v329
    %v331 = vand.u32 %v330, 4294901760
    %v332 = vsub.f32 %v330, %v331
    %v333 = vand.u32 %v332, 4294901760
    %334 = vmatmul.f32.gmra.mxu0 %v333
    %v335 = vpop.f32.mrf.mxu0
    %v336 = vadd.f32 0.0, %v335
    %337 = vdwg.mxu0
    %338 = vmatpush.msra.mxu0 0.0
    %339 = vmatpush.msra.mxu0 0.0
    %340 = vmatpush.msra.mxu0 0.0
    %341 = vmatpush.msra.mxu0 0.0
    %342 = vmatpush.msra.mxu0 0.0
    %343 = vmatpush.msra.mxu0 0.0
    %344 = vmatpush.msra.mxu0 0.0
    %345 = vmatpush.msra.mxu0 0.0
    %346 = vmatpush.msra.mxu0 0.0
    %347 = vmatpush.msra.mxu0 0.0
    %348 = vmatpush.msra.mxu0 0.0
    %349 = vmatpush.msra.mxu0 0.0
    %350 = vmatpush.msra.mxu0 0.0
    %351 = vmatpush.msra.mxu0 0.0
    %v352 = vand.u32 %v129, 4294901760
    %v353 = vsub.f32 %v129, %v352
    %v354 = vand.u32 %v353, 4294901760
    %v355 = vsub.f32 %v353, %v354
    %v356 = vand.u32 %v355, 4294901760
    %357 = vmatpush.msra.mxu0 %v356
    %v358 = vand.u32 %v127, 4294901760
    %v359 = vsub.f32 %v127, %v358
    %v360 = vand.u32 %v359, 4294901760
    %v361 = vsub.f32 %v359, %v360
    %v362 = vand.u32 %v361, 4294901760
    %363 = vmatpush.msra.mxu0 %v362
    %v364 = vand.u32 %v309, 4294901760
    %365 = vmatmul.f32.gmra.mxu0 %v364
    %v366 = vpop.f32.mrf.mxu0
    %v367 = vadd.f32 %v336, %v366
    %368 = vdwg.mxu0
    %369 = vmatpush.msra.mxu0 0.0
    %370 = vmatpush.msra.mxu0 0.0
    %371 = vmatpush.msra.mxu0 0.0
    %372 = vmatpush.msra.mxu0 0.0
    %373 = vmatpush.msra.mxu0 0.0
    %374 = vmatpush.msra.mxu0 0.0
    %375 = vmatpush.msra.mxu0 0.0
    %376 = vmatpush.msra.mxu0 0.0
    %377 = vmatpush.msra.mxu0 0.0
    %378 = vmatpush.msra.mxu0 0.0
    %379 = vmatpush.msra.mxu0 0.0
    %380 = vmatpush.msra.mxu0 0.0
    %381 = vmatpush.msra.mxu0 0.0
    %382 = vmatpush.msra.mxu0 0.0
    %v383 = vand.u32 %v129, 4294901760
    %v384 = vsub.f32 %v129, %v383
    %385 = vmatpush.msra.mxu0 %v384
    %v386 = vand.u32 %v127, 4294901760
    %v387 = vsub.f32 %v127, %v386
    %388 = vmatpush.msra.mxu0 %v387
    %v389 = vand.u32 %v309, 4294901760
    %v390 = vsub.f32 %v309, %v389
    %391 = vmatmul.f32.gmra.mxu0 %v390
    %v392 = vpop.f32.mrf.mxu0
    %v393 = vadd.f32 %v367, %v392
    %394 = vdwg.mxu0
    %395 = vmatpush.msra.mxu0 0.0
    %396 = vmatpush.msra.mxu0 0.0
    %397 = vmatpush.msra.mxu0 0.0
    %398 = vmatpush.msra.mxu0 0.0
    %399 = vmatpush.msra.mxu0 0.0
    %400 = vmatpush.msra.mxu0 0.0
    %401 = vmatpush.msra.mxu0 0.0
    %402 = vmatpush.msra.mxu0 0.0
    %403 = vmatpush.msra.mxu0 0.0
    %404 = vmatpush.msra.mxu0 0.0
    %405 = vmatpush.msra.mxu0 0.0
    %406 = vmatpush.msra.mxu0 0.0
    %407 = vmatpush.msra.mxu0 0.0
    %408 = vmatpush.msra.mxu0 0.0
    %v409 = vand.u32 %v129, 4294901760
    %410 = vmatpush.msra.mxu0 %v409
    %v411 = vand.u32 %v127, 4294901760
    %412 = vmatpush.msra.mxu0 %v411
    %v413 = vand.u32 %v309, 4294901760
    %v414 = vsub.f32 %v309, %v413
    %v415 = vand.u32 %v414, 4294901760
    %416 = vmatmul.f32.gmra.mxu0 %v415
    %v417 = vpop.f32.mrf.mxu0
    %v418 = vadd.f32 %v393, %v417
    %419 = vdwg.mxu0
    %420 = vmatpush.msra.mxu0 0.0
    %421 = vmatpush.msra.mxu0 0.0
    %422 = vmatpush.msra.mxu0 0.0
    %423 = vmatpush.msra.mxu0 0.0
    %424 = vmatpush.msra.mxu0 0.0
    %425 = vmatpush.msra.mxu0 0.0
    %426 = vmatpush.msra.mxu0 0.0
    %427 = vmatpush.msra.mxu0 0.0
    %428 = vmatpush.msra.mxu0 0.0
    %429 = vmatpush.msra.mxu0 0.0
    %430 = vmatpush.msra.mxu0 0.0
    %431 = vmatpush.msra.mxu0 0.0
    %432 = vmatpush.msra.mxu0 0.0
    %433 = vmatpush.msra.mxu0 0.0
    %v434 = vand.u32 %v129, 4294901760
    %v435 = vsub.f32 %v129, %v434
    %v436 = vand.u32 %v435, 4294901760
    %437 = vmatpush.msra.mxu0 %v436
    %v438 = vand.u32 %v127, 4294901760
    %v439 = vsub.f32 %v127, %v438
    %v440 = vand.u32 %v439, 4294901760
    %441 = vmatpush.msra.mxu0 %v440
    %v442 = vand.u32 %v309, 4294901760
    %443 = vmatmul.f32.gmra.mxu0 %v442
    %v444 = vpop.f32.mrf.mxu0
    %v445 = vadd.f32 %v418, %v444
    %446 = vdwg.mxu0
    %447 = vmatpush.msra.mxu0 0.0
    %448 = vmatpush.msra.mxu0 0.0
    %449 = vmatpush.msra.mxu0 0.0
    %450 = vmatpush.msra.mxu0 0.0
    %451 = vmatpush.msra.mxu0 0.0
    %452 = vmatpush.msra.mxu0 0.0
    %453 = vmatpush.msra.mxu0 0.0
    %454 = vmatpush.msra.mxu0 0.0
    %455 = vmatpush.msra.mxu0 0.0
    %456 = vmatpush.msra.mxu0 0.0
    %457 = vmatpush.msra.mxu0 0.0
    %458 = vmatpush.msra.mxu0 0.0
    %459 = vmatpush.msra.mxu0 0.0
    %460 = vmatpush.msra.mxu0 0.0
    %v461 = vand.u32 %v129, 4294901760
    %462 = vmatpush.msra.mxu0 %v461
    %v463 = vand.u32 %v127, 4294901760
    %464 = vmatpush.msra.mxu0 %v463
    %v465 = vand.u32 %v309, 4294901760
    %466 = vmatmul.f32.gmra.mxu0 %v465
    %v467 = vpop.f32.mrf.mxu0
    %v468 = vadd.f32 %v445, %v467
    %469 = vdwg.mxu0
    %v470 = vlog2.pop %v468
    %v471 = vmul.f32 %v470, 0.6931472
    %v472 = vadd.f32 %v471, %v117
    %v473 = vadd.f32 %v472, %v304
    %v474 = vsub.f32 %v133, %v473
    %v475 = vsel %vm301, %v474, -inf
    %476 = vmax.xlane.f32.xlu0 %v475
    %v477 = vpop.xlane.xlu0 %476
    %v478 = vsub.f32 %v474, %v477
    %v479 = vmul.f32 %v478, 1.442695
    %v480 = vpow.pop %v479
    %v482 = vsel %vm99, %v480, 0
    %484 = vmatpush.msra.mxu0 0.0
    %485 = vmatpush.msra.mxu0 0.0
    %486 = vmatpush.msra.mxu0 0.0
    %487 = vmatpush.msra.mxu0 0.0
    %488 = vmatpush.msra.mxu0 0.0
    %489 = vmatpush.msra.mxu0 0.0
    %490 = vmatpush.msra.mxu0 0.0
    %491 = vmatpush.msra.mxu0 0.0
    %492 = vmatpush.msra.mxu0 0.0
    %493 = vmatpush.msra.mxu0 0.0
    %494 = vmatpush.msra.mxu0 0.0
    %495 = vmatpush.msra.mxu0 0.0
    %496 = vmatpush.msra.mxu0 0.0
    %497 = vmatpush.msra.mxu0 0.0
    %v498 = vand.u32 %v123, 4294901760
    %499 = vmatpush.msra.mxu0 %v498
    %v500 = vand.u32 %v121, 4294901760
    %501 = vmatpush.msra.mxu0 %v500
    %v502 = vand.u32 %v482, 4294901760
    %v503 = vsub.f32 %v482, %v502
    %v504 = vand.u32 %v503, 4294901760
    %v505 = vsub.f32 %v503, %v504
    %v506 = vand.u32 %v505, 4294901760
    %507 = vmatmul.f32.gmra.mxu0 %v506
    %v508 = vpop.f32.mrf.mxu0
    %v509 = vadd.f32 0.0, %v508
    %510 = vdwg.mxu0
    %511 = vmatpush.msra.mxu0 0.0
    %512 = vmatpush.msra.mxu0 0.0
    %513 = vmatpush.msra.mxu0 0.0
    %514 = vmatpush.msra.mxu0 0.0
    %515 = vmatpush.msra.mxu0 0.0
    %516 = vmatpush.msra.mxu0 0.0
    %517 = vmatpush.msra.mxu0 0.0
    %518 = vmatpush.msra.mxu0 0.0
    %519 = vmatpush.msra.mxu0 0.0
    %520 = vmatpush.msra.mxu0 0.0
    %521 = vmatpush.msra.mxu0 0.0
    %522 = vmatpush.msra.mxu0 0.0
    %523 = vmatpush.msra.mxu0 0.0
    %524 = vmatpush.msra.mxu0 0.0
    %v525 = vand.u32 %v123, 4294901760
    %v526 = vsub.f32 %v123, %v525
    %v527 = vand.u32 %v526, 4294901760
    %v528 = vsub.f32 %v526, %v527
    %v529 = vand.u32 %v528, 4294901760
    %530 = vmatpush.msra.mxu0 %v529
    %v531 = vand.u32 %v121, 4294901760
    %v532 = vsub.f32 %v121, %v531
    %v533 = vand.u32 %v532, 4294901760
    %v534 = vsub.f32 %v532, %v533
    %v535 = vand.u32 %v534, 4294901760
    %536 = vmatpush.msra.mxu0 %v535
    %v537 = vand.u32 %v482, 4294901760
    %538 = vmatmul.f32.gmra.mxu0 %v537
    %v539 = vpop.f32.mrf.mxu0
    %v540 = vadd.f32 %v509, %v539
    %541 = vdwg.mxu0
    %542 = vmatpush.msra.mxu0 0.0
    %543 = vmatpush.msra.mxu0 0.0
    %544 = vmatpush.msra.mxu0 0.0
    %545 = vmatpush.msra.mxu0 0.0
    %546 = vmatpush.msra.mxu0 0.0
    %547 = vmatpush.msra.mxu0 0.0
    %548 = vmatpush.msra.mxu0 0.0
    %549 = vmatpush.msra.mxu0 0.0
    %550 = vmatpush.msra.mxu0 0.0
    %551 = vmatpush.msra.mxu0 0.0
    %552 = vmatpush.msra.mxu0 0.0
    %553 = vmatpush.msra.mxu0 0.0
    %554 = vmatpush.msra.mxu0 0.0
    %555 = vmatpush.msra.mxu0 0.0
    %v556 = vand.u32 %v123, 4294901760
    %v557 = vsub.f32 %v123, %v556
    %558 = vmatpush.msra.mxu0 %v557
    %v559 = vand.u32 %v121, 4294901760
    %v560 = vsub.f32 %v121, %v559
    %561 = vmatpush.msra.mxu0 %v560
    %v562 = vand.u32 %v482, 4294901760
    %v563 = vsub.f32 %v482, %v562
    %564 = vmatmul.f32.gmra.mxu0 %v563
    %v565 = vpop.f32.mrf.mxu0
    %v566 = vadd.f32 %v540, %v565
    %567 = vdwg.mxu0
    %568 = vmatpush.msra.mxu0 0.0
    %569 = vmatpush.msra.mxu0 0.0
    %570 = vmatpush.msra.mxu0 0.0
    %571 = vmatpush.msra.mxu0 0.0
    %572 = vmatpush.msra.mxu0 0.0
    %573 = vmatpush.msra.mxu0 0.0
    %574 = vmatpush.msra.mxu0 0.0
    %575 = vmatpush.msra.mxu0 0.0
    %576 = vmatpush.msra.mxu0 0.0
    %577 = vmatpush.msra.mxu0 0.0
    %578 = vmatpush.msra.mxu0 0.0
    %579 = vmatpush.msra.mxu0 0.0
    %580 = vmatpush.msra.mxu0 0.0
    %581 = vmatpush.msra.mxu0 0.0
    %v582 = vand.u32 %v123, 4294901760
    %583 = vmatpush.msra.mxu0 %v582
    %v584 = vand.u32 %v121, 4294901760
    %585 = vmatpush.msra.mxu0 %v584
    %v586 = vand.u32 %v482, 4294901760
    %v587 = vsub.f32 %v482, %v586
    %v588 = vand.u32 %v587, 4294901760
    %589 = vmatmul.f32.gmra.mxu0 %v588
    %v590 = vpop.f32.mrf.mxu0
    %v591 = vadd.f32 %v566, %v590
    %592 = vdwg.mxu0
    %593 = vmatpush.msra.mxu0 0.0
    %594 = vmatpush.msra.mxu0 0.0
    %595 = vmatpush.msra.mxu0 0.0
    %596 = vmatpush.msra.mxu0 0.0
    %597 = vmatpush.msra.mxu0 0.0
    %598 = vmatpush.msra.mxu0 0.0
    %599 = vmatpush.msra.mxu0 0.0
    %600 = vmatpush.msra.mxu0 0.0
    %601 = vmatpush.msra.mxu0 0.0
    %602 = vmatpush.msra.mxu0 0.0
    %603 = vmatpush.msra.mxu0 0.0
    %604 = vmatpush.msra.mxu0 0.0
    %605 = vmatpush.msra.mxu0 0.0
    %606 = vmatpush.msra.mxu0 0.0
    %v607 = vand.u32 %v123, 4294901760
    %v608 = vsub.f32 %v123, %v607
    %v609 = vand.u32 %v608, 4294901760
    %610 = vmatpush.msra.mxu0 %v609
    %v611 = vand.u32 %v121, 4294901760
    %v612 = vsub.f32 %v121, %v611
    %v613 = vand.u32 %v612, 4294901760
    %614 = vmatpush.msra.mxu0 %v613
    %v615 = vand.u32 %v482, 4294901760
    %616 = vmatmul.f32.gmra.mxu0 %v615
    %v617 = vpop.f32.mrf.mxu0
    %v618 = vadd.f32 %v591, %v617
    %619 = vdwg.mxu0
    %620 = vmatpush.msra.mxu0 0.0
    %621 = vmatpush.msra.mxu0 0.0
    %622 = vmatpush.msra.mxu0 0.0
    %623 = vmatpush.msra.mxu0 0.0
    %624 = vmatpush.msra.mxu0 0.0
    %625 = vmatpush.msra.mxu0 0.0
    %626 = vmatpush.msra.mxu0 0.0
    %627 = vmatpush.msra.mxu0 0.0
    %628 = vmatpush.msra.mxu0 0.0
    %629 = vmatpush.msra.mxu0 0.0
    %630 = vmatpush.msra.mxu0 0.0
    %631 = vmatpush.msra.mxu0 0.0
    %632 = vmatpush.msra.mxu0 0.0
    %633 = vmatpush.msra.mxu0 0.0
    %v634 = vand.u32 %v123, 4294901760
    %635 = vmatpush.msra.mxu0 %v634
    %v636 = vand.u32 %v121, 4294901760
    %637 = vmatpush.msra.mxu0 %v636
    %v638 = vand.u32 %v482, 4294901760
    %639 = vmatmul.f32.gmra.mxu0 %v638
    %v640 = vpop.f32.mrf.mxu0
    %v641 = vadd.f32 %v618, %v640
    %642 = vdwg.mxu0
    %v643 = vlog2.pop %v641
    %v644 = vmul.f32 %v643, 0.6931472
    %v645 = vadd.f32 %v644, %v108
    %v646 = vadd.f32 %v645, %v477
    %v647 = vsub.f32 %v131, %v646
    %v648 = vsel %vm301, %v647, -inf
    %649 = vmax.xlane.f32.xlu0 %v648
    %v650 = vpop.xlane.xlu0 %649
    %v651 = vsub.f32 %v647, %v650
    %v652 = vmul.f32 %v651, 1.442695
    %v653 = vpow.pop %v652
    %v655 = vsel %vm99, %v653, 0
    %657 = vmatpush.msra.mxu0 0.0
    %658 = vmatpush.msra.mxu0 0.0
    %659 = vmatpush.msra.mxu0 0.0
    %660 = vmatpush.msra.mxu0 0.0
    %661 = vmatpush.msra.mxu0 0.0
    %662 = vmatpush.msra.mxu0 0.0
    %663 = vmatpush.msra.mxu0 0.0
    %664 = vmatpush.msra.mxu0 0.0
    %665 = vmatpush.msra.mxu0 0.0
    %666 = vmatpush.msra.mxu0 0.0
    %667 = vmatpush.msra.mxu0 0.0
    %668 = vmatpush.msra.mxu0 0.0
    %669 = vmatpush.msra.mxu0 0.0
    %670 = vmatpush.msra.mxu0 0.0
    %v671 = vand.u32 %v129, 4294901760
    %672 = vmatpush.msra.mxu0 %v671
    %v673 = vand.u32 %v127, 4294901760
    %674 = vmatpush.msra.mxu0 %v673
    %v675 = vand.u32 %v655, 4294901760
    %v676 = vsub.f32 %v655, %v675
    %v677 = vand.u32 %v676, 4294901760
    %v678 = vsub.f32 %v676, %v677
    %v679 = vand.u32 %v678, 4294901760
    %680 = vmatmul.f32.gmra.mxu0 %v679
    %v681 = vpop.f32.mrf.mxu0
    %v682 = vadd.f32 0.0, %v681
    %683 = vdwg.mxu0
    %684 = vmatpush.msra.mxu0 0.0
    %685 = vmatpush.msra.mxu0 0.0
    %686 = vmatpush.msra.mxu0 0.0
    %687 = vmatpush.msra.mxu0 0.0
    %688 = vmatpush.msra.mxu0 0.0
    %689 = vmatpush.msra.mxu0 0.0
    %690 = vmatpush.msra.mxu0 0.0
    %691 = vmatpush.msra.mxu0 0.0
    %692 = vmatpush.msra.mxu0 0.0
    %693 = vmatpush.msra.mxu0 0.0
    %694 = vmatpush.msra.mxu0 0.0
    %695 = vmatpush.msra.mxu0 0.0
    %696 = vmatpush.msra.mxu0 0.0
    %697 = vmatpush.msra.mxu0 0.0
    %v698 = vand.u32 %v129, 4294901760
    %v699 = vsub.f32 %v129, %v698
    %v700 = vand.u32 %v699, 4294901760
    %v701 = vsub.f32 %v699, %v700
    %v702 = vand.u32 %v701, 4294901760
    %703 = vmatpush.msra.mxu0 %v702
    %v704 = vand.u32 %v127, 4294901760
    %v705 = vsub.f32 %v127, %v704
    %v706 = vand.u32 %v705, 4294901760
    %v707 = vsub.f32 %v705, %v706
    %v708 = vand.u32 %v707, 4294901760
    %709 = vmatpush.msra.mxu0 %v708
    %v710 = vand.u32 %v655, 4294901760
    %711 = vmatmul.f32.gmra.mxu0 %v710
    %v712 = vpop.f32.mrf.mxu0
    %v713 = vadd.f32 %v682, %v712
    %714 = vdwg.mxu0
    %715 = vmatpush.msra.mxu0 0.0
    %716 = vmatpush.msra.mxu0 0.0
    %717 = vmatpush.msra.mxu0 0.0
    %718 = vmatpush.msra.mxu0 0.0
    %719 = vmatpush.msra.mxu0 0.0
    %720 = vmatpush.msra.mxu0 0.0
    %721 = vmatpush.msra.mxu0 0.0
    %722 = vmatpush.msra.mxu0 0.0
    %723 = vmatpush.msra.mxu0 0.0
    %724 = vmatpush.msra.mxu0 0.0
    %725 = vmatpush.msra.mxu0 0.0
    %726 = vmatpush.msra.mxu0 0.0
    %727 = vmatpush.msra.mxu0 0.0
    %728 = vmatpush.msra.mxu0 0.0
    %v729 = vand.u32 %v129, 4294901760
    %v730 = vsub.f32 %v129, %v729
    %731 = vmatpush.msra.mxu0 %v730
    %v732 = vand.u32 %v127, 4294901760
    %v733 = vsub.f32 %v127, %v732
    %734 = vmatpush.msra.mxu0 %v733
    %v735 = vand.u32 %v655, 4294901760
    %v736 = vsub.f32 %v655, %v735
    %737 = vmatmul.f32.gmra.mxu0 %v736
    %v738 = vpop.f32.mrf.mxu0
    %v739 = vadd.f32 %v713, %v738
    %740 = vdwg.mxu0
    %741 = vmatpush.msra.mxu0 0.0
    %742 = vmatpush.msra.mxu0 0.0
    %743 = vmatpush.msra.mxu0 0.0
    %744 = vmatpush.msra.mxu0 0.0
    %745 = vmatpush.msra.mxu0 0.0
    %746 = vmatpush.msra.mxu0 0.0
    %747 = vmatpush.msra.mxu0 0.0
    %748 = vmatpush.msra.mxu0 0.0
    %749 = vmatpush.msra.mxu0 0.0
    %750 = vmatpush.msra.mxu0 0.0
    %751 = vmatpush.msra.mxu0 0.0
    %752 = vmatpush.msra.mxu0 0.0
    %753 = vmatpush.msra.mxu0 0.0
    %754 = vmatpush.msra.mxu0 0.0
    %v755 = vand.u32 %v129, 4294901760
    %756 = vmatpush.msra.mxu0 %v755
    %v757 = vand.u32 %v127, 4294901760
    %758 = vmatpush.msra.mxu0 %v757
    %v759 = vand.u32 %v655, 4294901760
    %v760 = vsub.f32 %v655, %v759
    %v761 = vand.u32 %v760, 4294901760
    %762 = vmatmul.f32.gmra.mxu0 %v761
    %v763 = vpop.f32.mrf.mxu0
    %v764 = vadd.f32 %v739, %v763
    %765 = vdwg.mxu0
    %766 = vmatpush.msra.mxu0 0.0
    %767 = vmatpush.msra.mxu0 0.0
    %768 = vmatpush.msra.mxu0 0.0
    %769 = vmatpush.msra.mxu0 0.0
    %770 = vmatpush.msra.mxu0 0.0
    %771 = vmatpush.msra.mxu0 0.0
    %772 = vmatpush.msra.mxu0 0.0
    %773 = vmatpush.msra.mxu0 0.0
    %774 = vmatpush.msra.mxu0 0.0
    %775 = vmatpush.msra.mxu0 0.0
    %776 = vmatpush.msra.mxu0 0.0
    %777 = vmatpush.msra.mxu0 0.0
    %778 = vmatpush.msra.mxu0 0.0
    %779 = vmatpush.msra.mxu0 0.0
    %v780 = vand.u32 %v129, 4294901760
    %v781 = vsub.f32 %v129, %v780
    %v782 = vand.u32 %v781, 4294901760
    %783 = vmatpush.msra.mxu0 %v782
    %v784 = vand.u32 %v127, 4294901760
    %v785 = vsub.f32 %v127, %v784
    %v786 = vand.u32 %v785, 4294901760
    %787 = vmatpush.msra.mxu0 %v786
    %v788 = vand.u32 %v655, 4294901760
    %789 = vmatmul.f32.gmra.mxu0 %v788
    %v790 = vpop.f32.mrf.mxu0
    %v791 = vadd.f32 %v764, %v790
    %792 = vdwg.mxu0
    %793 = vmatpush.msra.mxu0 0.0
    %794 = vmatpush.msra.mxu0 0.0
    %795 = vmatpush.msra.mxu0 0.0
    %796 = vmatpush.msra.mxu0 0.0
    %797 = vmatpush.msra.mxu0 0.0
    %798 = vmatpush.msra.mxu0 0.0
    %799 = vmatpush.msra.mxu0 0.0
    %800 = vmatpush.msra.mxu0 0.0
    %801 = vmatpush.msra.mxu0 0.0
    %802 = vmatpush.msra.mxu0 0.0
    %803 = vmatpush.msra.mxu0 0.0
    %804 = vmatpush.msra.mxu0 0.0
    %805 = vmatpush.msra.mxu0 0.0
    %806 = vmatpush.msra.mxu0 0.0
    %v807 = vand.u32 %v129, 4294901760
    %808 = vmatpush.msra.mxu0 %v807
    %v809 = vand.u32 %v127, 4294901760
    %810 = vmatpush.msra.mxu0 %v809
    %v811 = vand.u32 %v655, 4294901760
    %812 = vmatmul.f32.gmra.mxu0 %v811
    %v813 = vpop.f32.mrf.mxu0
    %v814 = vadd.f32 %v791, %v813
    %815 = vdwg.mxu0
    %v816 = vlog2.pop %v814
    %v817 = vmul.f32 %v816, 0.6931472
    %v818 = vadd.f32 %v817, %v117
    %v819 = vadd.f32 %v818, %v650
    %v820 = vsub.f32 %v133, %v819
    %v821 = vsel %vm301, %v820, -inf
    %822 = vmax.xlane.f32.xlu0 %v821
    %v823 = vpop.xlane.xlu0 %822
    %v824 = vsub.f32 %v820, %v823
    %v825 = vmul.f32 %v824, 1.442695
    %v826 = vpow.pop %v825
    %v828 = vsel %vm99, %v826, 0
    %830 = vmatpush.msra.mxu0 0.0
    %831 = vmatpush.msra.mxu0 0.0
    %832 = vmatpush.msra.mxu0 0.0
    %833 = vmatpush.msra.mxu0 0.0
    %834 = vmatpush.msra.mxu0 0.0
    %835 = vmatpush.msra.mxu0 0.0
    %836 = vmatpush.msra.mxu0 0.0
    %837 = vmatpush.msra.mxu0 0.0
    %838 = vmatpush.msra.mxu0 0.0
    %839 = vmatpush.msra.mxu0 0.0
    %840 = vmatpush.msra.mxu0 0.0
    %841 = vmatpush.msra.mxu0 0.0
    %842 = vmatpush.msra.mxu0 0.0
    %843 = vmatpush.msra.mxu0 0.0
    %v844 = vand.u32 %v123, 4294901760
    %845 = vmatpush.msra.mxu0 %v844
    %v846 = vand.u32 %v121, 4294901760
    %847 = vmatpush.msra.mxu0 %v846
    %v848 = vand.u32 %v828, 4294901760
    %v849 = vsub.f32 %v828, %v848
    %v850 = vand.u32 %v849, 4294901760
    %v851 = vsub.f32 %v849, %v850
    %v852 = vand.u32 %v851, 4294901760
    %853 = vmatmul.f32.gmra.mxu0 %v852
    %v854 = vpop.f32.mrf.mxu0
    %v855 = vadd.f32 0.0, %v854
    %856 = vdwg.mxu0
    %857 = vmatpush.msra.mxu0 0.0
    %858 = vmatpush.msra.mxu0 0.0
    %859 = vmatpush.msra.mxu0 0.0
    %860 = vmatpush.msra.mxu0 0.0
    %861 = vmatpush.msra.mxu0 0.0
    %862 = vmatpush.msra.mxu0 0.0
    %863 = vmatpush.msra.mxu0 0.0
    %864 = vmatpush.msra.mxu0 0.0
    %865 = vmatpush.msra.mxu0 0.0
    %866 = vmatpush.msra.mxu0 0.0
    %867 = vmatpush.msra.mxu0 0.0
    %868 = vmatpush.msra.mxu0 0.0
    %869 = vmatpush.msra.mxu0 0.0
    %870 = vmatpush.msra.mxu0 0.0
    %v871 = vand.u32 %v123, 4294901760
    %v872 = vsub.f32 %v123, %v871
    %v873 = vand.u32 %v872, 4294901760
    %v874 = vsub.f32 %v872, %v873
    %v875 = vand.u32 %v874, 4294901760
    %876 = vmatpush.msra.mxu0 %v875
    %v877 = vand.u32 %v121, 4294901760
    %v878 = vsub.f32 %v121, %v877
    %v879 = vand.u32 %v878, 4294901760
    %v880 = vsub.f32 %v878, %v879
    %v881 = vand.u32 %v880, 4294901760
    %882 = vmatpush.msra.mxu0 %v881
    %v883 = vand.u32 %v828, 4294901760
    %884 = vmatmul.f32.gmra.mxu0 %v883
    %v885 = vpop.f32.mrf.mxu0
    %v886 = vadd.f32 %v855, %v885
    %887 = vdwg.mxu0
    %888 = vmatpush.msra.mxu0 0.0
    %889 = vmatpush.msra.mxu0 0.0
    %890 = vmatpush.msra.mxu0 0.0
    %891 = vmatpush.msra.mxu0 0.0
    %892 = vmatpush.msra.mxu0 0.0
    %893 = vmatpush.msra.mxu0 0.0
    %894 = vmatpush.msra.mxu0 0.0
    %895 = vmatpush.msra.mxu0 0.0
    %896 = vmatpush.msra.mxu0 0.0
    %897 = vmatpush.msra.mxu0 0.0
    %898 = vmatpush.msra.mxu0 0.0
    %899 = vmatpush.msra.mxu0 0.0
    %900 = vmatpush.msra.mxu0 0.0
    %901 = vmatpush.msra.mxu0 0.0
    %v902 = vand.u32 %v123, 4294901760
    %v903 = vsub.f32 %v123, %v902
    %904 = vmatpush.msra.mxu0 %v903
    %v905 = vand.u32 %v121, 4294901760
    %v906 = vsub.f32 %v121, %v905
    %907 = vmatpush.msra.mxu0 %v906
    %v908 = vand.u32 %v828, 4294901760
    %v909 = vsub.f32 %v828, %v908
    %910 = vmatmul.f32.gmra.mxu0 %v909
    %v911 = vpop.f32.mrf.mxu0
    %v912 = vadd.f32 %v886, %v911
    %913 = vdwg.mxu0
    %914 = vmatpush.msra.mxu0 0.0
    %915 = vmatpush.msra.mxu0 0.0
    %916 = vmatpush.msra.mxu0 0.0
    %917 = vmatpush.msra.mxu0 0.0
    %918 = vmatpush.msra.mxu0 0.0
    %919 = vmatpush.msra.mxu0 0.0
    %920 = vmatpush.msra.mxu0 0.0
    %921 = vmatpush.msra.mxu0 0.0
    %922 = vmatpush.msra.mxu0 0.0
    %923 = vmatpush.msra.mxu0 0.0
    %924 = vmatpush.msra.mxu0 0.0
    %925 = vmatpush.msra.mxu0 0.0
    %926 = vmatpush.msra.mxu0 0.0
    %927 = vmatpush.msra.mxu0 0.0
    %v928 = vand.u32 %v123, 4294901760
    %929 = vmatpush.msra.mxu0 %v928
    %v930 = vand.u32 %v121, 4294901760
    %931 = vmatpush.msra.mxu0 %v930
    %v932 = vand.u32 %v828, 4294901760
    %v933 = vsub.f32 %v828, %v932
    %v934 = vand.u32 %v933, 4294901760
    %935 = vmatmul.f32.gmra.mxu0 %v934
    %v936 = vpop.f32.mrf.mxu0
    %v937 = vadd.f32 %v912, %v936
    %938 = vdwg.mxu0
    %939 = vmatpush.msra.mxu0 0.0
    %940 = vmatpush.msra.mxu0 0.0
    %941 = vmatpush.msra.mxu0 0.0
    %942 = vmatpush.msra.mxu0 0.0
    %943 = vmatpush.msra.mxu0 0.0
    %944 = vmatpush.msra.mxu0 0.0
    %945 = vmatpush.msra.mxu0 0.0
    %946 = vmatpush.msra.mxu0 0.0
    %947 = vmatpush.msra.mxu0 0.0
    %948 = vmatpush.msra.mxu0 0.0
    %949 = vmatpush.msra.mxu0 0.0
    %950 = vmatpush.msra.mxu0 0.0
    %951 = vmatpush.msra.mxu0 0.0
    %952 = vmatpush.msra.mxu0 0.0
    %v953 = vand.u32 %v123, 4294901760
    %v954 = vsub.f32 %v123, %v953
    %v955 = vand.u32 %v954, 4294901760
    %956 = vmatpush.msra.mxu0 %v955
    %v957 = vand.u32 %v121, 4294901760
    %v958 = vsub.f32 %v121, %v957
    %v959 = vand.u32 %v958, 4294901760
    %960 = vmatpush.msra.mxu0 %v959
    %v961 = vand.u32 %v828, 4294901760
    %962 = vmatmul.f32.gmra.mxu0 %v961
    %v963 = vpop.f32.mrf.mxu0
    %v964 = vadd.f32 %v937, %v963
    %965 = vdwg.mxu0
    %966 = vmatpush.msra.mxu0 0.0
    %967 = vmatpush.msra.mxu0 0.0
    %968 = vmatpush.msra.mxu0 0.0
    %969 = vmatpush.msra.mxu0 0.0
    %970 = vmatpush.msra.mxu0 0.0
    %971 = vmatpush.msra.mxu0 0.0
    %972 = vmatpush.msra.mxu0 0.0
    %973 = vmatpush.msra.mxu0 0.0
    %974 = vmatpush.msra.mxu0 0.0
    %975 = vmatpush.msra.mxu0 0.0
    %976 = vmatpush.msra.mxu0 0.0
    %977 = vmatpush.msra.mxu0 0.0
    %978 = vmatpush.msra.mxu0 0.0
    %979 = vmatpush.msra.mxu0 0.0
    %v980 = vand.u32 %v123, 4294901760
    %981 = vmatpush.msra.mxu0 %v980
    %v982 = vand.u32 %v121, 4294901760
    %983 = vmatpush.msra.mxu0 %v982
    %v984 = vand.u32 %v828, 4294901760
    %985 = vmatmul.f32.gmra.mxu0 %v984
    %v986 = vpop.f32.mrf.mxu0
    %v987 = vadd.f32 %v964, %v986
    %988 = vdwg.mxu0
    %v989 = vlog2.pop %v987
    %v990 = vmul.f32 %v989, 0.6931472
    %v991 = vadd.f32 %v990, %v108
    %v992 = vadd.f32 %v991, %v823
    %v993 = vsub.f32 %v131, %v992
    %v994 = vsel %vm301, %v993, -inf
    %995 = vmax.xlane.f32.xlu0 %v994
    %v996 = vpop.xlane.xlu0 %995
    %v997 = vsub.f32 %v993, %v996
    %v998 = vmul.f32 %v997, 1.442695
    %v999 = vpow.pop %v998
    %v1001 = vsel %vm99, %v999, 0
    %1003 = vmatpush.msra.mxu0 0.0
    %1004 = vmatpush.msra.mxu0 0.0
    %1005 = vmatpush.msra.mxu0 0.0
    %1006 = vmatpush.msra.mxu0 0.0
    %1007 = vmatpush.msra.mxu0 0.0
    %1008 = vmatpush.msra.mxu0 0.0
    %1009 = vmatpush.msra.mxu0 0.0
    %1010 = vmatpush.msra.mxu0 0.0
    %1011 = vmatpush.msra.mxu0 0.0
    %1012 = vmatpush.msra.mxu0 0.0
    %1013 = vmatpush.msra.mxu0 0.0
    %1014 = vmatpush.msra.mxu0 0.0
    %1015 = vmatpush.msra.mxu0 0.0
    %1016 = vmatpush.msra.mxu0 0.0
    %v1017 = vand.u32 %v129, 4294901760
    %1018 = vmatpush.msra.mxu0 %v1017
    %v1019 = vand.u32 %v127, 4294901760
    %1020 = vmatpush.msra.mxu0 %v1019
    %v1021 = vand.u32 %v1001, 4294901760
    %v1022 = vsub.f32 %v1001, %v1021
    %v1023 = vand.u32 %v1022, 4294901760
    %v1024 = vsub.f32 %v1022, %v1023
    %v1025 = vand.u32 %v1024, 4294901760
    %1026 = vmatmul.f32.gmra.mxu0 %v1025
    %v1027 = vpop.f32.mrf.mxu0
    %v1028 = vadd.f32 0.0, %v1027
    %1029 = vdwg.mxu0
    %1030 = vmatpush.msra.mxu0 0.0
    %1031 = vmatpush.msra.mxu0 0.0
    %1032 = vmatpush.msra.mxu0 0.0
    %1033 = vmatpush.msra.mxu0 0.0
    %1034 = vmatpush.msra.mxu0 0.0
    %1035 = vmatpush.msra.mxu0 0.0
    %1036 = vmatpush.msra.mxu0 0.0
    %1037 = vmatpush.msra.mxu0 0.0
    %1038 = vmatpush.msra.mxu0 0.0
    %1039 = vmatpush.msra.mxu0 0.0
    %1040 = vmatpush.msra.mxu0 0.0
    %1041 = vmatpush.msra.mxu0 0.0
    %1042 = vmatpush.msra.mxu0 0.0
    %1043 = vmatpush.msra.mxu0 0.0
    %v1044 = vand.u32 %v129, 4294901760
    %v1045 = vsub.f32 %v129, %v1044
    %v1046 = vand.u32 %v1045, 4294901760
    %v1047 = vsub.f32 %v1045, %v1046
    %v1048 = vand.u32 %v1047, 4294901760
    %1049 = vmatpush.msra.mxu0 %v1048
    %v1050 = vand.u32 %v127, 4294901760
    %v1051 = vsub.f32 %v127, %v1050
    %v1052 = vand.u32 %v1051, 4294901760
    %v1053 = vsub.f32 %v1051, %v1052
    %v1054 = vand.u32 %v1053, 4294901760
    %1055 = vmatpush.msra.mxu0 %v1054
    %v1056 = vand.u32 %v1001, 4294901760
    %1057 = vmatmul.f32.gmra.mxu0 %v1056
    %v1058 = vpop.f32.mrf.mxu0
    %v1059 = vadd.f32 %v1028, %v1058
    %1060 = vdwg.mxu0
    %1061 = vmatpush.msra.mxu0 0.0
    %1062 = vmatpush.msra.mxu0 0.0
    %1063 = vmatpush.msra.mxu0 0.0
    %1064 = vmatpush.msra.mxu0 0.0
    %1065 = vmatpush.msra.mxu0 0.0
    %1066 = vmatpush.msra.mxu0 0.0
    %1067 = vmatpush.msra.mxu0 0.0
    %1068 = vmatpush.msra.mxu0 0.0
    %1069 = vmatpush.msra.mxu0 0.0
    %1070 = vmatpush.msra.mxu0 0.0
    %1071 = vmatpush.msra.mxu0 0.0
    %1072 = vmatpush.msra.mxu0 0.0
    %1073 = vmatpush.msra.mxu0 0.0
    %1074 = vmatpush.msra.mxu0 0.0
    %v1075 = vand.u32 %v129, 4294901760
    %v1076 = vsub.f32 %v129, %v1075
    %1077 = vmatpush.msra.mxu0 %v1076
    %v1078 = vand.u32 %v127, 4294901760
    %v1079 = vsub.f32 %v127, %v1078
    %1080 = vmatpush.msra.mxu0 %v1079
    %v1081 = vand.u32 %v1001, 4294901760
    %v1082 = vsub.f32 %v1001, %v1081
    %1083 = vmatmul.f32.gmra.mxu0 %v1082
    %v1084 = vpop.f32.mrf.mxu0
    %v1085 = vadd.f32 %v1059, %v1084
    %1086 = vdwg.mxu0
    %1087 = vmatpush.msra.mxu0 0.0
    %1088 = vmatpush.msra.mxu0 0.0
    %1089 = vmatpush.msra.mxu0 0.0
    %1090 = vmatpush.msra.mxu0 0.0
    %1091 = vmatpush.msra.mxu0 0.0
    %1092 = vmatpush.msra.mxu0 0.0
    %1093 = vmatpush.msra.mxu0 0.0
    %1094 = vmatpush.msra.mxu0 0.0
    %1095 = vmatpush.msra.mxu0 0.0
    %1096 = vmatpush.msra.mxu0 0.0
    %1097 = vmatpush.msra.mxu0 0.0
    %1098 = vmatpush.msra.mxu0 0.0
    %1099 = vmatpush.msra.mxu0 0.0
    %1100 = vmatpush.msra.mxu0 0.0
    %v1101 = vand.u32 %v129, 4294901760
    %1102 = vmatpush.msra.mxu0 %v1101
    %v1103 = vand.u32 %v127, 4294901760
    %1104 = vmatpush.msra.mxu0 %v1103
    %v1105 = vand.u32 %v1001, 4294901760
    %v1106 = vsub.f32 %v1001, %v1105
    %v1107 = vand.u32 %v1106, 4294901760
    %1108 = vmatmul.f32.gmra.mxu0 %v1107
    %v1109 = vpop.f32.mrf.mxu0
    %v1110 = vadd.f32 %v1085, %v1109
    %1111 = vdwg.mxu0
    %1112 = vmatpush.msra.mxu0 0.0
    %1113 = vmatpush.msra.mxu0 0.0
    %1114 = vmatpush.msra.mxu0 0.0
    %1115 = vmatpush.msra.mxu0 0.0
    %1116 = vmatpush.msra.mxu0 0.0
    %1117 = vmatpush.msra.mxu0 0.0
    %1118 = vmatpush.msra.mxu0 0.0
    %1119 = vmatpush.msra.mxu0 0.0
    %1120 = vmatpush.msra.mxu0 0.0
    %1121 = vmatpush.msra.mxu0 0.0
    %1122 = vmatpush.msra.mxu0 0.0
    %1123 = vmatpush.msra.mxu0 0.0
    %1124 = vmatpush.msra.mxu0 0.0
    %1125 = vmatpush.msra.mxu0 0.0
    %v1126 = vand.u32 %v129, 4294901760
    %v1127 = vsub.f32 %v129, %v1126
    %v1128 = vand.u32 %v1127, 4294901760
    %1129 = vmatpush.msra.mxu0 %v1128
    %v1130 = vand.u32 %v127, 4294901760
    %v1131 = vsub.f32 %v127, %v1130
    %v1132 = vand.u32 %v1131, 4294901760
    %1133 = vmatpush.msra.mxu0 %v1132
    %v1134 = vand.u32 %v1001, 4294901760
    %1135 = vmatmul.f32.gmra.mxu0 %v1134
    %v1136 = vpop.f32.mrf.mxu0
    %v1137 = vadd.f32 %v1110, %v1136
    %1138 = vdwg.mxu0
    %1139 = vmatpush.msra.mxu0 0.0
    %1140 = vmatpush.msra.mxu0 0.0
    %1141 = vmatpush.msra.mxu0 0.0
    %1142 = vmatpush.msra.mxu0 0.0
    %1143 = vmatpush.msra.mxu0 0.0
    %1144 = vmatpush.msra.mxu0 0.0
    %1145 = vmatpush.msra.mxu0 0.0
    %1146 = vmatpush.msra.mxu0 0.0
    %1147 = vmatpush.msra.mxu0 0.0
    %1148 = vmatpush.msra.mxu0 0.0
    %1149 = vmatpush.msra.mxu0 0.0
    %1150 = vmatpush.msra.mxu0 0.0
    %1151 = vmatpush.msra.mxu0 0.0
    %1152 = vmatpush.msra.mxu0 0.0
    %v1153 = vand.u32 %v129, 4294901760
    %1154 = vmatpush.msra.mxu0 %v1153
    %v1155 = vand.u32 %v127, 4294901760
    %1156 = vmatpush.msra.mxu0 %v1155
    %v1157 = vand.u32 %v1001, 4294901760
    %1158 = vmatmul.f32.gmra.mxu0 %v1157
    %v1159 = vpop.f32.mrf.mxu0
    %v1160 = vadd.f32 %v1137, %v1159
    %1161 = vdwg.mxu0
    %v1162 = vlog2.pop %v1160
    %v1163 = vmul.f32 %v1162, 0.6931472
    %v1164 = vadd.f32 %v1163, %v117
    %v1165 = vadd.f32 %v1164, %v996
    %v1166 = vsub.f32 %v133, %v1165
    %v1167 = vsel %vm301, %v1166, -inf
    %1168 = vmax.xlane.f32.xlu0 %v1167
    %v1169 = vpop.xlane.xlu0 %1168
    %v1170 = vsub.f32 %v1166, %v1169
    %v1171 = vmul.f32 %v1170, 1.442695
    %v1172 = vpow.pop %v1171
    %v1174 = vsel %vm99, %v1172, 0
    %1176 = vmatpush.msra.mxu0 0.0
    %1177 = vmatpush.msra.mxu0 0.0
    %1178 = vmatpush.msra.mxu0 0.0
    %1179 = vmatpush.msra.mxu0 0.0
    %1180 = vmatpush.msra.mxu0 0.0
    %1181 = vmatpush.msra.mxu0 0.0
    %1182 = vmatpush.msra.mxu0 0.0
    %1183 = vmatpush.msra.mxu0 0.0
    %1184 = vmatpush.msra.mxu0 0.0
    %1185 = vmatpush.msra.mxu0 0.0
    %1186 = vmatpush.msra.mxu0 0.0
    %1187 = vmatpush.msra.mxu0 0.0
    %1188 = vmatpush.msra.mxu0 0.0
    %1189 = vmatpush.msra.mxu0 0.0
    %v1190 = vand.u32 %v123, 4294901760
    %1191 = vmatpush.msra.mxu0 %v1190
    %v1192 = vand.u32 %v121, 4294901760
    %1193 = vmatpush.msra.mxu0 %v1192
    %v1194 = vand.u32 %v1174, 4294901760
    %v1195 = vsub.f32 %v1174, %v1194
    %v1196 = vand.u32 %v1195, 4294901760
    %v1197 = vsub.f32 %v1195, %v1196
    %v1198 = vand.u32 %v1197, 4294901760
    %1199 = vmatmul.f32.gmra.mxu0 %v1198
    %v1200 = vpop.f32.mrf.mxu0
    %v1201 = vadd.f32 0.0, %v1200
    %1202 = vdwg.mxu0
    %1203 = vmatpush.msra.mxu0 0.0
    %1204 = vmatpush.msra.mxu0 0.0
    %1205 = vmatpush.msra.mxu0 0.0
    %1206 = vmatpush.msra.mxu0 0.0
    %1207 = vmatpush.msra.mxu0 0.0
    %1208 = vmatpush.msra.mxu0 0.0
    %1209 = vmatpush.msra.mxu0 0.0
    %1210 = vmatpush.msra.mxu0 0.0
    %1211 = vmatpush.msra.mxu0 0.0
    %1212 = vmatpush.msra.mxu0 0.0
    %1213 = vmatpush.msra.mxu0 0.0
    %1214 = vmatpush.msra.mxu0 0.0
    %1215 = vmatpush.msra.mxu0 0.0
    %1216 = vmatpush.msra.mxu0 0.0
    %v1217 = vand.u32 %v123, 4294901760
    %v1218 = vsub.f32 %v123, %v1217
    %v1219 = vand.u32 %v1218, 4294901760
    %v1220 = vsub.f32 %v1218, %v1219
    %v1221 = vand.u32 %v1220, 4294901760
    %1222 = vmatpush.msra.mxu0 %v1221
    %v1223 = vand.u32 %v121, 4294901760
    %v1224 = vsub.f32 %v121, %v1223
    %v1225 = vand.u32 %v1224, 4294901760
    %v1226 = vsub.f32 %v1224, %v1225
    %v1227 = vand.u32 %v1226, 4294901760
    %1228 = vmatpush.msra.mxu0 %v1227
    %v1229 = vand.u32 %v1174, 4294901760
    %1230 = vmatmul.f32.gmra.mxu0 %v1229
    %v1231 = vpop.f32.mrf.mxu0
    %v1232 = vadd.f32 %v1201, %v1231
    %1233 = vdwg.mxu0
    %1234 = vmatpush.msra.mxu0 0.0
    %1235 = vmatpush.msra.mxu0 0.0
    %1236 = vmatpush.msra.mxu0 0.0
    %1237 = vmatpush.msra.mxu0 0.0
    %1238 = vmatpush.msra.mxu0 0.0
    %1239 = vmatpush.msra.mxu0 0.0
    %1240 = vmatpush.msra.mxu0 0.0
    %1241 = vmatpush.msra.mxu0 0.0
    %1242 = vmatpush.msra.mxu0 0.0
    %1243 = vmatpush.msra.mxu0 0.0
    %1244 = vmatpush.msra.mxu0 0.0
    %1245 = vmatpush.msra.mxu0 0.0
    %1246 = vmatpush.msra.mxu0 0.0
    %1247 = vmatpush.msra.mxu0 0.0
    %v1248 = vand.u32 %v123, 4294901760
    %v1249 = vsub.f32 %v123, %v1248
    %1250 = vmatpush.msra.mxu0 %v1249
    %v1251 = vand.u32 %v121, 4294901760
    %v1252 = vsub.f32 %v121, %v1251
    %1253 = vmatpush.msra.mxu0 %v1252
    %v1254 = vand.u32 %v1174, 4294901760
    %v1255 = vsub.f32 %v1174, %v1254
    %1256 = vmatmul.f32.gmra.mxu0 %v1255
    %v1257 = vpop.f32.mrf.mxu0
    %v1258 = vadd.f32 %v1232, %v1257
    %1259 = vdwg.mxu0
    %1260 = vmatpush.msra.mxu0 0.0
    %1261 = vmatpush.msra.mxu0 0.0
    %1262 = vmatpush.msra.mxu0 0.0
    %1263 = vmatpush.msra.mxu0 0.0
    %1264 = vmatpush.msra.mxu0 0.0
    %1265 = vmatpush.msra.mxu0 0.0
    %1266 = vmatpush.msra.mxu0 0.0
    %1267 = vmatpush.msra.mxu0 0.0
    %1268 = vmatpush.msra.mxu0 0.0
    %1269 = vmatpush.msra.mxu0 0.0
    %1270 = vmatpush.msra.mxu0 0.0
    %1271 = vmatpush.msra.mxu0 0.0
    %1272 = vmatpush.msra.mxu0 0.0
    %1273 = vmatpush.msra.mxu0 0.0
    %v1274 = vand.u32 %v123, 4294901760
    %1275 = vmatpush.msra.mxu0 %v1274
    %v1276 = vand.u32 %v121, 4294901760
    %1277 = vmatpush.msra.mxu0 %v1276
    %v1278 = vand.u32 %v1174, 4294901760
    %v1279 = vsub.f32 %v1174, %v1278
    %v1280 = vand.u32 %v1279, 4294901760
    %1281 = vmatmul.f32.gmra.mxu0 %v1280
    %v1282 = vpop.f32.mrf.mxu0
    %v1283 = vadd.f32 %v1258, %v1282
    %1284 = vdwg.mxu0
    %1285 = vmatpush.msra.mxu0 0.0
    %1286 = vmatpush.msra.mxu0 0.0
    %1287 = vmatpush.msra.mxu0 0.0
    %1288 = vmatpush.msra.mxu0 0.0
    %1289 = vmatpush.msra.mxu0 0.0
    %1290 = vmatpush.msra.mxu0 0.0
    %1291 = vmatpush.msra.mxu0 0.0
    %1292 = vmatpush.msra.mxu0 0.0
    %1293 = vmatpush.msra.mxu0 0.0
    %1294 = vmatpush.msra.mxu0 0.0
    %1295 = vmatpush.msra.mxu0 0.0
    %1296 = vmatpush.msra.mxu0 0.0
    %1297 = vmatpush.msra.mxu0 0.0
    %1298 = vmatpush.msra.mxu0 0.0
    %v1299 = vand.u32 %v123, 4294901760
    %v1300 = vsub.f32 %v123, %v1299
    %v1301 = vand.u32 %v1300, 4294901760
    %1302 = vmatpush.msra.mxu0 %v1301
    %v1303 = vand.u32 %v121, 4294901760
    %v1304 = vsub.f32 %v121, %v1303
    %v1305 = vand.u32 %v1304, 4294901760
    %1306 = vmatpush.msra.mxu0 %v1305
    %v1307 = vand.u32 %v1174, 4294901760
    %1308 = vmatmul.f32.gmra.mxu0 %v1307
    %v1309 = vpop.f32.mrf.mxu0
    %v1310 = vadd.f32 %v1283, %v1309
    %1311 = vdwg.mxu0
    %1312 = vmatpush.msra.mxu0 0.0
    %1313 = vmatpush.msra.mxu0 0.0
    %1314 = vmatpush.msra.mxu0 0.0
    %1315 = vmatpush.msra.mxu0 0.0
    %1316 = vmatpush.msra.mxu0 0.0
    %1317 = vmatpush.msra.mxu0 0.0
    %1318 = vmatpush.msra.mxu0 0.0
    %1319 = vmatpush.msra.mxu0 0.0
    %1320 = vmatpush.msra.mxu0 0.0
    %1321 = vmatpush.msra.mxu0 0.0
    %1322 = vmatpush.msra.mxu0 0.0
    %1323 = vmatpush.msra.mxu0 0.0
    %1324 = vmatpush.msra.mxu0 0.0
    %1325 = vmatpush.msra.mxu0 0.0
    %v1326 = vand.u32 %v123, 4294901760
    %1327 = vmatpush.msra.mxu0 %v1326
    %v1328 = vand.u32 %v121, 4294901760
    %1329 = vmatpush.msra.mxu0 %v1328
    %v1330 = vand.u32 %v1174, 4294901760
    %1331 = vmatmul.f32.gmra.mxu0 %v1330
    %v1332 = vpop.f32.mrf.mxu0
    %v1333 = vadd.f32 %v1310, %v1332
    %1334 = vdwg.mxu0
    %v1335 = vlog2.pop %v1333
    %v1336 = vmul.f32 %v1335, 0.6931472
    %v1337 = vadd.f32 %v1336, %v108
    %v1338 = vadd.f32 %v1337, %v1169
    %v1339 = vsub.f32 %v131, %v1338
    %v1340 = vsel %vm301, %v1339, -inf
    %1341 = vmax.xlane.f32.xlu0 %v1340
    %v1342 = vpop.xlane.xlu0 %1341
    %v1343 = vsub.f32 %v1339, %v1342
    %v1344 = vmul.f32 %v1343, 1.442695
    %v1345 = vpow.pop %v1344
    %v1347 = vsel %vm99, %v1345, 0
    %1349 = vmatpush.msra.mxu0 0.0
    %1350 = vmatpush.msra.mxu0 0.0
    %1351 = vmatpush.msra.mxu0 0.0
    %1352 = vmatpush.msra.mxu0 0.0
    %1353 = vmatpush.msra.mxu0 0.0
    %1354 = vmatpush.msra.mxu0 0.0
    %1355 = vmatpush.msra.mxu0 0.0
    %1356 = vmatpush.msra.mxu0 0.0
    %1357 = vmatpush.msra.mxu0 0.0
    %1358 = vmatpush.msra.mxu0 0.0
    %1359 = vmatpush.msra.mxu0 0.0
    %1360 = vmatpush.msra.mxu0 0.0
    %1361 = vmatpush.msra.mxu0 0.0
    %1362 = vmatpush.msra.mxu0 0.0
    %v1363 = vand.u32 %v129, 4294901760
    %1364 = vmatpush.msra.mxu0 %v1363
    %v1365 = vand.u32 %v127, 4294901760
    %1366 = vmatpush.msra.mxu0 %v1365
    %v1367 = vand.u32 %v1347, 4294901760
    %v1368 = vsub.f32 %v1347, %v1367
    %v1369 = vand.u32 %v1368, 4294901760
    %v1370 = vsub.f32 %v1368, %v1369
    %v1371 = vand.u32 %v1370, 4294901760
    %1372 = vmatmul.f32.gmra.mxu0 %v1371
    %v1373 = vpop.f32.mrf.mxu0
    %v1374 = vadd.f32 0.0, %v1373
    %1375 = vdwg.mxu0
    %1376 = vmatpush.msra.mxu0 0.0
    %1377 = vmatpush.msra.mxu0 0.0
    %1378 = vmatpush.msra.mxu0 0.0
    %1379 = vmatpush.msra.mxu0 0.0
    %1380 = vmatpush.msra.mxu0 0.0
    %1381 = vmatpush.msra.mxu0 0.0
    %1382 = vmatpush.msra.mxu0 0.0
    %1383 = vmatpush.msra.mxu0 0.0
    %1384 = vmatpush.msra.mxu0 0.0
    %1385 = vmatpush.msra.mxu0 0.0
    %1386 = vmatpush.msra.mxu0 0.0
    %1387 = vmatpush.msra.mxu0 0.0
    %1388 = vmatpush.msra.mxu0 0.0
    %1389 = vmatpush.msra.mxu0 0.0
    %v1390 = vand.u32 %v129, 4294901760
    %v1391 = vsub.f32 %v129, %v1390
    %v1392 = vand.u32 %v1391, 4294901760
    %v1393 = vsub.f32 %v1391, %v1392
    %v1394 = vand.u32 %v1393, 4294901760
    %1395 = vmatpush.msra.mxu0 %v1394
    %v1396 = vand.u32 %v127, 4294901760
    %v1397 = vsub.f32 %v127, %v1396
    %v1398 = vand.u32 %v1397, 4294901760
    %v1399 = vsub.f32 %v1397, %v1398
    %v1400 = vand.u32 %v1399, 4294901760
    %1401 = vmatpush.msra.mxu0 %v1400
    %v1402 = vand.u32 %v1347, 4294901760
    %1403 = vmatmul.f32.gmra.mxu0 %v1402
    %v1404 = vpop.f32.mrf.mxu0
    %v1405 = vadd.f32 %v1374, %v1404
    %1406 = vdwg.mxu0
    %1407 = vmatpush.msra.mxu0 0.0
    %1408 = vmatpush.msra.mxu0 0.0
    %1409 = vmatpush.msra.mxu0 0.0
    %1410 = vmatpush.msra.mxu0 0.0
    %1411 = vmatpush.msra.mxu0 0.0
    %1412 = vmatpush.msra.mxu0 0.0
    %1413 = vmatpush.msra.mxu0 0.0
    %1414 = vmatpush.msra.mxu0 0.0
    %1415 = vmatpush.msra.mxu0 0.0
    %1416 = vmatpush.msra.mxu0 0.0
    %1417 = vmatpush.msra.mxu0 0.0
    %1418 = vmatpush.msra.mxu0 0.0
    %1419 = vmatpush.msra.mxu0 0.0
    %1420 = vmatpush.msra.mxu0 0.0
    %v1421 = vand.u32 %v129, 4294901760
    %v1422 = vsub.f32 %v129, %v1421
    %1423 = vmatpush.msra.mxu0 %v1422
    %v1424 = vand.u32 %v127, 4294901760
    %v1425 = vsub.f32 %v127, %v1424
    %1426 = vmatpush.msra.mxu0 %v1425
    %v1427 = vand.u32 %v1347, 4294901760
    %v1428 = vsub.f32 %v1347, %v1427
    %1429 = vmatmul.f32.gmra.mxu0 %v1428
    %v1430 = vpop.f32.mrf.mxu0
    %v1431 = vadd.f32 %v1405, %v1430
    %1432 = vdwg.mxu0
    %1433 = vmatpush.msra.mxu0 0.0
    %1434 = vmatpush.msra.mxu0 0.0
    %1435 = vmatpush.msra.mxu0 0.0
    %1436 = vmatpush.msra.mxu0 0.0
    %1437 = vmatpush.msra.mxu0 0.0
    %1438 = vmatpush.msra.mxu0 0.0
    %1439 = vmatpush.msra.mxu0 0.0
    %1440 = vmatpush.msra.mxu0 0.0
    %1441 = vmatpush.msra.mxu0 0.0
    %1442 = vmatpush.msra.mxu0 0.0
    %1443 = vmatpush.msra.mxu0 0.0
    %1444 = vmatpush.msra.mxu0 0.0
    %1445 = vmatpush.msra.mxu0 0.0
    %1446 = vmatpush.msra.mxu0 0.0
    %v1447 = vand.u32 %v129, 4294901760
    %1448 = vmatpush.msra.mxu0 %v1447
    %v1449 = vand.u32 %v127, 4294901760
    %1450 = vmatpush.msra.mxu0 %v1449
    %v1451 = vand.u32 %v1347, 4294901760
    %v1452 = vsub.f32 %v1347, %v1451
    %v1453 = vand.u32 %v1452, 4294901760
    %1454 = vmatmul.f32.gmra.mxu0 %v1453
    %v1455 = vpop.f32.mrf.mxu0
    %v1456 = vadd.f32 %v1431, %v1455
    %1457 = vdwg.mxu0
    %1458 = vmatpush.msra.mxu0 0.0
    %1459 = vmatpush.msra.mxu0 0.0
    %1460 = vmatpush.msra.mxu0 0.0
    %1461 = vmatpush.msra.mxu0 0.0
    %1462 = vmatpush.msra.mxu0 0.0
    %1463 = vmatpush.msra.mxu0 0.0
    %1464 = vmatpush.msra.mxu0 0.0
    %1465 = vmatpush.msra.mxu0 0.0
    %1466 = vmatpush.msra.mxu0 0.0
    %1467 = vmatpush.msra.mxu0 0.0
    %1468 = vmatpush.msra.mxu0 0.0
    %1469 = vmatpush.msra.mxu0 0.0
    %1470 = vmatpush.msra.mxu0 0.0
    %1471 = vmatpush.msra.mxu0 0.0
    %v1472 = vand.u32 %v129, 4294901760
    %v1473 = vsub.f32 %v129, %v1472
    %v1474 = vand.u32 %v1473, 4294901760
    %1475 = vmatpush.msra.mxu0 %v1474
    %v1476 = vand.u32 %v127, 4294901760
    %v1477 = vsub.f32 %v127, %v1476
    %v1478 = vand.u32 %v1477, 4294901760
    %1479 = vmatpush.msra.mxu0 %v1478
    %v1480 = vand.u32 %v1347, 4294901760
    %1481 = vmatmul.f32.gmra.mxu0 %v1480
    %v1482 = vpop.f32.mrf.mxu0
    %v1483 = vadd.f32 %v1456, %v1482
    %1484 = vdwg.mxu0
    %1485 = vmatpush.msra.mxu0 0.0
    %1486 = vmatpush.msra.mxu0 0.0
    %1487 = vmatpush.msra.mxu0 0.0
    %1488 = vmatpush.msra.mxu0 0.0
    %1489 = vmatpush.msra.mxu0 0.0
    %1490 = vmatpush.msra.mxu0 0.0
    %1491 = vmatpush.msra.mxu0 0.0
    %1492 = vmatpush.msra.mxu0 0.0
    %1493 = vmatpush.msra.mxu0 0.0
    %1494 = vmatpush.msra.mxu0 0.0
    %1495 = vmatpush.msra.mxu0 0.0
    %1496 = vmatpush.msra.mxu0 0.0
    %1497 = vmatpush.msra.mxu0 0.0
    %1498 = vmatpush.msra.mxu0 0.0
    %v1499 = vand.u32 %v129, 4294901760
    %1500 = vmatpush.msra.mxu0 %v1499
    %v1501 = vand.u32 %v127, 4294901760
    %1502 = vmatpush.msra.mxu0 %v1501
    %v1503 = vand.u32 %v1347, 4294901760
    %1504 = vmatmul.f32.gmra.mxu0 %v1503
    %v1505 = vpop.f32.mrf.mxu0
    %v1506 = vadd.f32 %v1483, %v1505
    %1507 = vdwg.mxu0
    %v1508 = vlog2.pop %v1506
    %v1509 = vmul.f32 %v1508, 0.6931472
    %v1510 = vadd.f32 %v1509, %v117
    %v1511 = vadd.f32 %v1510, %v1342
    %v1512 = vsub.f32 %v133, %v1511
    %v1513 = vsel %vm301, %v1512, -inf
    %1514 = vmax.xlane.f32.xlu0 %v1513
    %v1515 = vpop.xlane.xlu0 %1514
    %v1516 = vsub.f32 %v1512, %v1515
    %v1517 = vmul.f32 %v1516, 1.442695
    %v1518 = vpow.pop %v1517
    %v1520 = vsel %vm99, %v1518, 0
    %1522 = vmatpush.msra.mxu0 0.0
    %1523 = vmatpush.msra.mxu0 0.0
    %1524 = vmatpush.msra.mxu0 0.0
    %1525 = vmatpush.msra.mxu0 0.0
    %1526 = vmatpush.msra.mxu0 0.0
    %1527 = vmatpush.msra.mxu0 0.0
    %1528 = vmatpush.msra.mxu0 0.0
    %1529 = vmatpush.msra.mxu0 0.0
    %1530 = vmatpush.msra.mxu0 0.0
    %1531 = vmatpush.msra.mxu0 0.0
    %1532 = vmatpush.msra.mxu0 0.0
    %1533 = vmatpush.msra.mxu0 0.0
    %1534 = vmatpush.msra.mxu0 0.0
    %1535 = vmatpush.msra.mxu0 0.0
    %v1536 = vand.u32 %v123, 4294901760
    %1537 = vmatpush.msra.mxu0 %v1536
    %v1538 = vand.u32 %v121, 4294901760
    %1539 = vmatpush.msra.mxu0 %v1538
    %v1540 = vand.u32 %v1520, 4294901760
    %v1541 = vsub.f32 %v1520, %v1540
    %v1542 = vand.u32 %v1541, 4294901760
    %v1543 = vsub.f32 %v1541, %v1542
    %v1544 = vand.u32 %v1543, 4294901760
    %1545 = vmatmul.f32.gmra.mxu0 %v1544
    %v1546 = vpop.f32.mrf.mxu0
    %v1547 = vadd.f32 0.0, %v1546
    %1548 = vdwg.mxu0
    %1549 = vmatpush.msra.mxu0 0.0
    %1550 = vmatpush.msra.mxu0 0.0
    %1551 = vmatpush.msra.mxu0 0.0
    %1552 = vmatpush.msra.mxu0 0.0
    %1553 = vmatpush.msra.mxu0 0.0
    %1554 = vmatpush.msra.mxu0 0.0
    %1555 = vmatpush.msra.mxu0 0.0
    %1556 = vmatpush.msra.mxu0 0.0
    %1557 = vmatpush.msra.mxu0 0.0
    %1558 = vmatpush.msra.mxu0 0.0
    %1559 = vmatpush.msra.mxu0 0.0
    %1560 = vmatpush.msra.mxu0 0.0
    %1561 = vmatpush.msra.mxu0 0.0
    %1562 = vmatpush.msra.mxu0 0.0
    %v1563 = vand.u32 %v123, 4294901760
    %v1564 = vsub.f32 %v123, %v1563
    %v1565 = vand.u32 %v1564, 4294901760
    %v1566 = vsub.f32 %v1564, %v1565
    %v1567 = vand.u32 %v1566, 4294901760
    %1568 = vmatpush.msra.mxu0 %v1567
    %v1569 = vand.u32 %v121, 4294901760
    %v1570 = vsub.f32 %v121, %v1569
    %v1571 = vand.u32 %v1570, 4294901760
    %v1572 = vsub.f32 %v1570, %v1571
    %v1573 = vand.u32 %v1572, 4294901760
    %1574 = vmatpush.msra.mxu0 %v1573
    %v1575 = vand.u32 %v1520, 4294901760
    %1576 = vmatmul.f32.gmra.mxu0 %v1575
    %v1577 = vpop.f32.mrf.mxu0
    %v1578 = vadd.f32 %v1547, %v1577
    %1579 = vdwg.mxu0
    %1580 = vmatpush.msra.mxu0 0.0
    %1581 = vmatpush.msra.mxu0 0.0
    %1582 = vmatpush.msra.mxu0 0.0
    %1583 = vmatpush.msra.mxu0 0.0
    %1584 = vmatpush.msra.mxu0 0.0
    %1585 = vmatpush.msra.mxu0 0.0
    %1586 = vmatpush.msra.mxu0 0.0
    %1587 = vmatpush.msra.mxu0 0.0
    %1588 = vmatpush.msra.mxu0 0.0
    %1589 = vmatpush.msra.mxu0 0.0
    %1590 = vmatpush.msra.mxu0 0.0
    %1591 = vmatpush.msra.mxu0 0.0
    %1592 = vmatpush.msra.mxu0 0.0
    %1593 = vmatpush.msra.mxu0 0.0
    %v1594 = vand.u32 %v123, 4294901760
    %v1595 = vsub.f32 %v123, %v1594
    %1596 = vmatpush.msra.mxu0 %v1595
    %v1597 = vand.u32 %v121, 4294901760
    %v1598 = vsub.f32 %v121, %v1597
    %1599 = vmatpush.msra.mxu0 %v1598
    %v1600 = vand.u32 %v1520, 4294901760
    %v1601 = vsub.f32 %v1520, %v1600
    %1602 = vmatmul.f32.gmra.mxu0 %v1601
    %v1603 = vpop.f32.mrf.mxu0
    %v1604 = vadd.f32 %v1578, %v1603
    %1605 = vdwg.mxu0
    %1606 = vmatpush.msra.mxu0 0.0
    %1607 = vmatpush.msra.mxu0 0.0
    %1608 = vmatpush.msra.mxu0 0.0
    %1609 = vmatpush.msra.mxu0 0.0
    %1610 = vmatpush.msra.mxu0 0.0
    %1611 = vmatpush.msra.mxu0 0.0
    %1612 = vmatpush.msra.mxu0 0.0
    %1613 = vmatpush.msra.mxu0 0.0
    %1614 = vmatpush.msra.mxu0 0.0
    %1615 = vmatpush.msra.mxu0 0.0
    %1616 = vmatpush.msra.mxu0 0.0
    %1617 = vmatpush.msra.mxu0 0.0
    %1618 = vmatpush.msra.mxu0 0.0
    %1619 = vmatpush.msra.mxu0 0.0
    %v1620 = vand.u32 %v123, 4294901760
    %1621 = vmatpush.msra.mxu0 %v1620
    %v1622 = vand.u32 %v121, 4294901760
    %1623 = vmatpush.msra.mxu0 %v1622
    %v1624 = vand.u32 %v1520, 4294901760
    %v1625 = vsub.f32 %v1520, %v1624
    %v1626 = vand.u32 %v1625, 4294901760
    %1627 = vmatmul.f32.gmra.mxu0 %v1626
    %v1628 = vpop.f32.mrf.mxu0
    %v1629 = vadd.f32 %v1604, %v1628
    %1630 = vdwg.mxu0
    %1631 = vmatpush.msra.mxu0 0.0
    %1632 = vmatpush.msra.mxu0 0.0
    %1633 = vmatpush.msra.mxu0 0.0
    %1634 = vmatpush.msra.mxu0 0.0
    %1635 = vmatpush.msra.mxu0 0.0
    %1636 = vmatpush.msra.mxu0 0.0
    %1637 = vmatpush.msra.mxu0 0.0
    %1638 = vmatpush.msra.mxu0 0.0
    %1639 = vmatpush.msra.mxu0 0.0
    %1640 = vmatpush.msra.mxu0 0.0
    %1641 = vmatpush.msra.mxu0 0.0
    %1642 = vmatpush.msra.mxu0 0.0
    %1643 = vmatpush.msra.mxu0 0.0
    %1644 = vmatpush.msra.mxu0 0.0
    %v1645 = vand.u32 %v123, 4294901760
    %v1646 = vsub.f32 %v123, %v1645
    %v1647 = vand.u32 %v1646, 4294901760
    %1648 = vmatpush.msra.mxu0 %v1647
    %v1649 = vand.u32 %v121, 4294901760
    %v1650 = vsub.f32 %v121, %v1649
    %v1651 = vand.u32 %v1650, 4294901760
    %1652 = vmatpush.msra.mxu0 %v1651
    %v1653 = vand.u32 %v1520, 4294901760
    %1654 = vmatmul.f32.gmra.mxu0 %v1653
    %v1655 = vpop.f32.mrf.mxu0
    %v1656 = vadd.f32 %v1629, %v1655
    %1657 = vdwg.mxu0
    %1658 = vmatpush.msra.mxu0 0.0
    %1659 = vmatpush.msra.mxu0 0.0
    %1660 = vmatpush.msra.mxu0 0.0
    %1661 = vmatpush.msra.mxu0 0.0
    %1662 = vmatpush.msra.mxu0 0.0
    %1663 = vmatpush.msra.mxu0 0.0
    %1664 = vmatpush.msra.mxu0 0.0
    %1665 = vmatpush.msra.mxu0 0.0
    %1666 = vmatpush.msra.mxu0 0.0
    %1667 = vmatpush.msra.mxu0 0.0
    %1668 = vmatpush.msra.mxu0 0.0
    %1669 = vmatpush.msra.mxu0 0.0
    %1670 = vmatpush.msra.mxu0 0.0
    %1671 = vmatpush.msra.mxu0 0.0
    %v1672 = vand.u32 %v123, 4294901760
    %1673 = vmatpush.msra.mxu0 %v1672
    %v1674 = vand.u32 %v121, 4294901760
    %1675 = vmatpush.msra.mxu0 %v1674
    %v1676 = vand.u32 %v1520, 4294901760
    %1677 = vmatmul.f32.gmra.mxu0 %v1676
    %v1678 = vpop.f32.mrf.mxu0
    %v1679 = vadd.f32 %v1656, %v1678
    %1680 = vdwg.mxu0
    %v1681 = vlog2.pop %v1679
    %v1682 = vmul.f32 %v1681, 0.6931472
    %v1683 = vadd.f32 %v1682, %v108
    %v1684 = vadd.f32 %v1683, %v1515
    %v1685 = vsub.f32 %v131, %v1684
    %v1686 = vsel %vm301, %v1685, -inf
    %1687 = vmax.xlane.f32.xlu0 %v1686
    %v1688 = vpop.xlane.xlu0 %1687
    %v1689 = vsub.f32 %v1685, %v1688
    %v1690 = vmul.f32 %v1689, 1.442695
    %v1691 = vpow.pop %v1690
    %v1693 = vsel %vm99, %v1691, 0
    %1695 = vmatpush.msra.mxu0 0.0
    %1696 = vmatpush.msra.mxu0 0.0
    %1697 = vmatpush.msra.mxu0 0.0
    %1698 = vmatpush.msra.mxu0 0.0
    %1699 = vmatpush.msra.mxu0 0.0
    %1700 = vmatpush.msra.mxu0 0.0
    %1701 = vmatpush.msra.mxu0 0.0
    %1702 = vmatpush.msra.mxu0 0.0
    %1703 = vmatpush.msra.mxu0 0.0
    %1704 = vmatpush.msra.mxu0 0.0
    %1705 = vmatpush.msra.mxu0 0.0
    %1706 = vmatpush.msra.mxu0 0.0
    %1707 = vmatpush.msra.mxu0 0.0
    %1708 = vmatpush.msra.mxu0 0.0
    %v1709 = vand.u32 %v129, 4294901760
    %1710 = vmatpush.msra.mxu0 %v1709
    %v1711 = vand.u32 %v127, 4294901760
    %1712 = vmatpush.msra.mxu0 %v1711
    %v1713 = vand.u32 %v1693, 4294901760
    %v1714 = vsub.f32 %v1693, %v1713
    %v1715 = vand.u32 %v1714, 4294901760
    %v1716 = vsub.f32 %v1714, %v1715
    %v1717 = vand.u32 %v1716, 4294901760
    %1718 = vmatmul.f32.gmra.mxu0 %v1717
    %v1719 = vpop.f32.mrf.mxu0
    %v1720 = vadd.f32 0.0, %v1719
    %1721 = vdwg.mxu0
    %1722 = vmatpush.msra.mxu0 0.0
    %1723 = vmatpush.msra.mxu0 0.0
    %1724 = vmatpush.msra.mxu0 0.0
    %1725 = vmatpush.msra.mxu0 0.0
    %1726 = vmatpush.msra.mxu0 0.0
    %1727 = vmatpush.msra.mxu0 0.0
    %1728 = vmatpush.msra.mxu0 0.0
    %1729 = vmatpush.msra.mxu0 0.0
    %1730 = vmatpush.msra.mxu0 0.0
    %1731 = vmatpush.msra.mxu0 0.0
    %1732 = vmatpush.msra.mxu0 0.0
    %1733 = vmatpush.msra.mxu0 0.0
    %1734 = vmatpush.msra.mxu0 0.0
    %1735 = vmatpush.msra.mxu0 0.0
    %v1736 = vand.u32 %v129, 4294901760
    %v1737 = vsub.f32 %v129, %v1736
    %v1738 = vand.u32 %v1737, 4294901760
    %v1739 = vsub.f32 %v1737, %v1738
    %v1740 = vand.u32 %v1739, 4294901760
    %1741 = vmatpush.msra.mxu0 %v1740
    %v1742 = vand.u32 %v127, 4294901760
    %v1743 = vsub.f32 %v127, %v1742
    %v1744 = vand.u32 %v1743, 4294901760
    %v1745 = vsub.f32 %v1743, %v1744
    %v1746 = vand.u32 %v1745, 4294901760
    %1747 = vmatpush.msra.mxu0 %v1746
    %v1748 = vand.u32 %v1693, 4294901760
    %1749 = vmatmul.f32.gmra.mxu0 %v1748
    %v1750 = vpop.f32.mrf.mxu0
    %v1751 = vadd.f32 %v1720, %v1750
    %1752 = vdwg.mxu0
    %1753 = vmatpush.msra.mxu0 0.0
    %1754 = vmatpush.msra.mxu0 0.0
    %1755 = vmatpush.msra.mxu0 0.0
    %1756 = vmatpush.msra.mxu0 0.0
    %1757 = vmatpush.msra.mxu0 0.0
    %1758 = vmatpush.msra.mxu0 0.0
    %1759 = vmatpush.msra.mxu0 0.0
    %1760 = vmatpush.msra.mxu0 0.0
    %1761 = vmatpush.msra.mxu0 0.0
    %1762 = vmatpush.msra.mxu0 0.0
    %1763 = vmatpush.msra.mxu0 0.0
    %1764 = vmatpush.msra.mxu0 0.0
    %1765 = vmatpush.msra.mxu0 0.0
    %1766 = vmatpush.msra.mxu0 0.0
    %v1767 = vand.u32 %v129, 4294901760
    %v1768 = vsub.f32 %v129, %v1767
    %1769 = vmatpush.msra.mxu0 %v1768
    %v1770 = vand.u32 %v127, 4294901760
    %v1771 = vsub.f32 %v127, %v1770
    %1772 = vmatpush.msra.mxu0 %v1771
    %v1773 = vand.u32 %v1693, 4294901760
    %v1774 = vsub.f32 %v1693, %v1773
    %1775 = vmatmul.f32.gmra.mxu0 %v1774
    %v1776 = vpop.f32.mrf.mxu0
    %v1777 = vadd.f32 %v1751, %v1776
    %1778 = vdwg.mxu0
    %1779 = vmatpush.msra.mxu0 0.0
    %1780 = vmatpush.msra.mxu0 0.0
    %1781 = vmatpush.msra.mxu0 0.0
    %1782 = vmatpush.msra.mxu0 0.0
    %1783 = vmatpush.msra.mxu0 0.0
    %1784 = vmatpush.msra.mxu0 0.0
    %1785 = vmatpush.msra.mxu0 0.0
    %1786 = vmatpush.msra.mxu0 0.0
    %1787 = vmatpush.msra.mxu0 0.0
    %1788 = vmatpush.msra.mxu0 0.0
    %1789 = vmatpush.msra.mxu0 0.0
    %1790 = vmatpush.msra.mxu0 0.0
    %1791 = vmatpush.msra.mxu0 0.0
    %1792 = vmatpush.msra.mxu0 0.0
    %v1793 = vand.u32 %v129, 4294901760
    %1794 = vmatpush.msra.mxu0 %v1793
    %v1795 = vand.u32 %v127, 4294901760
    %1796 = vmatpush.msra.mxu0 %v1795
    %v1797 = vand.u32 %v1693, 4294901760
    %v1798 = vsub.f32 %v1693, %v1797
    %v1799 = vand.u32 %v1798, 4294901760
    %1800 = vmatmul.f32.gmra.mxu0 %v1799
    %v1801 = vpop.f32.mrf.mxu0
    %v1802 = vadd.f32 %v1777, %v1801
    %1803 = vdwg.mxu0
    %1804 = vmatpush.msra.mxu0 0.0
    %1805 = vmatpush.msra.mxu0 0.0
    %1806 = vmatpush.msra.mxu0 0.0
    %1807 = vmatpush.msra.mxu0 0.0
    %1808 = vmatpush.msra.mxu0 0.0
    %1809 = vmatpush.msra.mxu0 0.0
    %1810 = vmatpush.msra.mxu0 0.0
    %1811 = vmatpush.msra.mxu0 0.0
    %1812 = vmatpush.msra.mxu0 0.0
    %1813 = vmatpush.msra.mxu0 0.0
    %1814 = vmatpush.msra.mxu0 0.0
    %1815 = vmatpush.msra.mxu0 0.0
    %1816 = vmatpush.msra.mxu0 0.0
    %1817 = vmatpush.msra.mxu0 0.0
    %v1818 = vand.u32 %v129, 4294901760
    %v1819 = vsub.f32 %v129, %v1818
    %v1820 = vand.u32 %v1819, 4294901760
    %1821 = vmatpush.msra.mxu0 %v1820
    %v1822 = vand.u32 %v127, 4294901760
    %v1823 = vsub.f32 %v127, %v1822
    %v1824 = vand.u32 %v1823, 4294901760
    %1825 = vmatpush.msra.mxu0 %v1824
    %v1826 = vand.u32 %v1693, 4294901760
    %1827 = vmatmul.f32.gmra.mxu0 %v1826
    %v1828 = vpop.f32.mrf.mxu0
    %v1829 = vadd.f32 %v1802, %v1828
    %1830 = vdwg.mxu0
    %1831 = vmatpush.msra.mxu0 0.0
    %1832 = vmatpush.msra.mxu0 0.0
    %1833 = vmatpush.msra.mxu0 0.0
    %1834 = vmatpush.msra.mxu0 0.0
    %1835 = vmatpush.msra.mxu0 0.0
    %1836 = vmatpush.msra.mxu0 0.0
    %1837 = vmatpush.msra.mxu0 0.0
    %1838 = vmatpush.msra.mxu0 0.0
    %1839 = vmatpush.msra.mxu0 0.0
    %1840 = vmatpush.msra.mxu0 0.0
    %1841 = vmatpush.msra.mxu0 0.0
    %1842 = vmatpush.msra.mxu0 0.0
    %1843 = vmatpush.msra.mxu0 0.0
    %1844 = vmatpush.msra.mxu0 0.0
    %v1845 = vand.u32 %v129, 4294901760
    %1846 = vmatpush.msra.mxu0 %v1845
    %v1847 = vand.u32 %v127, 4294901760
    %1848 = vmatpush.msra.mxu0 %v1847
    %v1849 = vand.u32 %v1693, 4294901760
    %1850 = vmatmul.f32.gmra.mxu0 %v1849
    %v1851 = vpop.f32.mrf.mxu0
    %v1852 = vadd.f32 %v1829, %v1851
    %1853 = vdwg.mxu0
    %v1854 = vlog2.pop %v1852
    %v1855 = vmul.f32 %v1854, 0.6931472
    %v1856 = vadd.f32 %v1855, %v117
    %v1857 = vadd.f32 %v1856, %v1688
    %v1858 = vsub.f32 %v133, %v1857
    %v1859 = vsel %vm301, %v1858, -inf
    %1860 = vmax.xlane.f32.xlu0 %v1859
    %v1861 = vpop.xlane.xlu0 %1860
    %v1862 = vsub.f32 %v1858, %v1861
    %v1863 = vmul.f32 %v1862, 1.442695
    %v1864 = vpow.pop %v1863
    %v1866 = vsel %vm99, %v1864, 0
    %1868 = vmatpush.msra.mxu0 0.0
    %1869 = vmatpush.msra.mxu0 0.0
    %1870 = vmatpush.msra.mxu0 0.0
    %1871 = vmatpush.msra.mxu0 0.0
    %1872 = vmatpush.msra.mxu0 0.0
    %1873 = vmatpush.msra.mxu0 0.0
    %1874 = vmatpush.msra.mxu0 0.0
    %1875 = vmatpush.msra.mxu0 0.0
    %1876 = vmatpush.msra.mxu0 0.0
    %1877 = vmatpush.msra.mxu0 0.0
    %1878 = vmatpush.msra.mxu0 0.0
    %1879 = vmatpush.msra.mxu0 0.0
    %1880 = vmatpush.msra.mxu0 0.0
    %1881 = vmatpush.msra.mxu0 0.0
    %v1882 = vand.u32 %v123, 4294901760
    %1883 = vmatpush.msra.mxu0 %v1882
    %v1884 = vand.u32 %v121, 4294901760
    %1885 = vmatpush.msra.mxu0 %v1884
    %v1886 = vand.u32 %v1866, 4294901760
    %v1887 = vsub.f32 %v1866, %v1886
    %v1888 = vand.u32 %v1887, 4294901760
    %v1889 = vsub.f32 %v1887, %v1888
    %v1890 = vand.u32 %v1889, 4294901760
    %1891 = vmatmul.f32.gmra.mxu0 %v1890
    %v1892 = vpop.f32.mrf.mxu0
    %v1893 = vadd.f32 0.0, %v1892
    %1894 = vdwg.mxu0
    %1895 = vmatpush.msra.mxu0 0.0
    %1896 = vmatpush.msra.mxu0 0.0
    %1897 = vmatpush.msra.mxu0 0.0
    %1898 = vmatpush.msra.mxu0 0.0
    %1899 = vmatpush.msra.mxu0 0.0
    %1900 = vmatpush.msra.mxu0 0.0
    %1901 = vmatpush.msra.mxu0 0.0
    %1902 = vmatpush.msra.mxu0 0.0
    %1903 = vmatpush.msra.mxu0 0.0
    %1904 = vmatpush.msra.mxu0 0.0
    %1905 = vmatpush.msra.mxu0 0.0
    %1906 = vmatpush.msra.mxu0 0.0
    %1907 = vmatpush.msra.mxu0 0.0
    %1908 = vmatpush.msra.mxu0 0.0
    %v1909 = vand.u32 %v123, 4294901760
    %v1910 = vsub.f32 %v123, %v1909
    %v1911 = vand.u32 %v1910, 4294901760
    %v1912 = vsub.f32 %v1910, %v1911
    %v1913 = vand.u32 %v1912, 4294901760
    %1914 = vmatpush.msra.mxu0 %v1913
    %v1915 = vand.u32 %v121, 4294901760
    %v1916 = vsub.f32 %v121, %v1915
    %v1917 = vand.u32 %v1916, 4294901760
    %v1918 = vsub.f32 %v1916, %v1917
    %v1919 = vand.u32 %v1918, 4294901760
    %1920 = vmatpush.msra.mxu0 %v1919
    %v1921 = vand.u32 %v1866, 4294901760
    %1922 = vmatmul.f32.gmra.mxu0 %v1921
    %v1923 = vpop.f32.mrf.mxu0
    %v1924 = vadd.f32 %v1893, %v1923
    %1925 = vdwg.mxu0
    %1926 = vmatpush.msra.mxu0 0.0
    %1927 = vmatpush.msra.mxu0 0.0
    %1928 = vmatpush.msra.mxu0 0.0
    %1929 = vmatpush.msra.mxu0 0.0
    %1930 = vmatpush.msra.mxu0 0.0
    %1931 = vmatpush.msra.mxu0 0.0
    %1932 = vmatpush.msra.mxu0 0.0
    %1933 = vmatpush.msra.mxu0 0.0
    %1934 = vmatpush.msra.mxu0 0.0
    %1935 = vmatpush.msra.mxu0 0.0
    %1936 = vmatpush.msra.mxu0 0.0
    %1937 = vmatpush.msra.mxu0 0.0
    %1938 = vmatpush.msra.mxu0 0.0
    %1939 = vmatpush.msra.mxu0 0.0
    %v1940 = vand.u32 %v123, 4294901760
    %v1941 = vsub.f32 %v123, %v1940
    %1942 = vmatpush.msra.mxu0 %v1941
    %v1943 = vand.u32 %v121, 4294901760
    %v1944 = vsub.f32 %v121, %v1943
    %1945 = vmatpush.msra.mxu0 %v1944
    %v1946 = vand.u32 %v1866, 4294901760
    %v1947 = vsub.f32 %v1866, %v1946
    %1948 = vmatmul.f32.gmra.mxu0 %v1947
    %v1949 = vpop.f32.mrf.mxu0
    %v1950 = vadd.f32 %v1924, %v1949
    %1951 = vdwg.mxu0
    %1952 = vmatpush.msra.mxu0 0.0
    %1953 = vmatpush.msra.mxu0 0.0
    %1954 = vmatpush.msra.mxu0 0.0
    %1955 = vmatpush.msra.mxu0 0.0
    %1956 = vmatpush.msra.mxu0 0.0
    %1957 = vmatpush.msra.mxu0 0.0
    %1958 = vmatpush.msra.mxu0 0.0
    %1959 = vmatpush.msra.mxu0 0.0
    %1960 = vmatpush.msra.mxu0 0.0
    %1961 = vmatpush.msra.mxu0 0.0
    %1962 = vmatpush.msra.mxu0 0.0
    %1963 = vmatpush.msra.mxu0 0.0
    %1964 = vmatpush.msra.mxu0 0.0
    %1965 = vmatpush.msra.mxu0 0.0
    %v1966 = vand.u32 %v123, 4294901760
    %1967 = vmatpush.msra.mxu0 %v1966
    %v1968 = vand.u32 %v121, 4294901760
    %1969 = vmatpush.msra.mxu0 %v1968
    %v1970 = vand.u32 %v1866, 4294901760
    %v1971 = vsub.f32 %v1866, %v1970
    %v1972 = vand.u32 %v1971, 4294901760
    %1973 = vmatmul.f32.gmra.mxu0 %v1972
    %v1974 = vpop.f32.mrf.mxu0
    %v1975 = vadd.f32 %v1950, %v1974
    %1976 = vdwg.mxu0
    %1977 = vmatpush.msra.mxu0 0.0
    %1978 = vmatpush.msra.mxu0 0.0
    %1979 = vmatpush.msra.mxu0 0.0
    %1980 = vmatpush.msra.mxu0 0.0
    %1981 = vmatpush.msra.mxu0 0.0
    %1982 = vmatpush.msra.mxu0 0.0
    %1983 = vmatpush.msra.mxu0 0.0
    %1984 = vmatpush.msra.mxu0 0.0
    %1985 = vmatpush.msra.mxu0 0.0
    %1986 = vmatpush.msra.mxu0 0.0
    %1987 = vmatpush.msra.mxu0 0.0
    %1988 = vmatpush.msra.mxu0 0.0
    %1989 = vmatpush.msra.mxu0 0.0
    %1990 = vmatpush.msra.mxu0 0.0
    %v1991 = vand.u32 %v123, 4294901760
    %v1992 = vsub.f32 %v123, %v1991
    %v1993 = vand.u32 %v1992, 4294901760
    %1994 = vmatpush.msra.mxu0 %v1993
    %v1995 = vand.u32 %v121, 4294901760
    %v1996 = vsub.f32 %v121, %v1995
    %v1997 = vand.u32 %v1996, 4294901760
    %1998 = vmatpush.msra.mxu0 %v1997
    %v1999 = vand.u32 %v1866, 4294901760
    %2000 = vmatmul.f32.gmra.mxu0 %v1999
    %v2001 = vpop.f32.mrf.mxu0
    %v2002 = vadd.f32 %v1975, %v2001
    %2003 = vdwg.mxu0
    %2004 = vmatpush.msra.mxu0 0.0
    %2005 = vmatpush.msra.mxu0 0.0
    %2006 = vmatpush.msra.mxu0 0.0
    %2007 = vmatpush.msra.mxu0 0.0
    %2008 = vmatpush.msra.mxu0 0.0
    %2009 = vmatpush.msra.mxu0 0.0
    %2010 = vmatpush.msra.mxu0 0.0
    %2011 = vmatpush.msra.mxu0 0.0
    %2012 = vmatpush.msra.mxu0 0.0
    %2013 = vmatpush.msra.mxu0 0.0
    %2014 = vmatpush.msra.mxu0 0.0
    %2015 = vmatpush.msra.mxu0 0.0
    %2016 = vmatpush.msra.mxu0 0.0
    %2017 = vmatpush.msra.mxu0 0.0
    %v2018 = vand.u32 %v123, 4294901760
    %2019 = vmatpush.msra.mxu0 %v2018
    %v2020 = vand.u32 %v121, 4294901760
    %2021 = vmatpush.msra.mxu0 %v2020
    %v2022 = vand.u32 %v1866, 4294901760
    %2023 = vmatmul.f32.gmra.mxu0 %v2022
    %v2024 = vpop.f32.mrf.mxu0
    %v2025 = vadd.f32 %v2002, %v2024
    %2026 = vdwg.mxu0
    %v2027 = vlog2.pop %v2025
    %v2028 = vmul.f32 %v2027, 0.6931472
    %v2029 = vadd.f32 %v2028, %v108
    %v2030 = vadd.f32 %v2029, %v1861
    %v2031 = vsub.f32 %v131, %v2030
    %v2032 = vsel %vm301, %v2031, -inf
    %2033 = vmax.xlane.f32.xlu0 %v2032
    %v2034 = vpop.xlane.xlu0 %2033
    %v2035 = vsub.f32 %v2031, %v2034
    %v2036 = vmul.f32 %v2035, 1.442695
    %v2037 = vpow.pop %v2036
    %v2039 = vsel %vm99, %v2037, 0
    %2041 = vmatpush.msra.mxu0 0.0
    %2042 = vmatpush.msra.mxu0 0.0
    %2043 = vmatpush.msra.mxu0 0.0
    %2044 = vmatpush.msra.mxu0 0.0
    %2045 = vmatpush.msra.mxu0 0.0
    %2046 = vmatpush.msra.mxu0 0.0
    %2047 = vmatpush.msra.mxu0 0.0
    %2048 = vmatpush.msra.mxu0 0.0
    %2049 = vmatpush.msra.mxu0 0.0
    %2050 = vmatpush.msra.mxu0 0.0
    %2051 = vmatpush.msra.mxu0 0.0
    %2052 = vmatpush.msra.mxu0 0.0
    %2053 = vmatpush.msra.mxu0 0.0
    %2054 = vmatpush.msra.mxu0 0.0
    %v2055 = vand.u32 %v129, 4294901760
    %2056 = vmatpush.msra.mxu0 %v2055
    %v2057 = vand.u32 %v127, 4294901760
    %2058 = vmatpush.msra.mxu0 %v2057
    %v2059 = vand.u32 %v2039, 4294901760
    %v2060 = vsub.f32 %v2039, %v2059
    %v2061 = vand.u32 %v2060, 4294901760
    %v2062 = vsub.f32 %v2060, %v2061
    %v2063 = vand.u32 %v2062, 4294901760
    %2064 = vmatmul.f32.gmra.mxu0 %v2063
    %v2065 = vpop.f32.mrf.mxu0
    %v2066 = vadd.f32 0.0, %v2065
    %2067 = vdwg.mxu0
    %2068 = vmatpush.msra.mxu0 0.0
    %2069 = vmatpush.msra.mxu0 0.0
    %2070 = vmatpush.msra.mxu0 0.0
    %2071 = vmatpush.msra.mxu0 0.0
    %2072 = vmatpush.msra.mxu0 0.0
    %2073 = vmatpush.msra.mxu0 0.0
    %2074 = vmatpush.msra.mxu0 0.0
    %2075 = vmatpush.msra.mxu0 0.0
    %2076 = vmatpush.msra.mxu0 0.0
    %2077 = vmatpush.msra.mxu0 0.0
    %2078 = vmatpush.msra.mxu0 0.0
    %2079 = vmatpush.msra.mxu0 0.0
    %2080 = vmatpush.msra.mxu0 0.0
    %2081 = vmatpush.msra.mxu0 0.0
    %v2082 = vand.u32 %v129, 4294901760
    %v2083 = vsub.f32 %v129, %v2082
    %v2084 = vand.u32 %v2083, 4294901760
    %v2085 = vsub.f32 %v2083, %v2084
    %v2086 = vand.u32 %v2085, 4294901760
    %2087 = vmatpush.msra.mxu0 %v2086
    %v2088 = vand.u32 %v127, 4294901760
    %v2089 = vsub.f32 %v127, %v2088
    %v2090 = vand.u32 %v2089, 4294901760
    %v2091 = vsub.f32 %v2089, %v2090
    %v2092 = vand.u32 %v2091, 4294901760
    %2093 = vmatpush.msra.mxu0 %v2092
    %v2094 = vand.u32 %v2039, 4294901760
    %2095 = vmatmul.f32.gmra.mxu0 %v2094
    %v2096 = vpop.f32.mrf.mxu0
    %v2097 = vadd.f32 %v2066, %v2096
    %2098 = vdwg.mxu0
    %2099 = vmatpush.msra.mxu0 0.0
    %2100 = vmatpush.msra.mxu0 0.0
    %2101 = vmatpush.msra.mxu0 0.0
    %2102 = vmatpush.msra.mxu0 0.0
    %2103 = vmatpush.msra.mxu0 0.0
    %2104 = vmatpush.msra.mxu0 0.0
    %2105 = vmatpush.msra.mxu0 0.0
    %2106 = vmatpush.msra.mxu0 0.0
    %2107 = vmatpush.msra.mxu0 0.0
    %2108 = vmatpush.msra.mxu0 0.0
    %2109 = vmatpush.msra.mxu0 0.0
    %2110 = vmatpush.msra.mxu0 0.0
    %2111 = vmatpush.msra.mxu0 0.0
    %2112 = vmatpush.msra.mxu0 0.0
    %v2113 = vand.u32 %v129, 4294901760
    %v2114 = vsub.f32 %v129, %v2113
    %2115 = vmatpush.msra.mxu0 %v2114
    %v2116 = vand.u32 %v127, 4294901760
    %v2117 = vsub.f32 %v127, %v2116
    %2118 = vmatpush.msra.mxu0 %v2117
    %v2119 = vand.u32 %v2039, 4294901760
    %v2120 = vsub.f32 %v2039, %v2119
    %2121 = vmatmul.f32.gmra.mxu0 %v2120
    %v2122 = vpop.f32.mrf.mxu0
    %v2123 = vadd.f32 %v2097, %v2122
    %2124 = vdwg.mxu0
    %2125 = vmatpush.msra.mxu0 0.0
    %2126 = vmatpush.msra.mxu0 0.0
    %2127 = vmatpush.msra.mxu0 0.0
    %2128 = vmatpush.msra.mxu0 0.0
    %2129 = vmatpush.msra.mxu0 0.0
    %2130 = vmatpush.msra.mxu0 0.0
    %2131 = vmatpush.msra.mxu0 0.0
    %2132 = vmatpush.msra.mxu0 0.0
    %2133 = vmatpush.msra.mxu0 0.0
    %2134 = vmatpush.msra.mxu0 0.0
    %2135 = vmatpush.msra.mxu0 0.0
    %2136 = vmatpush.msra.mxu0 0.0
    %2137 = vmatpush.msra.mxu0 0.0
    %2138 = vmatpush.msra.mxu0 0.0
    %v2139 = vand.u32 %v129, 4294901760
    %2140 = vmatpush.msra.mxu0 %v2139
    %v2141 = vand.u32 %v127, 4294901760
    %2142 = vmatpush.msra.mxu0 %v2141
    %v2143 = vand.u32 %v2039, 4294901760
    %v2144 = vsub.f32 %v2039, %v2143
    %v2145 = vand.u32 %v2144, 4294901760
    %2146 = vmatmul.f32.gmra.mxu0 %v2145
    %v2147 = vpop.f32.mrf.mxu0
    %v2148 = vadd.f32 %v2123, %v2147
    %2149 = vdwg.mxu0
    %2150 = vmatpush.msra.mxu0 0.0
    %2151 = vmatpush.msra.mxu0 0.0
    %2152 = vmatpush.msra.mxu0 0.0
    %2153 = vmatpush.msra.mxu0 0.0
    %2154 = vmatpush.msra.mxu0 0.0
    %2155 = vmatpush.msra.mxu0 0.0
    %2156 = vmatpush.msra.mxu0 0.0
    %2157 = vmatpush.msra.mxu0 0.0
    %2158 = vmatpush.msra.mxu0 0.0
    %2159 = vmatpush.msra.mxu0 0.0
    %2160 = vmatpush.msra.mxu0 0.0
    %2161 = vmatpush.msra.mxu0 0.0
    %2162 = vmatpush.msra.mxu0 0.0
    %2163 = vmatpush.msra.mxu0 0.0
    %v2164 = vand.u32 %v129, 4294901760
    %v2165 = vsub.f32 %v129, %v2164
    %v2166 = vand.u32 %v2165, 4294901760
    %2167 = vmatpush.msra.mxu0 %v2166
    %v2168 = vand.u32 %v127, 4294901760
    %v2169 = vsub.f32 %v127, %v2168
    %v2170 = vand.u32 %v2169, 4294901760
    %2171 = vmatpush.msra.mxu0 %v2170
    %v2172 = vand.u32 %v2039, 4294901760
    %2173 = vmatmul.f32.gmra.mxu0 %v2172
    %v2174 = vpop.f32.mrf.mxu0
    %v2175 = vadd.f32 %v2148, %v2174
    %2176 = vdwg.mxu0
    %2177 = vmatpush.msra.mxu0 0.0
    %2178 = vmatpush.msra.mxu0 0.0
    %2179 = vmatpush.msra.mxu0 0.0
    %2180 = vmatpush.msra.mxu0 0.0
    %2181 = vmatpush.msra.mxu0 0.0
    %2182 = vmatpush.msra.mxu0 0.0
    %2183 = vmatpush.msra.mxu0 0.0
    %2184 = vmatpush.msra.mxu0 0.0
    %2185 = vmatpush.msra.mxu0 0.0
    %2186 = vmatpush.msra.mxu0 0.0
    %2187 = vmatpush.msra.mxu0 0.0
    %2188 = vmatpush.msra.mxu0 0.0
    %2189 = vmatpush.msra.mxu0 0.0
    %2190 = vmatpush.msra.mxu0 0.0
    %v2191 = vand.u32 %v129, 4294901760
    %2192 = vmatpush.msra.mxu0 %v2191
    %v2193 = vand.u32 %v127, 4294901760
    %2194 = vmatpush.msra.mxu0 %v2193
    %v2195 = vand.u32 %v2039, 4294901760
    %2196 = vmatmul.f32.gmra.mxu0 %v2195
    %v2197 = vpop.f32.mrf.mxu0
    %v2198 = vadd.f32 %v2175, %v2197
    %2199 = vdwg.mxu0
    %v2200 = vlog2.pop %v2198
    %v2201 = vmul.f32 %v2200, 0.6931472
    %v2202 = vadd.f32 %v2201, %v117
    %v2203 = vadd.f32 %v2202, %v2034
    %v2204 = vsub.f32 %v133, %v2203
    %v2205 = vsel %vm301, %v2204, -inf
    %2206 = vmax.xlane.f32.xlu0 %v2205
    %v2207 = vpop.xlane.xlu0 %2206
    %v2208 = vsub.f32 %v2204, %v2207
    %v2209 = vmul.f32 %v2208, 1.442695
    %v2210 = vpow.pop %v2209
    %v2212 = vsel %vm99, %v2210, 0
    %2214 = vmatpush.msra.mxu0 0.0
    %2215 = vmatpush.msra.mxu0 0.0
    %2216 = vmatpush.msra.mxu0 0.0
    %2217 = vmatpush.msra.mxu0 0.0
    %2218 = vmatpush.msra.mxu0 0.0
    %2219 = vmatpush.msra.mxu0 0.0
    %2220 = vmatpush.msra.mxu0 0.0
    %2221 = vmatpush.msra.mxu0 0.0
    %2222 = vmatpush.msra.mxu0 0.0
    %2223 = vmatpush.msra.mxu0 0.0
    %2224 = vmatpush.msra.mxu0 0.0
    %2225 = vmatpush.msra.mxu0 0.0
    %2226 = vmatpush.msra.mxu0 0.0
    %2227 = vmatpush.msra.mxu0 0.0
    %v2228 = vand.u32 %v123, 4294901760
    %2229 = vmatpush.msra.mxu0 %v2228
    %v2230 = vand.u32 %v121, 4294901760
    %2231 = vmatpush.msra.mxu0 %v2230
    %v2232 = vand.u32 %v2212, 4294901760
    %v2233 = vsub.f32 %v2212, %v2232
    %v2234 = vand.u32 %v2233, 4294901760
    %v2235 = vsub.f32 %v2233, %v2234
    %v2236 = vand.u32 %v2235, 4294901760
    %2237 = vmatmul.f32.gmra.mxu0 %v2236
    %v2238 = vpop.f32.mrf.mxu0
    %v2239 = vadd.f32 0.0, %v2238
    %2240 = vdwg.mxu0
    %2241 = vmatpush.msra.mxu0 0.0
    %2242 = vmatpush.msra.mxu0 0.0
    %2243 = vmatpush.msra.mxu0 0.0
    %2244 = vmatpush.msra.mxu0 0.0
    %2245 = vmatpush.msra.mxu0 0.0
    %2246 = vmatpush.msra.mxu0 0.0
    %2247 = vmatpush.msra.mxu0 0.0
    %2248 = vmatpush.msra.mxu0 0.0
    %2249 = vmatpush.msra.mxu0 0.0
    %2250 = vmatpush.msra.mxu0 0.0
    %2251 = vmatpush.msra.mxu0 0.0
    %2252 = vmatpush.msra.mxu0 0.0
    %2253 = vmatpush.msra.mxu0 0.0
    %2254 = vmatpush.msra.mxu0 0.0
    %v2255 = vand.u32 %v123, 4294901760
    %v2256 = vsub.f32 %v123, %v2255
    %v2257 = vand.u32 %v2256, 4294901760
    %v2258 = vsub.f32 %v2256, %v2257
    %v2259 = vand.u32 %v2258, 4294901760
    %2260 = vmatpush.msra.mxu0 %v2259
    %v2261 = vand.u32 %v121, 4294901760
    %v2262 = vsub.f32 %v121, %v2261
    %v2263 = vand.u32 %v2262, 4294901760
    %v2264 = vsub.f32 %v2262, %v2263
    %v2265 = vand.u32 %v2264, 4294901760
    %2266 = vmatpush.msra.mxu0 %v2265
    %v2267 = vand.u32 %v2212, 4294901760
    %2268 = vmatmul.f32.gmra.mxu0 %v2267
    %v2269 = vpop.f32.mrf.mxu0
    %v2270 = vadd.f32 %v2239, %v2269
    %2271 = vdwg.mxu0
    %2272 = vmatpush.msra.mxu0 0.0
    %2273 = vmatpush.msra.mxu0 0.0
    %2274 = vmatpush.msra.mxu0 0.0
    %2275 = vmatpush.msra.mxu0 0.0
    %2276 = vmatpush.msra.mxu0 0.0
    %2277 = vmatpush.msra.mxu0 0.0
    %2278 = vmatpush.msra.mxu0 0.0
    %2279 = vmatpush.msra.mxu0 0.0
    %2280 = vmatpush.msra.mxu0 0.0
    %2281 = vmatpush.msra.mxu0 0.0
    %2282 = vmatpush.msra.mxu0 0.0
    %2283 = vmatpush.msra.mxu0 0.0
    %2284 = vmatpush.msra.mxu0 0.0
    %2285 = vmatpush.msra.mxu0 0.0
    %v2286 = vand.u32 %v123, 4294901760
    %v2287 = vsub.f32 %v123, %v2286
    %2288 = vmatpush.msra.mxu0 %v2287
    %v2289 = vand.u32 %v121, 4294901760
    %v2290 = vsub.f32 %v121, %v2289
    %2291 = vmatpush.msra.mxu0 %v2290
    %v2292 = vand.u32 %v2212, 4294901760
    %v2293 = vsub.f32 %v2212, %v2292
    %2294 = vmatmul.f32.gmra.mxu0 %v2293
    %v2295 = vpop.f32.mrf.mxu0
    %v2296 = vadd.f32 %v2270, %v2295
    %2297 = vdwg.mxu0
    %2298 = vmatpush.msra.mxu0 0.0
    %2299 = vmatpush.msra.mxu0 0.0
    %2300 = vmatpush.msra.mxu0 0.0
    %2301 = vmatpush.msra.mxu0 0.0
    %2302 = vmatpush.msra.mxu0 0.0
    %2303 = vmatpush.msra.mxu0 0.0
    %2304 = vmatpush.msra.mxu0 0.0
    %2305 = vmatpush.msra.mxu0 0.0
    %2306 = vmatpush.msra.mxu0 0.0
    %2307 = vmatpush.msra.mxu0 0.0
    %2308 = vmatpush.msra.mxu0 0.0
    %2309 = vmatpush.msra.mxu0 0.0
    %2310 = vmatpush.msra.mxu0 0.0
    %2311 = vmatpush.msra.mxu0 0.0
    %v2312 = vand.u32 %v123, 4294901760
    %2313 = vmatpush.msra.mxu0 %v2312
    %v2314 = vand.u32 %v121, 4294901760
    %2315 = vmatpush.msra.mxu0 %v2314
    %v2316 = vand.u32 %v2212, 4294901760
    %v2317 = vsub.f32 %v2212, %v2316
    %v2318 = vand.u32 %v2317, 4294901760
    %2319 = vmatmul.f32.gmra.mxu0 %v2318
    %v2320 = vpop.f32.mrf.mxu0
    %v2321 = vadd.f32 %v2296, %v2320
    %2322 = vdwg.mxu0
    %2323 = vmatpush.msra.mxu0 0.0
    %2324 = vmatpush.msra.mxu0 0.0
    %2325 = vmatpush.msra.mxu0 0.0
    %2326 = vmatpush.msra.mxu0 0.0
    %2327 = vmatpush.msra.mxu0 0.0
    %2328 = vmatpush.msra.mxu0 0.0
    %2329 = vmatpush.msra.mxu0 0.0
    %2330 = vmatpush.msra.mxu0 0.0
    %2331 = vmatpush.msra.mxu0 0.0
    %2332 = vmatpush.msra.mxu0 0.0
    %2333 = vmatpush.msra.mxu0 0.0
    %2334 = vmatpush.msra.mxu0 0.0
    %2335 = vmatpush.msra.mxu0 0.0
    %2336 = vmatpush.msra.mxu0 0.0
    %v2337 = vand.u32 %v123, 4294901760
    %v2338 = vsub.f32 %v123, %v2337
    %v2339 = vand.u32 %v2338, 4294901760
    %2340 = vmatpush.msra.mxu0 %v2339
    %v2341 = vand.u32 %v121, 4294901760
    %v2342 = vsub.f32 %v121, %v2341
    %v2343 = vand.u32 %v2342, 4294901760
    %2344 = vmatpush.msra.mxu0 %v2343
    %v2345 = vand.u32 %v2212, 4294901760
    %2346 = vmatmul.f32.gmra.mxu0 %v2345
    %v2347 = vpop.f32.mrf.mxu0
    %v2348 = vadd.f32 %v2321, %v2347
    %2349 = vdwg.mxu0
    %2350 = vmatpush.msra.mxu0 0.0
    %2351 = vmatpush.msra.mxu0 0.0
    %2352 = vmatpush.msra.mxu0 0.0
    %2353 = vmatpush.msra.mxu0 0.0
    %2354 = vmatpush.msra.mxu0 0.0
    %2355 = vmatpush.msra.mxu0 0.0
    %2356 = vmatpush.msra.mxu0 0.0
    %2357 = vmatpush.msra.mxu0 0.0
    %2358 = vmatpush.msra.mxu0 0.0
    %2359 = vmatpush.msra.mxu0 0.0
    %2360 = vmatpush.msra.mxu0 0.0
    %2361 = vmatpush.msra.mxu0 0.0
    %2362 = vmatpush.msra.mxu0 0.0
    %2363 = vmatpush.msra.mxu0 0.0
    %v2364 = vand.u32 %v123, 4294901760
    %2365 = vmatpush.msra.mxu0 %v2364
    %v2366 = vand.u32 %v121, 4294901760
    %2367 = vmatpush.msra.mxu0 %v2366
    %v2368 = vand.u32 %v2212, 4294901760
    %2369 = vmatmul.f32.gmra.mxu0 %v2368
    %v2370 = vpop.f32.mrf.mxu0
    %v2371 = vadd.f32 %v2348, %v2370
    %2372 = vdwg.mxu0
    %v2373 = vlog2.pop %v2371
    %v2374 = vmul.f32 %v2373, 0.6931472
    %v2375 = vadd.f32 %v2374, %v108
    %v2376 = vadd.f32 %v2375, %v2207
    %v2377 = vsub.f32 %v131, %v2376
    %v2378 = vsel %vm301, %v2377, -inf
    %2379 = vmax.xlane.f32.xlu0 %v2378
    %v2380 = vpop.xlane.xlu0 %2379
    %v2381 = vsub.f32 %v2377, %v2380
    %v2382 = vmul.f32 %v2381, 1.442695
    %v2383 = vpow.pop %v2382
    %v2385 = vsel %vm99, %v2383, 0
    %2387 = vmatpush.msra.mxu0 0.0
    %2388 = vmatpush.msra.mxu0 0.0
    %2389 = vmatpush.msra.mxu0 0.0
    %2390 = vmatpush.msra.mxu0 0.0
    %2391 = vmatpush.msra.mxu0 0.0
    %2392 = vmatpush.msra.mxu0 0.0
    %2393 = vmatpush.msra.mxu0 0.0
    %2394 = vmatpush.msra.mxu0 0.0
    %2395 = vmatpush.msra.mxu0 0.0
    %2396 = vmatpush.msra.mxu0 0.0
    %2397 = vmatpush.msra.mxu0 0.0
    %2398 = vmatpush.msra.mxu0 0.0
    %2399 = vmatpush.msra.mxu0 0.0
    %2400 = vmatpush.msra.mxu0 0.0
    %v2401 = vand.u32 %v129, 4294901760
    %2402 = vmatpush.msra.mxu0 %v2401
    %v2403 = vand.u32 %v127, 4294901760
    %2404 = vmatpush.msra.mxu0 %v2403
    %v2405 = vand.u32 %v2385, 4294901760
    %v2406 = vsub.f32 %v2385, %v2405
    %v2407 = vand.u32 %v2406, 4294901760
    %v2408 = vsub.f32 %v2406, %v2407
    %v2409 = vand.u32 %v2408, 4294901760
    %2410 = vmatmul.f32.gmra.mxu0 %v2409
    %v2411 = vpop.f32.mrf.mxu0
    %v2412 = vadd.f32 0.0, %v2411
    %2413 = vdwg.mxu0
    %2414 = vmatpush.msra.mxu0 0.0
    %2415 = vmatpush.msra.mxu0 0.0
    %2416 = vmatpush.msra.mxu0 0.0
    %2417 = vmatpush.msra.mxu0 0.0
    %2418 = vmatpush.msra.mxu0 0.0
    %2419 = vmatpush.msra.mxu0 0.0
    %2420 = vmatpush.msra.mxu0 0.0
    %2421 = vmatpush.msra.mxu0 0.0
    %2422 = vmatpush.msra.mxu0 0.0
    %2423 = vmatpush.msra.mxu0 0.0
    %2424 = vmatpush.msra.mxu0 0.0
    %2425 = vmatpush.msra.mxu0 0.0
    %2426 = vmatpush.msra.mxu0 0.0
    %2427 = vmatpush.msra.mxu0 0.0
    %v2428 = vand.u32 %v129, 4294901760
    %v2429 = vsub.f32 %v129, %v2428
    %v2430 = vand.u32 %v2429, 4294901760
    %v2431 = vsub.f32 %v2429, %v2430
    %v2432 = vand.u32 %v2431, 4294901760
    %2433 = vmatpush.msra.mxu0 %v2432
    %v2434 = vand.u32 %v127, 4294901760
    %v2435 = vsub.f32 %v127, %v2434
    %v2436 = vand.u32 %v2435, 4294901760
    %v2437 = vsub.f32 %v2435, %v2436
    %v2438 = vand.u32 %v2437, 4294901760
    %2439 = vmatpush.msra.mxu0 %v2438
    %v2440 = vand.u32 %v2385, 4294901760
    %2441 = vmatmul.f32.gmra.mxu0 %v2440
    %v2442 = vpop.f32.mrf.mxu0
    %v2443 = vadd.f32 %v2412, %v2442
    %2444 = vdwg.mxu0
    %2445 = vmatpush.msra.mxu0 0.0
    %2446 = vmatpush.msra.mxu0 0.0
    %2447 = vmatpush.msra.mxu0 0.0
    %2448 = vmatpush.msra.mxu0 0.0
    %2449 = vmatpush.msra.mxu0 0.0
    %2450 = vmatpush.msra.mxu0 0.0
    %2451 = vmatpush.msra.mxu0 0.0
    %2452 = vmatpush.msra.mxu0 0.0
    %2453 = vmatpush.msra.mxu0 0.0
    %2454 = vmatpush.msra.mxu0 0.0
    %2455 = vmatpush.msra.mxu0 0.0
    %2456 = vmatpush.msra.mxu0 0.0
    %2457 = vmatpush.msra.mxu0 0.0
    %2458 = vmatpush.msra.mxu0 0.0
    %v2459 = vand.u32 %v129, 4294901760
    %v2460 = vsub.f32 %v129, %v2459
    %2461 = vmatpush.msra.mxu0 %v2460
    %v2462 = vand.u32 %v127, 4294901760
    %v2463 = vsub.f32 %v127, %v2462
    %2464 = vmatpush.msra.mxu0 %v2463
    %v2465 = vand.u32 %v2385, 4294901760
    %v2466 = vsub.f32 %v2385, %v2465
    %2467 = vmatmul.f32.gmra.mxu0 %v2466
    %v2468 = vpop.f32.mrf.mxu0
    %v2469 = vadd.f32 %v2443, %v2468
    %2470 = vdwg.mxu0
    %2471 = vmatpush.msra.mxu0 0.0
    %2472 = vmatpush.msra.mxu0 0.0
    %2473 = vmatpush.msra.mxu0 0.0
    %2474 = vmatpush.msra.mxu0 0.0
    %2475 = vmatpush.msra.mxu0 0.0
    %2476 = vmatpush.msra.mxu0 0.0
    %2477 = vmatpush.msra.mxu0 0.0
    %2478 = vmatpush.msra.mxu0 0.0
    %2479 = vmatpush.msra.mxu0 0.0
    %2480 = vmatpush.msra.mxu0 0.0
    %2481 = vmatpush.msra.mxu0 0.0
    %2482 = vmatpush.msra.mxu0 0.0
    %2483 = vmatpush.msra.mxu0 0.0
    %2484 = vmatpush.msra.mxu0 0.0
    %v2485 = vand.u32 %v129, 4294901760
    %2486 = vmatpush.msra.mxu0 %v2485
    %v2487 = vand.u32 %v127, 4294901760
    %2488 = vmatpush.msra.mxu0 %v2487
    %v2489 = vand.u32 %v2385, 4294901760
    %v2490 = vsub.f32 %v2385, %v2489
    %v2491 = vand.u32 %v2490, 4294901760
    %2492 = vmatmul.f32.gmra.mxu0 %v2491
    %v2493 = vpop.f32.mrf.mxu0
    %v2494 = vadd.f32 %v2469, %v2493
    %2495 = vdwg.mxu0
    %2496 = vmatpush.msra.mxu0 0.0
    %2497 = vmatpush.msra.mxu0 0.0
    %2498 = vmatpush.msra.mxu0 0.0
    %2499 = vmatpush.msra.mxu0 0.0
    %2500 = vmatpush.msra.mxu0 0.0
    %2501 = vmatpush.msra.mxu0 0.0
    %2502 = vmatpush.msra.mxu0 0.0
    %2503 = vmatpush.msra.mxu0 0.0
    %2504 = vmatpush.msra.mxu0 0.0
    %2505 = vmatpush.msra.mxu0 0.0
    %2506 = vmatpush.msra.mxu0 0.0
    %2507 = vmatpush.msra.mxu0 0.0
    %2508 = vmatpush.msra.mxu0 0.0
    %2509 = vmatpush.msra.mxu0 0.0
    %v2510 = vand.u32 %v129, 4294901760
    %v2511 = vsub.f32 %v129, %v2510
    %v2512 = vand.u32 %v2511, 4294901760
    %2513 = vmatpush.msra.mxu0 %v2512
    %v2514 = vand.u32 %v127, 4294901760
    %v2515 = vsub.f32 %v127, %v2514
    %v2516 = vand.u32 %v2515, 4294901760
    %2517 = vmatpush.msra.mxu0 %v2516
    %v2518 = vand.u32 %v2385, 4294901760
    %2519 = vmatmul.f32.gmra.mxu0 %v2518
    %v2520 = vpop.f32.mrf.mxu0
    %v2521 = vadd.f32 %v2494, %v2520
    %2522 = vdwg.mxu0
    %2523 = vmatpush.msra.mxu0 0.0
    %2524 = vmatpush.msra.mxu0 0.0
    %2525 = vmatpush.msra.mxu0 0.0
    %2526 = vmatpush.msra.mxu0 0.0
    %2527 = vmatpush.msra.mxu0 0.0
    %2528 = vmatpush.msra.mxu0 0.0
    %2529 = vmatpush.msra.mxu0 0.0
    %2530 = vmatpush.msra.mxu0 0.0
    %2531 = vmatpush.msra.mxu0 0.0
    %2532 = vmatpush.msra.mxu0 0.0
    %2533 = vmatpush.msra.mxu0 0.0
    %2534 = vmatpush.msra.mxu0 0.0
    %2535 = vmatpush.msra.mxu0 0.0
    %2536 = vmatpush.msra.mxu0 0.0
    %v2537 = vand.u32 %v129, 4294901760
    %2538 = vmatpush.msra.mxu0 %v2537
    %v2539 = vand.u32 %v127, 4294901760
    %2540 = vmatpush.msra.mxu0 %v2539
    %v2541 = vand.u32 %v2385, 4294901760
    %2542 = vmatmul.f32.gmra.mxu0 %v2541
    %v2543 = vpop.f32.mrf.mxu0
    %v2544 = vadd.f32 %v2521, %v2543
    %2545 = vdwg.mxu0
    %v2546 = vlog2.pop %v2544
    %v2547 = vmul.f32 %v2546, 0.6931472
    %v2548 = vadd.f32 %v2547, %v117
    %v2549 = vadd.f32 %v2548, %v2380
    %v2550 = vsub.f32 %v133, %v2549
    %v2551 = vsel %vm301, %v2550, -inf
    %2552 = vmax.xlane.f32.xlu0 %v2551
    %v2553 = vpop.xlane.xlu0 %2552
    %v2554 = vsub.f32 %v2550, %v2553
    %v2555 = vmul.f32 %v2554, 1.442695
    %v2556 = vpow.pop %v2555
    %v2558 = vsel %vm99, %v2556, 0
    %2560 = vmatpush.msra.mxu0 0.0
    %2561 = vmatpush.msra.mxu0 0.0
    %2562 = vmatpush.msra.mxu0 0.0
    %2563 = vmatpush.msra.mxu0 0.0
    %2564 = vmatpush.msra.mxu0 0.0
    %2565 = vmatpush.msra.mxu0 0.0
    %2566 = vmatpush.msra.mxu0 0.0
    %2567 = vmatpush.msra.mxu0 0.0
    %2568 = vmatpush.msra.mxu0 0.0
    %2569 = vmatpush.msra.mxu0 0.0
    %2570 = vmatpush.msra.mxu0 0.0
    %2571 = vmatpush.msra.mxu0 0.0
    %2572 = vmatpush.msra.mxu0 0.0
    %2573 = vmatpush.msra.mxu0 0.0
    %v2574 = vand.u32 %v123, 4294901760
    %2575 = vmatpush.msra.mxu0 %v2574
    %v2576 = vand.u32 %v121, 4294901760
    %2577 = vmatpush.msra.mxu0 %v2576
    %v2578 = vand.u32 %v2558, 4294901760
    %v2579 = vsub.f32 %v2558, %v2578
    %v2580 = vand.u32 %v2579, 4294901760
    %v2581 = vsub.f32 %v2579, %v2580
    %v2582 = vand.u32 %v2581, 4294901760
    %2583 = vmatmul.f32.gmra.mxu0 %v2582
    %v2584 = vpop.f32.mrf.mxu0
    %v2585 = vadd.f32 0.0, %v2584
    %2586 = vdwg.mxu0
    %2587 = vmatpush.msra.mxu0 0.0
    %2588 = vmatpush.msra.mxu0 0.0
    %2589 = vmatpush.msra.mxu0 0.0
    %2590 = vmatpush.msra.mxu0 0.0
    %2591 = vmatpush.msra.mxu0 0.0
    %2592 = vmatpush.msra.mxu0 0.0
    %2593 = vmatpush.msra.mxu0 0.0
    %2594 = vmatpush.msra.mxu0 0.0
    %2595 = vmatpush.msra.mxu0 0.0
    %2596 = vmatpush.msra.mxu0 0.0
    %2597 = vmatpush.msra.mxu0 0.0
    %2598 = vmatpush.msra.mxu0 0.0
    %2599 = vmatpush.msra.mxu0 0.0
    %2600 = vmatpush.msra.mxu0 0.0
    %v2601 = vand.u32 %v123, 4294901760
    %v2602 = vsub.f32 %v123, %v2601
    %v2603 = vand.u32 %v2602, 4294901760
    %v2604 = vsub.f32 %v2602, %v2603
    %v2605 = vand.u32 %v2604, 4294901760
    %2606 = vmatpush.msra.mxu0 %v2605
    %v2607 = vand.u32 %v121, 4294901760
    %v2608 = vsub.f32 %v121, %v2607
    %v2609 = vand.u32 %v2608, 4294901760
    %v2610 = vsub.f32 %v2608, %v2609
    %v2611 = vand.u32 %v2610, 4294901760
    %2612 = vmatpush.msra.mxu0 %v2611
    %v2613 = vand.u32 %v2558, 4294901760
    %2614 = vmatmul.f32.gmra.mxu0 %v2613
    %v2615 = vpop.f32.mrf.mxu0
    %v2616 = vadd.f32 %v2585, %v2615
    %2617 = vdwg.mxu0
    %2618 = vmatpush.msra.mxu0 0.0
    %2619 = vmatpush.msra.mxu0 0.0
    %2620 = vmatpush.msra.mxu0 0.0
    %2621 = vmatpush.msra.mxu0 0.0
    %2622 = vmatpush.msra.mxu0 0.0
    %2623 = vmatpush.msra.mxu0 0.0
    %2624 = vmatpush.msra.mxu0 0.0
    %2625 = vmatpush.msra.mxu0 0.0
    %2626 = vmatpush.msra.mxu0 0.0
    %2627 = vmatpush.msra.mxu0 0.0
    %2628 = vmatpush.msra.mxu0 0.0
    %2629 = vmatpush.msra.mxu0 0.0
    %2630 = vmatpush.msra.mxu0 0.0
    %2631 = vmatpush.msra.mxu0 0.0
    %v2632 = vand.u32 %v123, 4294901760
    %v2633 = vsub.f32 %v123, %v2632
    %2634 = vmatpush.msra.mxu0 %v2633
    %v2635 = vand.u32 %v121, 4294901760
    %v2636 = vsub.f32 %v121, %v2635
    %2637 = vmatpush.msra.mxu0 %v2636
    %v2638 = vand.u32 %v2558, 4294901760
    %v2639 = vsub.f32 %v2558, %v2638
    %2640 = vmatmul.f32.gmra.mxu0 %v2639
    %v2641 = vpop.f32.mrf.mxu0
    %v2642 = vadd.f32 %v2616, %v2641
    %2643 = vdwg.mxu0
    %2644 = vmatpush.msra.mxu0 0.0
    %2645 = vmatpush.msra.mxu0 0.0
    %2646 = vmatpush.msra.mxu0 0.0
    %2647 = vmatpush.msra.mxu0 0.0
    %2648 = vmatpush.msra.mxu0 0.0
    %2649 = vmatpush.msra.mxu0 0.0
    %2650 = vmatpush.msra.mxu0 0.0
    %2651 = vmatpush.msra.mxu0 0.0
    %2652 = vmatpush.msra.mxu0 0.0
    %2653 = vmatpush.msra.mxu0 0.0
    %2654 = vmatpush.msra.mxu0 0.0
    %2655 = vmatpush.msra.mxu0 0.0
    %2656 = vmatpush.msra.mxu0 0.0
    %2657 = vmatpush.msra.mxu0 0.0
    %v2658 = vand.u32 %v123, 4294901760
    %2659 = vmatpush.msra.mxu0 %v2658
    %v2660 = vand.u32 %v121, 4294901760
    %2661 = vmatpush.msra.mxu0 %v2660
    %v2662 = vand.u32 %v2558, 4294901760
    %v2663 = vsub.f32 %v2558, %v2662
    %v2664 = vand.u32 %v2663, 4294901760
    %2665 = vmatmul.f32.gmra.mxu0 %v2664
    %v2666 = vpop.f32.mrf.mxu0
    %v2667 = vadd.f32 %v2642, %v2666
    %2668 = vdwg.mxu0
    %2669 = vmatpush.msra.mxu0 0.0
    %2670 = vmatpush.msra.mxu0 0.0
    %2671 = vmatpush.msra.mxu0 0.0
    %2672 = vmatpush.msra.mxu0 0.0
    %2673 = vmatpush.msra.mxu0 0.0
    %2674 = vmatpush.msra.mxu0 0.0
    %2675 = vmatpush.msra.mxu0 0.0
    %2676 = vmatpush.msra.mxu0 0.0
    %2677 = vmatpush.msra.mxu0 0.0
    %2678 = vmatpush.msra.mxu0 0.0
    %2679 = vmatpush.msra.mxu0 0.0
    %2680 = vmatpush.msra.mxu0 0.0
    %2681 = vmatpush.msra.mxu0 0.0
    %2682 = vmatpush.msra.mxu0 0.0
    %v2683 = vand.u32 %v123, 4294901760
    %v2684 = vsub.f32 %v123, %v2683
    %v2685 = vand.u32 %v2684, 4294901760
    %2686 = vmatpush.msra.mxu0 %v2685
    %v2687 = vand.u32 %v121, 4294901760
    %v2688 = vsub.f32 %v121, %v2687
    %v2689 = vand.u32 %v2688, 4294901760
    %2690 = vmatpush.msra.mxu0 %v2689
    %v2691 = vand.u32 %v2558, 4294901760
    %2692 = vmatmul.f32.gmra.mxu0 %v2691
    %v2693 = vpop.f32.mrf.mxu0
    %v2694 = vadd.f32 %v2667, %v2693
    %2695 = vdwg.mxu0
    %2696 = vmatpush.msra.mxu0 0.0
    %2697 = vmatpush.msra.mxu0 0.0
    %2698 = vmatpush.msra.mxu0 0.0
    %2699 = vmatpush.msra.mxu0 0.0
    %2700 = vmatpush.msra.mxu0 0.0
    %2701 = vmatpush.msra.mxu0 0.0
    %2702 = vmatpush.msra.mxu0 0.0
    %2703 = vmatpush.msra.mxu0 0.0
    %2704 = vmatpush.msra.mxu0 0.0
    %2705 = vmatpush.msra.mxu0 0.0
    %2706 = vmatpush.msra.mxu0 0.0
    %2707 = vmatpush.msra.mxu0 0.0
    %2708 = vmatpush.msra.mxu0 0.0
    %2709 = vmatpush.msra.mxu0 0.0
    %v2710 = vand.u32 %v123, 4294901760
    %2711 = vmatpush.msra.mxu0 %v2710
    %v2712 = vand.u32 %v121, 4294901760
    %2713 = vmatpush.msra.mxu0 %v2712
    %v2714 = vand.u32 %v2558, 4294901760
    %2715 = vmatmul.f32.gmra.mxu0 %v2714
    %v2716 = vpop.f32.mrf.mxu0
    %v2717 = vadd.f32 %v2694, %v2716
    %2718 = vdwg.mxu0
    %v2719 = vlog2.pop %v2717
    %v2720 = vmul.f32 %v2719, 0.6931472
    %v2721 = vadd.f32 %v2720, %v108
    %v2722 = vadd.f32 %v2721, %v2553
    %v2723 = vsub.f32 %v131, %v2722
    %v2724 = vsel %vm301, %v2723, -inf
    %2725 = vmax.xlane.f32.xlu0 %v2724
    %v2726 = vpop.xlane.xlu0 %2725
    %v2727 = vsub.f32 %v2723, %v2726
    %v2728 = vmul.f32 %v2727, 1.442695
    %v2729 = vpow.pop %v2728
    %v2731 = vsel %vm99, %v2729, 0
    %2733 = vmatpush.msra.mxu0 0.0
    %2734 = vmatpush.msra.mxu0 0.0
    %2735 = vmatpush.msra.mxu0 0.0
    %2736 = vmatpush.msra.mxu0 0.0
    %2737 = vmatpush.msra.mxu0 0.0
    %2738 = vmatpush.msra.mxu0 0.0
    %2739 = vmatpush.msra.mxu0 0.0
    %2740 = vmatpush.msra.mxu0 0.0
    %2741 = vmatpush.msra.mxu0 0.0
    %2742 = vmatpush.msra.mxu0 0.0
    %2743 = vmatpush.msra.mxu0 0.0
    %2744 = vmatpush.msra.mxu0 0.0
    %2745 = vmatpush.msra.mxu0 0.0
    %2746 = vmatpush.msra.mxu0 0.0
    %v2747 = vand.u32 %v129, 4294901760
    %2748 = vmatpush.msra.mxu0 %v2747
    %v2749 = vand.u32 %v127, 4294901760
    %2750 = vmatpush.msra.mxu0 %v2749
    %v2751 = vand.u32 %v2731, 4294901760
    %v2752 = vsub.f32 %v2731, %v2751
    %v2753 = vand.u32 %v2752, 4294901760
    %v2754 = vsub.f32 %v2752, %v2753
    %v2755 = vand.u32 %v2754, 4294901760
    %2756 = vmatmul.f32.gmra.mxu0 %v2755
    %v2757 = vpop.f32.mrf.mxu0
    %v2758 = vadd.f32 0.0, %v2757
    %2759 = vdwg.mxu0
    %2760 = vmatpush.msra.mxu0 0.0
    %2761 = vmatpush.msra.mxu0 0.0
    %2762 = vmatpush.msra.mxu0 0.0
    %2763 = vmatpush.msra.mxu0 0.0
    %2764 = vmatpush.msra.mxu0 0.0
    %2765 = vmatpush.msra.mxu0 0.0
    %2766 = vmatpush.msra.mxu0 0.0
    %2767 = vmatpush.msra.mxu0 0.0
    %2768 = vmatpush.msra.mxu0 0.0
    %2769 = vmatpush.msra.mxu0 0.0
    %2770 = vmatpush.msra.mxu0 0.0
    %2771 = vmatpush.msra.mxu0 0.0
    %2772 = vmatpush.msra.mxu0 0.0
    %2773 = vmatpush.msra.mxu0 0.0
    %v2774 = vand.u32 %v129, 4294901760
    %v2775 = vsub.f32 %v129, %v2774
    %v2776 = vand.u32 %v2775, 4294901760
    %v2777 = vsub.f32 %v2775, %v2776
    %v2778 = vand.u32 %v2777, 4294901760
    %2779 = vmatpush.msra.mxu0 %v2778
    %v2780 = vand.u32 %v127, 4294901760
    %v2781 = vsub.f32 %v127, %v2780
    %v2782 = vand.u32 %v2781, 4294901760
    %v2783 = vsub.f32 %v2781, %v2782
    %v2784 = vand.u32 %v2783, 4294901760
    %2785 = vmatpush.msra.mxu0 %v2784
    %v2786 = vand.u32 %v2731, 4294901760
    %2787 = vmatmul.f32.gmra.mxu0 %v2786
    %v2788 = vpop.f32.mrf.mxu0
    %v2789 = vadd.f32 %v2758, %v2788
    %2790 = vdwg.mxu0
    %2791 = vmatpush.msra.mxu0 0.0
    %2792 = vmatpush.msra.mxu0 0.0
    %2793 = vmatpush.msra.mxu0 0.0
    %2794 = vmatpush.msra.mxu0 0.0
    %2795 = vmatpush.msra.mxu0 0.0
    %2796 = vmatpush.msra.mxu0 0.0
    %2797 = vmatpush.msra.mxu0 0.0
    %2798 = vmatpush.msra.mxu0 0.0
    %2799 = vmatpush.msra.mxu0 0.0
    %2800 = vmatpush.msra.mxu0 0.0
    %2801 = vmatpush.msra.mxu0 0.0
    %2802 = vmatpush.msra.mxu0 0.0
    %2803 = vmatpush.msra.mxu0 0.0
    %2804 = vmatpush.msra.mxu0 0.0
    %v2805 = vand.u32 %v129, 4294901760
    %v2806 = vsub.f32 %v129, %v2805
    %2807 = vmatpush.msra.mxu0 %v2806
    %v2808 = vand.u32 %v127, 4294901760
    %v2809 = vsub.f32 %v127, %v2808
    %2810 = vmatpush.msra.mxu0 %v2809
    %v2811 = vand.u32 %v2731, 4294901760
    %v2812 = vsub.f32 %v2731, %v2811
    %2813 = vmatmul.f32.gmra.mxu0 %v2812
    %v2814 = vpop.f32.mrf.mxu0
    %v2815 = vadd.f32 %v2789, %v2814
    %2816 = vdwg.mxu0
    %2817 = vmatpush.msra.mxu0 0.0
    %2818 = vmatpush.msra.mxu0 0.0
    %2819 = vmatpush.msra.mxu0 0.0
    %2820 = vmatpush.msra.mxu0 0.0
    %2821 = vmatpush.msra.mxu0 0.0
    %2822 = vmatpush.msra.mxu0 0.0
    %2823 = vmatpush.msra.mxu0 0.0
    %2824 = vmatpush.msra.mxu0 0.0
    %2825 = vmatpush.msra.mxu0 0.0
    %2826 = vmatpush.msra.mxu0 0.0
    %2827 = vmatpush.msra.mxu0 0.0
    %2828 = vmatpush.msra.mxu0 0.0
    %2829 = vmatpush.msra.mxu0 0.0
    %2830 = vmatpush.msra.mxu0 0.0
    %v2831 = vand.u32 %v129, 4294901760
    %2832 = vmatpush.msra.mxu0 %v2831
    %v2833 = vand.u32 %v127, 4294901760
    %2834 = vmatpush.msra.mxu0 %v2833
    %v2835 = vand.u32 %v2731, 4294901760
    %v2836 = vsub.f32 %v2731, %v2835
    %v2837 = vand.u32 %v2836, 4294901760
    %2838 = vmatmul.f32.gmra.mxu0 %v2837
    %v2839 = vpop.f32.mrf.mxu0
    %v2840 = vadd.f32 %v2815, %v2839
    %2841 = vdwg.mxu0
    %2842 = vmatpush.msra.mxu0 0.0
    %2843 = vmatpush.msra.mxu0 0.0
    %2844 = vmatpush.msra.mxu0 0.0
    %2845 = vmatpush.msra.mxu0 0.0
    %2846 = vmatpush.msra.mxu0 0.0
    %2847 = vmatpush.msra.mxu0 0.0
    %2848 = vmatpush.msra.mxu0 0.0
    %2849 = vmatpush.msra.mxu0 0.0
    %2850 = vmatpush.msra.mxu0 0.0
    %2851 = vmatpush.msra.mxu0 0.0
    %2852 = vmatpush.msra.mxu0 0.0
    %2853 = vmatpush.msra.mxu0 0.0
    %2854 = vmatpush.msra.mxu0 0.0
    %2855 = vmatpush.msra.mxu0 0.0
    %v2856 = vand.u32 %v129, 4294901760
    %v2857 = vsub.f32 %v129, %v2856
    %v2858 = vand.u32 %v2857, 4294901760
    %2859 = vmatpush.msra.mxu0 %v2858
    %v2860 = vand.u32 %v127, 4294901760
    %v2861 = vsub.f32 %v127, %v2860
    %v2862 = vand.u32 %v2861, 4294901760
    %2863 = vmatpush.msra.mxu0 %v2862
    %v2864 = vand.u32 %v2731, 4294901760
    %2865 = vmatmul.f32.gmra.mxu0 %v2864
    %v2866 = vpop.f32.mrf.mxu0
    %v2867 = vadd.f32 %v2840, %v2866
    %2868 = vdwg.mxu0
    %2869 = vmatpush.msra.mxu0 0.0
    %2870 = vmatpush.msra.mxu0 0.0
    %2871 = vmatpush.msra.mxu0 0.0
    %2872 = vmatpush.msra.mxu0 0.0
    %2873 = vmatpush.msra.mxu0 0.0
    %2874 = vmatpush.msra.mxu0 0.0
    %2875 = vmatpush.msra.mxu0 0.0
    %2876 = vmatpush.msra.mxu0 0.0
    %2877 = vmatpush.msra.mxu0 0.0
    %2878 = vmatpush.msra.mxu0 0.0
    %2879 = vmatpush.msra.mxu0 0.0
    %2880 = vmatpush.msra.mxu0 0.0
    %2881 = vmatpush.msra.mxu0 0.0
    %2882 = vmatpush.msra.mxu0 0.0
    %v2883 = vand.u32 %v129, 4294901760
    %2884 = vmatpush.msra.mxu0 %v2883
    %v2885 = vand.u32 %v127, 4294901760
    %2886 = vmatpush.msra.mxu0 %v2885
    %v2887 = vand.u32 %v2731, 4294901760
    %2888 = vmatmul.f32.gmra.mxu0 %v2887
    %v2889 = vpop.f32.mrf.mxu0
    %v2890 = vadd.f32 %v2867, %v2889
    %2891 = vdwg.mxu0
    %v2892 = vlog2.pop %v2890
    %v2893 = vmul.f32 %v2892, 0.6931472
    %v2894 = vadd.f32 %v2893, %v117
    %v2895 = vadd.f32 %v2894, %v2726
    %v2896 = vsub.f32 %v133, %v2895
    %v2897 = vsel %vm301, %v2896, -inf
    %2898 = vmax.xlane.f32.xlu0 %v2897
    %v2899 = vpop.xlane.xlu0 %2898
    %v2900 = vsub.f32 %v2896, %v2899
    %v2901 = vmul.f32 %v2900, 1.442695
    %v2902 = vpow.pop %v2901
    %v2904 = vsel %vm99, %v2902, 0
    %2906 = vmatpush.msra.mxu0 0.0
    %2907 = vmatpush.msra.mxu0 0.0
    %2908 = vmatpush.msra.mxu0 0.0
    %2909 = vmatpush.msra.mxu0 0.0
    %2910 = vmatpush.msra.mxu0 0.0
    %2911 = vmatpush.msra.mxu0 0.0
    %2912 = vmatpush.msra.mxu0 0.0
    %2913 = vmatpush.msra.mxu0 0.0
    %2914 = vmatpush.msra.mxu0 0.0
    %2915 = vmatpush.msra.mxu0 0.0
    %2916 = vmatpush.msra.mxu0 0.0
    %2917 = vmatpush.msra.mxu0 0.0
    %2918 = vmatpush.msra.mxu0 0.0
    %2919 = vmatpush.msra.mxu0 0.0
    %v2920 = vand.u32 %v123, 4294901760
    %2921 = vmatpush.msra.mxu0 %v2920
    %v2922 = vand.u32 %v121, 4294901760
    %2923 = vmatpush.msra.mxu0 %v2922
    %v2924 = vand.u32 %v2904, 4294901760
    %v2925 = vsub.f32 %v2904, %v2924
    %v2926 = vand.u32 %v2925, 4294901760
    %v2927 = vsub.f32 %v2925, %v2926
    %v2928 = vand.u32 %v2927, 4294901760
    %2929 = vmatmul.f32.gmra.mxu0 %v2928
    %v2930 = vpop.f32.mrf.mxu0
    %v2931 = vadd.f32 0.0, %v2930
    %2932 = vdwg.mxu0
    %2933 = vmatpush.msra.mxu0 0.0
    %2934 = vmatpush.msra.mxu0 0.0
    %2935 = vmatpush.msra.mxu0 0.0
    %2936 = vmatpush.msra.mxu0 0.0
    %2937 = vmatpush.msra.mxu0 0.0
    %2938 = vmatpush.msra.mxu0 0.0
    %2939 = vmatpush.msra.mxu0 0.0
    %2940 = vmatpush.msra.mxu0 0.0
    %2941 = vmatpush.msra.mxu0 0.0
    %2942 = vmatpush.msra.mxu0 0.0
    %2943 = vmatpush.msra.mxu0 0.0
    %2944 = vmatpush.msra.mxu0 0.0
    %2945 = vmatpush.msra.mxu0 0.0
    %2946 = vmatpush.msra.mxu0 0.0
    %v2947 = vand.u32 %v123, 4294901760
    %v2948 = vsub.f32 %v123, %v2947
    %v2949 = vand.u32 %v2948, 4294901760
    %v2950 = vsub.f32 %v2948, %v2949
    %v2951 = vand.u32 %v2950, 4294901760
    %2952 = vmatpush.msra.mxu0 %v2951
    %v2953 = vand.u32 %v121, 4294901760
    %v2954 = vsub.f32 %v121, %v2953
    %v2955 = vand.u32 %v2954, 4294901760
    %v2956 = vsub.f32 %v2954, %v2955
    %v2957 = vand.u32 %v2956, 4294901760
    %2958 = vmatpush.msra.mxu0 %v2957
    %v2959 = vand.u32 %v2904, 4294901760
    %2960 = vmatmul.f32.gmra.mxu0 %v2959
    %v2961 = vpop.f32.mrf.mxu0
    %v2962 = vadd.f32 %v2931, %v2961
    %2963 = vdwg.mxu0
    %2964 = vmatpush.msra.mxu0 0.0
    %2965 = vmatpush.msra.mxu0 0.0
    %2966 = vmatpush.msra.mxu0 0.0
    %2967 = vmatpush.msra.mxu0 0.0
    %2968 = vmatpush.msra.mxu0 0.0
    %2969 = vmatpush.msra.mxu0 0.0
    %2970 = vmatpush.msra.mxu0 0.0
    %2971 = vmatpush.msra.mxu0 0.0
    %2972 = vmatpush.msra.mxu0 0.0
    %2973 = vmatpush.msra.mxu0 0.0
    %2974 = vmatpush.msra.mxu0 0.0
    %2975 = vmatpush.msra.mxu0 0.0
    %2976 = vmatpush.msra.mxu0 0.0
    %2977 = vmatpush.msra.mxu0 0.0
    %v2978 = vand.u32 %v123, 4294901760
    %v2979 = vsub.f32 %v123, %v2978
    %2980 = vmatpush.msra.mxu0 %v2979
    %v2981 = vand.u32 %v121, 4294901760
    %v2982 = vsub.f32 %v121, %v2981
    %2983 = vmatpush.msra.mxu0 %v2982
    %v2984 = vand.u32 %v2904, 4294901760
    %v2985 = vsub.f32 %v2904, %v2984
    %2986 = vmatmul.f32.gmra.mxu0 %v2985
    %v2987 = vpop.f32.mrf.mxu0
    %v2988 = vadd.f32 %v2962, %v2987
    %2989 = vdwg.mxu0
    %2990 = vmatpush.msra.mxu0 0.0
    %2991 = vmatpush.msra.mxu0 0.0
    %2992 = vmatpush.msra.mxu0 0.0
    %2993 = vmatpush.msra.mxu0 0.0
    %2994 = vmatpush.msra.mxu0 0.0
    %2995 = vmatpush.msra.mxu0 0.0
    %2996 = vmatpush.msra.mxu0 0.0
    %2997 = vmatpush.msra.mxu0 0.0
    %2998 = vmatpush.msra.mxu0 0.0
    %2999 = vmatpush.msra.mxu0 0.0
    %3000 = vmatpush.msra.mxu0 0.0
    %3001 = vmatpush.msra.mxu0 0.0
    %3002 = vmatpush.msra.mxu0 0.0
    %3003 = vmatpush.msra.mxu0 0.0
    %v3004 = vand.u32 %v123, 4294901760
    %3005 = vmatpush.msra.mxu0 %v3004
    %v3006 = vand.u32 %v121, 4294901760
    %3007 = vmatpush.msra.mxu0 %v3006
    %v3008 = vand.u32 %v2904, 4294901760
    %v3009 = vsub.f32 %v2904, %v3008
    %v3010 = vand.u32 %v3009, 4294901760
    %3011 = vmatmul.f32.gmra.mxu0 %v3010
    %v3012 = vpop.f32.mrf.mxu0
    %v3013 = vadd.f32 %v2988, %v3012
    %3014 = vdwg.mxu0
    %3015 = vmatpush.msra.mxu0 0.0
    %3016 = vmatpush.msra.mxu0 0.0
    %3017 = vmatpush.msra.mxu0 0.0
    %3018 = vmatpush.msra.mxu0 0.0
    %3019 = vmatpush.msra.mxu0 0.0
    %3020 = vmatpush.msra.mxu0 0.0
    %3021 = vmatpush.msra.mxu0 0.0
    %3022 = vmatpush.msra.mxu0 0.0
    %3023 = vmatpush.msra.mxu0 0.0
    %3024 = vmatpush.msra.mxu0 0.0
    %3025 = vmatpush.msra.mxu0 0.0
    %3026 = vmatpush.msra.mxu0 0.0
    %3027 = vmatpush.msra.mxu0 0.0
    %3028 = vmatpush.msra.mxu0 0.0
    %v3029 = vand.u32 %v123, 4294901760
    %v3030 = vsub.f32 %v123, %v3029
    %v3031 = vand.u32 %v3030, 4294901760
    %3032 = vmatpush.msra.mxu0 %v3031
    %v3033 = vand.u32 %v121, 4294901760
    %v3034 = vsub.f32 %v121, %v3033
    %v3035 = vand.u32 %v3034, 4294901760
    %3036 = vmatpush.msra.mxu0 %v3035
    %v3037 = vand.u32 %v2904, 4294901760
    %3038 = vmatmul.f32.gmra.mxu0 %v3037
    %v3039 = vpop.f32.mrf.mxu0
    %v3040 = vadd.f32 %v3013, %v3039
    %3041 = vdwg.mxu0
    %3042 = vmatpush.msra.mxu0 0.0
    %3043 = vmatpush.msra.mxu0 0.0
    %3044 = vmatpush.msra.mxu0 0.0
    %3045 = vmatpush.msra.mxu0 0.0
    %3046 = vmatpush.msra.mxu0 0.0
    %3047 = vmatpush.msra.mxu0 0.0
    %3048 = vmatpush.msra.mxu0 0.0
    %3049 = vmatpush.msra.mxu0 0.0
    %3050 = vmatpush.msra.mxu0 0.0
    %3051 = vmatpush.msra.mxu0 0.0
    %3052 = vmatpush.msra.mxu0 0.0
    %3053 = vmatpush.msra.mxu0 0.0
    %3054 = vmatpush.msra.mxu0 0.0
    %3055 = vmatpush.msra.mxu0 0.0
    %v3056 = vand.u32 %v123, 4294901760
    %3057 = vmatpush.msra.mxu0 %v3056
    %v3058 = vand.u32 %v121, 4294901760
    %3059 = vmatpush.msra.mxu0 %v3058
    %v3060 = vand.u32 %v2904, 4294901760
    %3061 = vmatmul.f32.gmra.mxu0 %v3060
    %v3062 = vpop.f32.mrf.mxu0
    %v3063 = vadd.f32 %v3040, %v3062
    %3064 = vdwg.mxu0
    %v3065 = vlog2.pop %v3063
    %v3066 = vmul.f32 %v3065, 0.6931472
    %v3067 = vadd.f32 %v3066, %v108
    %v3068 = vadd.f32 %v3067, %v2899
    %v3069 = vsub.f32 %v131, %v3068
    %v3070 = vsel %vm301, %v3069, -inf
    %3071 = vmax.xlane.f32.xlu0 %v3070
    %v3072 = vpop.xlane.xlu0 %3071
    %v3073 = vsub.f32 %v3069, %v3072
    %v3074 = vmul.f32 %v3073, 1.442695
    %v3075 = vpow.pop %v3074
    %v3077 = vsel %vm99, %v3075, 0
    %3079 = vmatpush.msra.mxu0 0.0
    %3080 = vmatpush.msra.mxu0 0.0
    %3081 = vmatpush.msra.mxu0 0.0
    %3082 = vmatpush.msra.mxu0 0.0
    %3083 = vmatpush.msra.mxu0 0.0
    %3084 = vmatpush.msra.mxu0 0.0
    %3085 = vmatpush.msra.mxu0 0.0
    %3086 = vmatpush.msra.mxu0 0.0
    %3087 = vmatpush.msra.mxu0 0.0
    %3088 = vmatpush.msra.mxu0 0.0
    %3089 = vmatpush.msra.mxu0 0.0
    %3090 = vmatpush.msra.mxu0 0.0
    %3091 = vmatpush.msra.mxu0 0.0
    %3092 = vmatpush.msra.mxu0 0.0
    %v3093 = vand.u32 %v129, 4294901760
    %3094 = vmatpush.msra.mxu0 %v3093
    %v3095 = vand.u32 %v127, 4294901760
    %3096 = vmatpush.msra.mxu0 %v3095
    %v3097 = vand.u32 %v3077, 4294901760
    %v3098 = vsub.f32 %v3077, %v3097
    %v3099 = vand.u32 %v3098, 4294901760
    %v3100 = vsub.f32 %v3098, %v3099
    %v3101 = vand.u32 %v3100, 4294901760
    %3102 = vmatmul.f32.gmra.mxu0 %v3101
    %v3103 = vpop.f32.mrf.mxu0
    %v3104 = vadd.f32 0.0, %v3103
    %3105 = vdwg.mxu0
    %3106 = vmatpush.msra.mxu0 0.0
    %3107 = vmatpush.msra.mxu0 0.0
    %3108 = vmatpush.msra.mxu0 0.0
    %3109 = vmatpush.msra.mxu0 0.0
    %3110 = vmatpush.msra.mxu0 0.0
    %3111 = vmatpush.msra.mxu0 0.0
    %3112 = vmatpush.msra.mxu0 0.0
    %3113 = vmatpush.msra.mxu0 0.0
    %3114 = vmatpush.msra.mxu0 0.0
    %3115 = vmatpush.msra.mxu0 0.0
    %3116 = vmatpush.msra.mxu0 0.0
    %3117 = vmatpush.msra.mxu0 0.0
    %3118 = vmatpush.msra.mxu0 0.0
    %3119 = vmatpush.msra.mxu0 0.0
    %v3120 = vand.u32 %v129, 4294901760
    %v3121 = vsub.f32 %v129, %v3120
    %v3122 = vand.u32 %v3121, 4294901760
    %v3123 = vsub.f32 %v3121, %v3122
    %v3124 = vand.u32 %v3123, 4294901760
    %3125 = vmatpush.msra.mxu0 %v3124
    %v3126 = vand.u32 %v127, 4294901760
    %v3127 = vsub.f32 %v127, %v3126
    %v3128 = vand.u32 %v3127, 4294901760
    %v3129 = vsub.f32 %v3127, %v3128
    %v3130 = vand.u32 %v3129, 4294901760
    %3131 = vmatpush.msra.mxu0 %v3130
    %v3132 = vand.u32 %v3077, 4294901760
    %3133 = vmatmul.f32.gmra.mxu0 %v3132
    %v3134 = vpop.f32.mrf.mxu0
    %v3135 = vadd.f32 %v3104, %v3134
    %3136 = vdwg.mxu0
    %3137 = vmatpush.msra.mxu0 0.0
    %3138 = vmatpush.msra.mxu0 0.0
    %3139 = vmatpush.msra.mxu0 0.0
    %3140 = vmatpush.msra.mxu0 0.0
    %3141 = vmatpush.msra.mxu0 0.0
    %3142 = vmatpush.msra.mxu0 0.0
    %3143 = vmatpush.msra.mxu0 0.0
    %3144 = vmatpush.msra.mxu0 0.0
    %3145 = vmatpush.msra.mxu0 0.0
    %3146 = vmatpush.msra.mxu0 0.0
    %3147 = vmatpush.msra.mxu0 0.0
    %3148 = vmatpush.msra.mxu0 0.0
    %3149 = vmatpush.msra.mxu0 0.0
    %3150 = vmatpush.msra.mxu0 0.0
    %v3151 = vand.u32 %v129, 4294901760
    %v3152 = vsub.f32 %v129, %v3151
    %3153 = vmatpush.msra.mxu0 %v3152
    %v3154 = vand.u32 %v127, 4294901760
    %v3155 = vsub.f32 %v127, %v3154
    %3156 = vmatpush.msra.mxu0 %v3155
    %v3157 = vand.u32 %v3077, 4294901760
    %v3158 = vsub.f32 %v3077, %v3157
    %3159 = vmatmul.f32.gmra.mxu0 %v3158
    %v3160 = vpop.f32.mrf.mxu0
    %v3161 = vadd.f32 %v3135, %v3160
    %3162 = vdwg.mxu0
    %3163 = vmatpush.msra.mxu0 0.0
    %3164 = vmatpush.msra.mxu0 0.0
    %3165 = vmatpush.msra.mxu0 0.0
    %3166 = vmatpush.msra.mxu0 0.0
    %3167 = vmatpush.msra.mxu0 0.0
    %3168 = vmatpush.msra.mxu0 0.0
    %3169 = vmatpush.msra.mxu0 0.0
    %3170 = vmatpush.msra.mxu0 0.0
    %3171 = vmatpush.msra.mxu0 0.0
    %3172 = vmatpush.msra.mxu0 0.0
    %3173 = vmatpush.msra.mxu0 0.0
    %3174 = vmatpush.msra.mxu0 0.0
    %3175 = vmatpush.msra.mxu0 0.0
    %3176 = vmatpush.msra.mxu0 0.0
    %v3177 = vand.u32 %v129, 4294901760
    %3178 = vmatpush.msra.mxu0 %v3177
    %v3179 = vand.u32 %v127, 4294901760
    %3180 = vmatpush.msra.mxu0 %v3179
    %v3181 = vand.u32 %v3077, 4294901760
    %v3182 = vsub.f32 %v3077, %v3181
    %v3183 = vand.u32 %v3182, 4294901760
    %3184 = vmatmul.f32.gmra.mxu0 %v3183
    %v3185 = vpop.f32.mrf.mxu0
    %v3186 = vadd.f32 %v3161, %v3185
    %3187 = vdwg.mxu0
    %3188 = vmatpush.msra.mxu0 0.0
    %3189 = vmatpush.msra.mxu0 0.0
    %3190 = vmatpush.msra.mxu0 0.0
    %3191 = vmatpush.msra.mxu0 0.0
    %3192 = vmatpush.msra.mxu0 0.0
    %3193 = vmatpush.msra.mxu0 0.0
    %3194 = vmatpush.msra.mxu0 0.0
    %3195 = vmatpush.msra.mxu0 0.0
    %3196 = vmatpush.msra.mxu0 0.0
    %3197 = vmatpush.msra.mxu0 0.0
    %3198 = vmatpush.msra.mxu0 0.0
    %3199 = vmatpush.msra.mxu0 0.0
    %3200 = vmatpush.msra.mxu0 0.0
    %3201 = vmatpush.msra.mxu0 0.0
    %v3202 = vand.u32 %v129, 4294901760
    %v3203 = vsub.f32 %v129, %v3202
    %v3204 = vand.u32 %v3203, 4294901760
    %3205 = vmatpush.msra.mxu0 %v3204
    %v3206 = vand.u32 %v127, 4294901760
    %v3207 = vsub.f32 %v127, %v3206
    %v3208 = vand.u32 %v3207, 4294901760
    %3209 = vmatpush.msra.mxu0 %v3208
    %v3210 = vand.u32 %v3077, 4294901760
    %3211 = vmatmul.f32.gmra.mxu0 %v3210
    %v3212 = vpop.f32.mrf.mxu0
    %v3213 = vadd.f32 %v3186, %v3212
    %3214 = vdwg.mxu0
    %3215 = vmatpush.msra.mxu0 0.0
    %3216 = vmatpush.msra.mxu0 0.0
    %3217 = vmatpush.msra.mxu0 0.0
    %3218 = vmatpush.msra.mxu0 0.0
    %3219 = vmatpush.msra.mxu0 0.0
    %3220 = vmatpush.msra.mxu0 0.0
    %3221 = vmatpush.msra.mxu0 0.0
    %3222 = vmatpush.msra.mxu0 0.0
    %3223 = vmatpush.msra.mxu0 0.0
    %3224 = vmatpush.msra.mxu0 0.0
    %3225 = vmatpush.msra.mxu0 0.0
    %3226 = vmatpush.msra.mxu0 0.0
    %3227 = vmatpush.msra.mxu0 0.0
    %3228 = vmatpush.msra.mxu0 0.0
    %v3229 = vand.u32 %v129, 4294901760
    %3230 = vmatpush.msra.mxu0 %v3229
    %v3231 = vand.u32 %v127, 4294901760
    %3232 = vmatpush.msra.mxu0 %v3231
    %v3233 = vand.u32 %v3077, 4294901760
    %3234 = vmatmul.f32.gmra.mxu0 %v3233
    %v3235 = vpop.f32.mrf.mxu0
    %v3236 = vadd.f32 %v3213, %v3235
    %3237 = vdwg.mxu0
    %v3238 = vlog2.pop %v3236
    %v3239 = vmul.f32 %v3238, 0.6931472
    %v3240 = vadd.f32 %v3239, %v117
    %v3241 = vadd.f32 %v3240, %v3072
    %v3242 = vsub.f32 %v133, %v3241
    %v3243 = vsel %vm301, %v3242, -inf
    %3244 = vmax.xlane.f32.xlu0 %v3243
    %v3245 = vpop.xlane.xlu0 %3244
    %v3246 = vsub.f32 %v3242, %v3245
    %v3247 = vmul.f32 %v3246, 1.442695
    %v3248 = vpow.pop %v3247
    %v3250 = vsel %vm99, %v3248, 0
    %3252 = vmatpush.msra.mxu0 0.0
    %3253 = vmatpush.msra.mxu0 0.0
    %3254 = vmatpush.msra.mxu0 0.0
    %3255 = vmatpush.msra.mxu0 0.0
    %3256 = vmatpush.msra.mxu0 0.0
    %3257 = vmatpush.msra.mxu0 0.0
    %3258 = vmatpush.msra.mxu0 0.0
    %3259 = vmatpush.msra.mxu0 0.0
    %3260 = vmatpush.msra.mxu0 0.0
    %3261 = vmatpush.msra.mxu0 0.0
    %3262 = vmatpush.msra.mxu0 0.0
    %3263 = vmatpush.msra.mxu0 0.0
    %3264 = vmatpush.msra.mxu0 0.0
    %3265 = vmatpush.msra.mxu0 0.0
    %v3266 = vand.u32 %v123, 4294901760
    %3267 = vmatpush.msra.mxu0 %v3266
    %v3268 = vand.u32 %v121, 4294901760
    %3269 = vmatpush.msra.mxu0 %v3268
    %v3270 = vand.u32 %v3250, 4294901760
    %v3271 = vsub.f32 %v3250, %v3270
    %v3272 = vand.u32 %v3271, 4294901760
    %v3273 = vsub.f32 %v3271, %v3272
    %v3274 = vand.u32 %v3273, 4294901760
    %3275 = vmatmul.f32.gmra.mxu0 %v3274
    %v3276 = vpop.f32.mrf.mxu0
    %v3277 = vadd.f32 0.0, %v3276
    %3278 = vdwg.mxu0
    %3279 = vmatpush.msra.mxu0 0.0
    %3280 = vmatpush.msra.mxu0 0.0
    %3281 = vmatpush.msra.mxu0 0.0
    %3282 = vmatpush.msra.mxu0 0.0
    %3283 = vmatpush.msra.mxu0 0.0
    %3284 = vmatpush.msra.mxu0 0.0
    %3285 = vmatpush.msra.mxu0 0.0
    %3286 = vmatpush.msra.mxu0 0.0
    %3287 = vmatpush.msra.mxu0 0.0
    %3288 = vmatpush.msra.mxu0 0.0
    %3289 = vmatpush.msra.mxu0 0.0
    %3290 = vmatpush.msra.mxu0 0.0
    %3291 = vmatpush.msra.mxu0 0.0
    %3292 = vmatpush.msra.mxu0 0.0
    %v3293 = vand.u32 %v123, 4294901760
    %v3294 = vsub.f32 %v123, %v3293
    %v3295 = vand.u32 %v3294, 4294901760
    %v3296 = vsub.f32 %v3294, %v3295
    %v3297 = vand.u32 %v3296, 4294901760
    %3298 = vmatpush.msra.mxu0 %v3297
    %v3299 = vand.u32 %v121, 4294901760
    %v3300 = vsub.f32 %v121, %v3299
    %v3301 = vand.u32 %v3300, 4294901760
    %v3302 = vsub.f32 %v3300, %v3301
    %v3303 = vand.u32 %v3302, 4294901760
    %3304 = vmatpush.msra.mxu0 %v3303
    %v3305 = vand.u32 %v3250, 4294901760
    %3306 = vmatmul.f32.gmra.mxu0 %v3305
    %v3307 = vpop.f32.mrf.mxu0
    %v3308 = vadd.f32 %v3277, %v3307
    %3309 = vdwg.mxu0
    %3310 = vmatpush.msra.mxu0 0.0
    %3311 = vmatpush.msra.mxu0 0.0
    %3312 = vmatpush.msra.mxu0 0.0
    %3313 = vmatpush.msra.mxu0 0.0
    %3314 = vmatpush.msra.mxu0 0.0
    %3315 = vmatpush.msra.mxu0 0.0
    %3316 = vmatpush.msra.mxu0 0.0
    %3317 = vmatpush.msra.mxu0 0.0
    %3318 = vmatpush.msra.mxu0 0.0
    %3319 = vmatpush.msra.mxu0 0.0
    %3320 = vmatpush.msra.mxu0 0.0
    %3321 = vmatpush.msra.mxu0 0.0
    %3322 = vmatpush.msra.mxu0 0.0
    %3323 = vmatpush.msra.mxu0 0.0
    %v3324 = vand.u32 %v123, 4294901760
    %v3325 = vsub.f32 %v123, %v3324
    %3326 = vmatpush.msra.mxu0 %v3325
    %v3327 = vand.u32 %v121, 4294901760
    %v3328 = vsub.f32 %v121, %v3327
    %3329 = vmatpush.msra.mxu0 %v3328
    %v3330 = vand.u32 %v3250, 4294901760
    %v3331 = vsub.f32 %v3250, %v3330
    %3332 = vmatmul.f32.gmra.mxu0 %v3331
    %v3333 = vpop.f32.mrf.mxu0
    %v3334 = vadd.f32 %v3308, %v3333
    %3335 = vdwg.mxu0
    %3336 = vmatpush.msra.mxu0 0.0
    %3337 = vmatpush.msra.mxu0 0.0
    %3338 = vmatpush.msra.mxu0 0.0
    %3339 = vmatpush.msra.mxu0 0.0
    %3340 = vmatpush.msra.mxu0 0.0
    %3341 = vmatpush.msra.mxu0 0.0
    %3342 = vmatpush.msra.mxu0 0.0
    %3343 = vmatpush.msra.mxu0 0.0
    %3344 = vmatpush.msra.mxu0 0.0
    %3345 = vmatpush.msra.mxu0 0.0
    %3346 = vmatpush.msra.mxu0 0.0
    %3347 = vmatpush.msra.mxu0 0.0
    %3348 = vmatpush.msra.mxu0 0.0
    %3349 = vmatpush.msra.mxu0 0.0
    %v3350 = vand.u32 %v123, 4294901760
    %3351 = vmatpush.msra.mxu0 %v3350
    %v3352 = vand.u32 %v121, 4294901760
    %3353 = vmatpush.msra.mxu0 %v3352
    %v3354 = vand.u32 %v3250, 4294901760
    %v3355 = vsub.f32 %v3250, %v3354
    %v3356 = vand.u32 %v3355, 4294901760
    %3357 = vmatmul.f32.gmra.mxu0 %v3356
    %v3358 = vpop.f32.mrf.mxu0
    %v3359 = vadd.f32 %v3334, %v3358
    %3360 = vdwg.mxu0
    %3361 = vmatpush.msra.mxu0 0.0
    %3362 = vmatpush.msra.mxu0 0.0
    %3363 = vmatpush.msra.mxu0 0.0
    %3364 = vmatpush.msra.mxu0 0.0
    %3365 = vmatpush.msra.mxu0 0.0
    %3366 = vmatpush.msra.mxu0 0.0
    %3367 = vmatpush.msra.mxu0 0.0
    %3368 = vmatpush.msra.mxu0 0.0
    %3369 = vmatpush.msra.mxu0 0.0
    %3370 = vmatpush.msra.mxu0 0.0
    %3371 = vmatpush.msra.mxu0 0.0
    %3372 = vmatpush.msra.mxu0 0.0
    %3373 = vmatpush.msra.mxu0 0.0
    %3374 = vmatpush.msra.mxu0 0.0
    %v3375 = vand.u32 %v123, 4294901760
    %v3376 = vsub.f32 %v123, %v3375
    %v3377 = vand.u32 %v3376, 4294901760
    %3378 = vmatpush.msra.mxu0 %v3377
    %v3379 = vand.u32 %v121, 4294901760
    %v3380 = vsub.f32 %v121, %v3379
    %v3381 = vand.u32 %v3380, 4294901760
    %3382 = vmatpush.msra.mxu0 %v3381
    %v3383 = vand.u32 %v3250, 4294901760
    %3384 = vmatmul.f32.gmra.mxu0 %v3383
    %v3385 = vpop.f32.mrf.mxu0
    %v3386 = vadd.f32 %v3359, %v3385
    %3387 = vdwg.mxu0
    %3388 = vmatpush.msra.mxu0 0.0
    %3389 = vmatpush.msra.mxu0 0.0
    %3390 = vmatpush.msra.mxu0 0.0
    %3391 = vmatpush.msra.mxu0 0.0
    %3392 = vmatpush.msra.mxu0 0.0
    %3393 = vmatpush.msra.mxu0 0.0
    %3394 = vmatpush.msra.mxu0 0.0
    %3395 = vmatpush.msra.mxu0 0.0
    %3396 = vmatpush.msra.mxu0 0.0
    %3397 = vmatpush.msra.mxu0 0.0
    %3398 = vmatpush.msra.mxu0 0.0
    %3399 = vmatpush.msra.mxu0 0.0
    %3400 = vmatpush.msra.mxu0 0.0
    %3401 = vmatpush.msra.mxu0 0.0
    %v3402 = vand.u32 %v123, 4294901760
    %3403 = vmatpush.msra.mxu0 %v3402
    %v3404 = vand.u32 %v121, 4294901760
    %3405 = vmatpush.msra.mxu0 %v3404
    %v3406 = vand.u32 %v3250, 4294901760
    %3407 = vmatmul.f32.gmra.mxu0 %v3406
    %v3408 = vpop.f32.mrf.mxu0
    %v3409 = vadd.f32 %v3386, %v3408
    %3410 = vdwg.mxu0
    %v3411 = vlog2.pop %v3409
    %v3412 = vmul.f32 %v3411, 0.6931472
    %v3413 = vadd.f32 %v3412, %v108
    %v3414 = vadd.f32 %v3413, %v3245
    %v3415 = vsub.f32 %v131, %v3414
    %v3416 = vsel %vm301, %v3415, -inf
    %3417 = vmax.xlane.f32.xlu0 %v3416
    %v3418 = vpop.xlane.xlu0 %3417
    %v3419 = vsub.f32 %v3415, %v3418
    %v3420 = vmul.f32 %v3419, 1.442695
    %v3421 = vpow.pop %v3420
    %v3423 = vsel %vm99, %v3421, 0
    %3425 = vmatpush.msra.mxu0 0.0
    %3426 = vmatpush.msra.mxu0 0.0
    %3427 = vmatpush.msra.mxu0 0.0
    %3428 = vmatpush.msra.mxu0 0.0
    %3429 = vmatpush.msra.mxu0 0.0
    %3430 = vmatpush.msra.mxu0 0.0
    %3431 = vmatpush.msra.mxu0 0.0
    %3432 = vmatpush.msra.mxu0 0.0
    %3433 = vmatpush.msra.mxu0 0.0
    %3434 = vmatpush.msra.mxu0 0.0
    %3435 = vmatpush.msra.mxu0 0.0
    %3436 = vmatpush.msra.mxu0 0.0
    %3437 = vmatpush.msra.mxu0 0.0
    %3438 = vmatpush.msra.mxu0 0.0
    %v3439 = vand.u32 %v129, 4294901760
    %3440 = vmatpush.msra.mxu0 %v3439
    %v3441 = vand.u32 %v127, 4294901760
    %3442 = vmatpush.msra.mxu0 %v3441
    %v3443 = vand.u32 %v3423, 4294901760
    %v3444 = vsub.f32 %v3423, %v3443
    %v3445 = vand.u32 %v3444, 4294901760
    %v3446 = vsub.f32 %v3444, %v3445
    %v3447 = vand.u32 %v3446, 4294901760
    %3448 = vmatmul.f32.gmra.mxu0 %v3447
    %v3449 = vpop.f32.mrf.mxu0
    %v3450 = vadd.f32 0.0, %v3449
    %3451 = vdwg.mxu0
    %3452 = vmatpush.msra.mxu0 0.0
    %3453 = vmatpush.msra.mxu0 0.0
    %3454 = vmatpush.msra.mxu0 0.0
    %3455 = vmatpush.msra.mxu0 0.0
    %3456 = vmatpush.msra.mxu0 0.0
    %3457 = vmatpush.msra.mxu0 0.0
    %3458 = vmatpush.msra.mxu0 0.0
    %3459 = vmatpush.msra.mxu0 0.0
    %3460 = vmatpush.msra.mxu0 0.0
    %3461 = vmatpush.msra.mxu0 0.0
    %3462 = vmatpush.msra.mxu0 0.0
    %3463 = vmatpush.msra.mxu0 0.0
    %3464 = vmatpush.msra.mxu0 0.0
    %3465 = vmatpush.msra.mxu0 0.0
    %v3466 = vand.u32 %v129, 4294901760
    %v3467 = vsub.f32 %v129, %v3466
    %v3468 = vand.u32 %v3467, 4294901760
    %v3469 = vsub.f32 %v3467, %v3468
    %v3470 = vand.u32 %v3469, 4294901760
    %3471 = vmatpush.msra.mxu0 %v3470
    %v3472 = vand.u32 %v127, 4294901760
    %v3473 = vsub.f32 %v127, %v3472
    %v3474 = vand.u32 %v3473, 4294901760
    %v3475 = vsub.f32 %v3473, %v3474
    %v3476 = vand.u32 %v3475, 4294901760
    %3477 = vmatpush.msra.mxu0 %v3476
    %v3478 = vand.u32 %v3423, 4294901760
    %3479 = vmatmul.f32.gmra.mxu0 %v3478
    %v3480 = vpop.f32.mrf.mxu0
    %v3481 = vadd.f32 %v3450, %v3480
    %3482 = vdwg.mxu0
    %3483 = vmatpush.msra.mxu0 0.0
    %3484 = vmatpush.msra.mxu0 0.0
    %3485 = vmatpush.msra.mxu0 0.0
    %3486 = vmatpush.msra.mxu0 0.0
    %3487 = vmatpush.msra.mxu0 0.0
    %3488 = vmatpush.msra.mxu0 0.0
    %3489 = vmatpush.msra.mxu0 0.0
    %3490 = vmatpush.msra.mxu0 0.0
    %3491 = vmatpush.msra.mxu0 0.0
    %3492 = vmatpush.msra.mxu0 0.0
    %3493 = vmatpush.msra.mxu0 0.0
    %3494 = vmatpush.msra.mxu0 0.0
    %3495 = vmatpush.msra.mxu0 0.0
    %3496 = vmatpush.msra.mxu0 0.0
    %v3497 = vand.u32 %v129, 4294901760
    %v3498 = vsub.f32 %v129, %v3497
    %3499 = vmatpush.msra.mxu0 %v3498
    %v3500 = vand.u32 %v127, 4294901760
    %v3501 = vsub.f32 %v127, %v3500
    %3502 = vmatpush.msra.mxu0 %v3501
    %v3503 = vand.u32 %v3423, 4294901760
    %v3504 = vsub.f32 %v3423, %v3503
    %3505 = vmatmul.f32.gmra.mxu0 %v3504
    %v3506 = vpop.f32.mrf.mxu0
    %v3507 = vadd.f32 %v3481, %v3506
    %3508 = vdwg.mxu0
    %3509 = vmatpush.msra.mxu0 0.0
    %3510 = vmatpush.msra.mxu0 0.0
    %3511 = vmatpush.msra.mxu0 0.0
    %3512 = vmatpush.msra.mxu0 0.0
    %3513 = vmatpush.msra.mxu0 0.0
    %3514 = vmatpush.msra.mxu0 0.0
    %3515 = vmatpush.msra.mxu0 0.0
    %3516 = vmatpush.msra.mxu0 0.0
    %3517 = vmatpush.msra.mxu0 0.0
    %3518 = vmatpush.msra.mxu0 0.0
    %3519 = vmatpush.msra.mxu0 0.0
    %3520 = vmatpush.msra.mxu0 0.0
    %3521 = vmatpush.msra.mxu0 0.0
    %3522 = vmatpush.msra.mxu0 0.0
    %v3523 = vand.u32 %v129, 4294901760
    %3524 = vmatpush.msra.mxu0 %v3523
    %v3525 = vand.u32 %v127, 4294901760
    %3526 = vmatpush.msra.mxu0 %v3525
    %v3527 = vand.u32 %v3423, 4294901760
    %v3528 = vsub.f32 %v3423, %v3527
    %v3529 = vand.u32 %v3528, 4294901760
    %3530 = vmatmul.f32.gmra.mxu0 %v3529
    %v3531 = vpop.f32.mrf.mxu0
    %v3532 = vadd.f32 %v3507, %v3531
    %3533 = vdwg.mxu0
    %3534 = vmatpush.msra.mxu0 0.0
    %3535 = vmatpush.msra.mxu0 0.0
    %3536 = vmatpush.msra.mxu0 0.0
    %3537 = vmatpush.msra.mxu0 0.0
    %3538 = vmatpush.msra.mxu0 0.0
    %3539 = vmatpush.msra.mxu0 0.0
    %3540 = vmatpush.msra.mxu0 0.0
    %3541 = vmatpush.msra.mxu0 0.0
    %3542 = vmatpush.msra.mxu0 0.0
    %3543 = vmatpush.msra.mxu0 0.0
    %3544 = vmatpush.msra.mxu0 0.0
    %3545 = vmatpush.msra.mxu0 0.0
    %3546 = vmatpush.msra.mxu0 0.0
    %3547 = vmatpush.msra.mxu0 0.0
    %v3548 = vand.u32 %v129, 4294901760
    %v3549 = vsub.f32 %v129, %v3548
    %v3550 = vand.u32 %v3549, 4294901760
    %3551 = vmatpush.msra.mxu0 %v3550
    %v3552 = vand.u32 %v127, 4294901760
    %v3553 = vsub.f32 %v127, %v3552
    %v3554 = vand.u32 %v3553, 4294901760
    %3555 = vmatpush.msra.mxu0 %v3554
    %v3556 = vand.u32 %v3423, 4294901760
    %3557 = vmatmul.f32.gmra.mxu0 %v3556
    %v3558 = vpop.f32.mrf.mxu0
    %v3559 = vadd.f32 %v3532, %v3558
    %3560 = vdwg.mxu0
    %3561 = vmatpush.msra.mxu0 0.0
    %3562 = vmatpush.msra.mxu0 0.0
    %3563 = vmatpush.msra.mxu0 0.0
    %3564 = vmatpush.msra.mxu0 0.0
    %3565 = vmatpush.msra.mxu0 0.0
    %3566 = vmatpush.msra.mxu0 0.0
    %3567 = vmatpush.msra.mxu0 0.0
    %3568 = vmatpush.msra.mxu0 0.0
    %3569 = vmatpush.msra.mxu0 0.0
    %3570 = vmatpush.msra.mxu0 0.0
    %3571 = vmatpush.msra.mxu0 0.0
    %3572 = vmatpush.msra.mxu0 0.0
    %3573 = vmatpush.msra.mxu0 0.0
    %3574 = vmatpush.msra.mxu0 0.0
    %v3575 = vand.u32 %v129, 4294901760
    %3576 = vmatpush.msra.mxu0 %v3575
    %v3577 = vand.u32 %v127, 4294901760
    %3578 = vmatpush.msra.mxu0 %v3577
    %v3579 = vand.u32 %v3423, 4294901760
    %3580 = vmatmul.f32.gmra.mxu0 %v3579
    %v3581 = vpop.f32.mrf.mxu0
    %v3582 = vadd.f32 %v3559, %v3581
    %3583 = vdwg.mxu0
    %v3584 = vlog2.pop %v3582
    %v3585 = vmul.f32 %v3584, 0.6931472
    %v3586 = vadd.f32 %v3585, %v117
    %v3587 = vadd.f32 %v3586, %v3418
    %v3588 = vsub.f32 %v133, %v3587
    %v3589 = vmul.f32 %v3415, 0.1
    %3590 = vst.msk [vmem:[#allocation8] sm:$0xf] %vm301, %v3589
    %v3591 = vmul.f32 %v3588, 0.1
    %3592 = vst.msk [vmem:[#allocation9] sm:$0xf] %vm301, %v3591
    // Predicated region
    $region26: #{tpu_custom_call.1} parent=1 // pred_check
      _
    $region27: #{tpu_custom_call.1} parent=1 // pred_check_branch
      %3594 = sbr.rel (0) target = $region29
    $region28: #{tpu_custom_call.1} parent=1 // pred_region
      %3596 = vsyncadd [#allocation4], 0
      %s3598 = sshll.u32 [#allocation8], 4
      %s3599 = int_to_ptr.vmem [resolvable:$true] %s3598
      %s3600 = sshll.u32 %s3, 4
      %s3601 = int_to_ptr.hbm [resolvable:$true] %s3600
      %3603 = dma.vmem_to_hbm [thread:$0]  %s3599, 64, %s3601, [#allocation4]
    $region29: #{tpu_custom_call.1} parent=1 // pred_fallthru
      _
    // Predicated region
    $region30: #{tpu_custom_call.1} parent=1 // pred_check
      _
    $region31: #{tpu_custom_call.1} parent=1 // pred_check_branch
      %3605 = sbr.rel (0) target = $region33
    $region32: #{tpu_custom_call.1} parent=1 // pred_region
      %3607 = vsyncadd [#allocation10], 0
      %s3609 = sshll.u32 [#allocation9], 4
      %s3610 = int_to_ptr.vmem [resolvable:$true] %s3609
      %s3611 = sshll.u32 %s4, 4
      %s3612 = int_to_ptr.hbm [resolvable:$true] %s3611
      %3614 = dma.vmem_to_hbm [thread:$0]  %s3610, 64, %s3612, [#allocation10]
    $region33: #{tpu_custom_call.1} parent=1 // pred_fallthru
      _
    // Predicated region
    $region34: #{tpu_custom_call.1} parent=1 // pred_check
      _
    $region35: #{tpu_custom_call.1} parent=1 // pred_check_branch
      %3616 = sbr.rel (0) target = $region37
    $region36: #{tpu_custom_call.1} parent=1 // pred_region
      %3618 = dma.done [#allocation4], 64
    $region37: #{tpu_custom_call.1} parent=1 // pred_fallthru
      _
    // Predicated region
    $region38: #{tpu_custom_call.1} parent=1 // pred_check
      _
    $region39: #{tpu_custom_call.1} parent=1 // pred_check_branch
      %3620 = sbr.rel (0) target = $region41
    $region40: #{tpu_custom_call.1} parent=1 // pred_region
      %3622 = dma.done [#allocation10], 64
    $region41: #{tpu_custom_call.1} parent=1 // pred_fallthru
      _
    %3623 = vsyncpa [#allocation3], 1
    %3624 = vsyncpa [#allocation6], 1
    %3625 = vsyncpa [#allocation4], 1
    %3626 = vsyncpa [#allocation10], 1

</llo_original>
